<compile_context>
chip_gen: v7x
topology: tpu7x:2x2x1
jax: 0.10.0
libtpu: 0.0.40
codegen_flags: <defaults>
</compile_context>

<pallas_src>
import functools

import jax
import jax.numpy as jnp
import numpy as np
from jax.experimental import pallas as pl
from jax.experimental.pallas import tpu as pltpu

EMB = 300
HID = 128
FC1 = 64
OUT = 7


def _lstm_kernel(g0_ref,                      # (S*B, 4H) f32: precomputed layer-0 input gates (x @ W_ih0^T + b0)
                 whh0_ref,                    # (HID, 4H)   bf16  layer-0 recurrent weights
                 w1_ref, b1_ref,              # (2*HID, 4H) bf16  [W_ih1^T ; W_hh1^T], (1, 4H) f32
                 wfc_ref, bfc_ref,            # (HID, OUT)  f32 collapsed fc1*fc2, (1, OUT) f32
                 out_ref,                     # (B, OUT) f32 logits
                 *, seq_len, batch):
    # loop-invariant loads / broadcasts, hoisted once
    whh0 = whh0_ref[...]                                        # (HID, 4H) bf16
    w1 = w1_ref[...]                                            # (2H, 4H)  bf16
    b1 = jnp.broadcast_to(b1_ref[...], (batch, 4 * HID))        # (B, 4H)   f32

    def lstm_update(g, c):
        # gate columns pre-permuted to [i, f, o, g]:
        #   one sigmoid over the first 3*HID lanes, one tanh over the last HID.
        s = jax.nn.sigmoid(g[:, :3 * HID])
        gg = jnp.tanh(g[:, 3 * HID:])
        i = s[:, 0 * HID:1 * HID]
        f = s[:, 1 * HID:2 * HID]
        o = s[:, 2 * HID:3 * HID]
        c_new = f * c + i * gg
        h_new = o * jnp.tanh(c_new)
        return h_new, c_new

    z = jnp.zeros((batch, HID), jnp.float32)
    h0, c0, h1, c1, acc = z, z, z, z, z

    # static unroll over the (short) sequence; recurrent state stays in vregs
    for t in range(seq_len):
        # layer 0: precomputed (exact f32) input gates + recurrent hidden matmul
        g0 = (g0_ref[t * batch:(t + 1) * batch, :]
              + jnp.dot(h0.astype(jnp.bfloat16), whh0,
                        preferred_element_type=jnp.float32))
        h0, c0 = lstm_update(g0, c0)

        # layer 1: fused [x=h0 ; h=h1] @ [W_ih1 ; W_hh1]  (single K = 2*HID = 256)
        hcat = jnp.concatenate([h0, h1], axis=-1).astype(jnp.bfloat16)
        g1 = jnp.dot(hcat, w1, preferred_element_type=jnp.float32) + b1
        h1, c1 = lstm_update(g1, c1)

        acc = acc + h1

    # ---- epilogue (runs once): sum-over-seq is `acc`; fc1·fc2 pre-collapsed
    y = jnp.dot(acc, wfc_ref[...], preferred_element_type=jnp.float32) + bfc_ref[...]
    out_ref[...] = y.astype(out_ref.dtype)


def _permute_gates(w):
    """Reorder the last (4*HID) axis from PyTorch [i, f, g, o] to [i, f, o, g]."""
    i = w[..., 0 * HID:1 * HID]
    f = w[..., 1 * HID:2 * HID]
    g = w[..., 2 * HID:3 * HID]
    o = w[..., 3 * HID:4 * HID]
    return jnp.concatenate([i, f, o, g], axis=-1)


def lstm_forward_pallas(sentence, params):
    """sentence: (seq, batch) int32 token ids. Returns (batch, OUT) f32 logits."""
    S, B = sentence.shape

    # ---- fold layer-0 input projection into the embedding (exact, f32):
    #      T[v] = E[v] @ W_ih0^T + b0  -> gather per token, gate-permuted.
    gate_table = params["embedding"] @ params["wih0_t"] + params["b0"]   # (VOCAB, 4H)
    gate_table = _permute_gates(gate_table)
    g0 = jnp.take(gate_table, sentence, axis=0).reshape(S * B, 4 * HID)  # row = t*B + b

    # recurrent weights in bf16 (MXU-native); gate columns permuted to [i,f,o,g]
    whh0 = _permute_gates(params["whh0_t"]).astype(jnp.bfloat16)         # (HID, 4H)
    w1 = _permute_gates(
        jnp.concatenate([params["wih1_t"], params["whh1_t"]], axis=0)
    ).astype(jnp.bfloat16)                                               # (2*HID, 4H)
    b1 = _permute_gates(params["b1"])                                    # (1, 4H)

    # collapse fc1 -> fc2 (no nonlinearity between them in the module => exact)
    wfc = params["wf1_t"] @ params["wf2_t"]                              # (HID, OUT)
    bfc = params["bf1"] @ params["wf2_t"] + params["bf2"]                # (1, OUT)

    full = lambda shape: pl.BlockSpec(shape, lambda i: tuple(0 for _ in shape))
    in_specs = [
        full((S * B, 4 * HID)),
        full((HID, 4 * HID)),
        full((2 * HID, 4 * HID)), full((1, 4 * HID)),
        full((HID, OUT)), full((1, OUT)),
    ]
    out_spec = pl.BlockSpec((B, OUT), lambda i: (0, 0))

    grid_spec = pltpu.PrefetchScalarGridSpec(
        num_scalar_prefetch=0,
        grid=(1,),                              # single invocation; loop lives in-kernel
        in_specs=in_specs,
        out_specs=out_spec,
        scratch_shapes=[],
    )

    kernel = functools.partial(_lstm_kernel, seq_len=S, batch=B)
    return pl.pallas_call(
        kernel,
        out_shape=jax.ShapeDtypeStruct((B, OUT), jnp.float32),
        grid_spec=grid_spec,
        compiler_params=pltpu.CompilerParams(
            dimension_semantics=("arbitrary",)),
    )(g0, whh0, w1, b1, wfc, bfc)


def lstm_forward_ref(embeds, params):
    """Pure-JAX f32 reference matching PyTorch nn.LSTM / nn.Linear semantics."""
    S, B, _ = embeds.shape

    def cell(x_in, h, c, wih_t, whh_t, b):
        gates = x_in @ wih_t + h @ whh_t + b
        i = jax.nn.sigmoid(gates[:, 0 * HID:1 * HID])
        f = jax.nn.sigmoid(gates[:, 1 * HID:2 * HID])
        g = jnp.tanh(gates[:, 2 * HID:3 * HID])
        o = jax.nn.sigmoid(gates[:, 3 * HID:4 * HID])
        c_new = f * c + i * g
        h_new = o * jnp.tanh(c_new)
        return h_new, c_new

    def step(carry, x_t):
        h0, c0, h1, c1 = carry
        h0, c0 = cell(x_t, h0, c0, params["wih0_t"], params["whh0_t"], params["b0"])
        h1, c1 = cell(h0, h1, c1, params["wih1_t"], params["whh1_t"], params["b1"])
        return (h0, c0, h1, c1), h1

    zeros = jnp.zeros((B, HID), jnp.float32)
    _, hs = jax.lax.scan(step, (zeros, zeros, zeros, zeros), embeds)
    final = hs.sum(axis=0)
    y = final @ params["wf1_t"] + params["bf1"]
    y = y @ params["wf2_t"] + params["bf2"]
    return y


def make_params(key, vocab_size):
    ks = jax.random.split(key, 12)
    u = lambda k, shape, s=0.1: jax.random.uniform(k, shape, jnp.float32, -s, s)
    # PyTorch shapes: weight_ih_l0 (4H, EMB), weight_hh_l* (4H, H), fc weights (out, in).
    # Stored pre-transposed for the x @ W^T convention; per-layer biases b_ih+b_hh fused.
    params = {
        "embedding": u(ks[0], (vocab_size, EMB)),
        "wih0_t": u(ks[1], (EMB, 4 * HID)),
        "whh0_t": u(ks[2], (HID, 4 * HID)),
        "b0":     u(ks[3], (1, 4 * HID)),
        "wih1_t": u(ks[4], (HID, 4 * HID)),
        "whh1_t": u(ks[5], (HID, 4 * HID)),
        "b1":     u(ks[6], (1, 4 * HID)),
        "wf1_t":  u(ks[7], (HID, FC1)),
        "bf1":    u(ks[8], (1, FC1)),
        "wf2_t":  u(ks[9], (FC1, OUT)),
        "bf2":    u(ks[10], (1, OUT)),
    }
    return params


if __name__ == "__main__":
    key = jax.random.PRNGKey(0)
    k_tok, k_par = jax.random.split(key)

    VOCAB = 50
    SEQ = 8
    BATCH = 8     # multiple of 8 (sublane alignment for the per-step g0 slices)

    params = make_params(k_par, VOCAB)

    # sentence: (seq, batch) int32 token ids (PyTorch seq-first convention).
    sentence = jax.random.randint(k_tok, (SEQ, BATCH), 0, VOCAB, jnp.int32)

    out = lstm_forward_pallas(sentence, params)
    out = jax.block_until_ready(out)

    # Reference path uses the raw embedding lookup + f32 recurrence.
    embeds = jnp.take(params["embedding"], sentence, axis=0)  # (SEQ, BATCH, EMB)
    ref = jax.block_until_ready(lstm_forward_ref(embeds, params))

    # bf16 recurrent-matmul operands (f32 accumulation) -> slightly loosened tolerance.
    np.testing.assert_allclose(np.asarray(out), np.asarray(ref),
                               rtol=2e-2, atol=2e-2)

    print("KERNEL_OK")
</pallas_src>

<mosaic_0001>
module attributes {stable_mosaic.version = 11 : i64} {
  func.func @_lstm_kernel(%arg0: i32, %arg1: memref<64x512xf32, #tpu.memory_space<vmem>>, %arg2: memref<128x512xbf16, #tpu.memory_space<vmem>>, %arg3: memref<256x512xbf16, #tpu.memory_space<vmem>>, %arg4: memref<1x512xf32, #tpu.memory_space<vmem>>, %arg5: memref<128x7xf32, #tpu.memory_space<vmem>>, %arg6: memref<1x7xf32, #tpu.memory_space<vmem>>, %arg7: memref<8x7xf32, #tpu.memory_space<vmem>>) attributes {dimension_semantics = [#tpu.dimension_semantics<arbitrary>], iteration_bounds = array<i64: 1>, scalar_prefetch = 0 : i64, scratch_operands = 0 : i64, tpu.core_type = #tpu.core_type<tc>, window_params = [{pipeline_mode = #tpu.pipeline_mode<synchronous>, transform_indices = @transform_0, window_bounds = array<i64: 64, 512>}, {pipeline_mode = #tpu.pipeline_mode<synchronous>, transform_indices = @transform_1, window_bounds = array<i64: 128, 512>}, {pipeline_mode = #tpu.pipeline_mode<synchronous>, transform_indices = @transform_2, window_bounds = array<i64: 256, 512>}, {pipeline_mode = #tpu.pipeline_mode<synchronous>, transform_indices = @transform_3, window_bounds = array<i64: 1, 512>}, {pipeline_mode = #tpu.pipeline_mode<synchronous>, transform_indices = @transform_4, window_bounds = array<i64: 128, 7>}, {pipeline_mode = #tpu.pipeline_mode<synchronous>, transform_indices = @transform_5, window_bounds = array<i64: 1, 7>}, {pipeline_mode = #tpu.pipeline_mode<synchronous>, transform_indices = @transform_6, window_bounds = array<i64: 8, 7>}]} {
    %c0 = arith.constant 0 : index
    %c0_0 = arith.constant 0 : index
    %0 = vector.load %arg2[%c0, %c0_0] : memref<128x512xbf16, #tpu.memory_space<vmem>>, vector<128x512xbf16>
    %c0_1 = arith.constant 0 : index
    %c0_2 = arith.constant 0 : index
    %1 = vector.load %arg3[%c0_1, %c0_2] : memref<256x512xbf16, #tpu.memory_space<vmem>>, vector<256x512xbf16>
    %c0_3 = arith.constant 0 : index
    %c0_4 = arith.constant 0 : index
    %2 = vector.load %arg4[%c0_3, %c0_4] : memref<1x512xf32, #tpu.memory_space<vmem>>, vector<1x512xf32>
    %3 = vector.shape_cast %2 : vector<1x512xf32> to vector<1x512xf32>
    %4 = vector.broadcast %3 : vector<1x512xf32> to vector<8x512xf32>
    %cst = arith.constant 0.000000e+00 : f32
    %5 = vector.broadcast %cst : f32 to vector<8x128xf32>
    %c0_5 = arith.constant 0 : index
    %c0_6 = arith.constant 0 : index
    %6 = vector.load %arg1[%c0_5, %c0_6] : memref<64x512xf32, #tpu.memory_space<vmem>>, vector<8x512xf32>
    %7 = arith.truncf %5 : vector<8x128xf32> to vector<8x128xbf16>
    %cst_7 = arith.constant dense<0.000000e+00> : vector<8x512xf32>
    %8 = tpu.matmul %7, %0, %cst_7 {dimension_numbers = #tpu.dot_dimension_numbers<[1], [0], [0], [1], [0, 0, 1, 1], [], []>} : vector<8x128xbf16>, vector<128x512xbf16>, vector<8x512xf32> -> vector<8x512xf32>
    %9 = arith.addf %6, %8 : vector<8x512xf32>
    %10 = vector.extract_strided_slice %9 {offsets = [0, 0], sizes = [8, 384], strides = [1, 1]} : vector<8x512xf32> to vector<8x384xf32>
    %11 = arith.negf %10 : vector<8x384xf32>
    %12 = math.exp %11 : vector<8x384xf32>
    %cst_8 = arith.constant 1.000000e+00 : f32
    %13 = vector.broadcast %cst_8 : f32 to vector<8x384xf32>
    %14 = arith.addf %13, %12 : vector<8x384xf32>
    %15 = arith.divf %13, %14 : vector<8x384xf32>
    %16 = vector.extract_strided_slice %9 {offsets = [0, 384], sizes = [8, 128], strides = [1, 1]} : vector<8x512xf32> to vector<8x128xf32>
    %17 = math.tanh %16 : vector<8x128xf32>
    %18 = vector.extract_strided_slice %15 {offsets = [0, 0], sizes = [8, 128], strides = [1, 1]} : vector<8x384xf32> to vector<8x128xf32>
    %19 = vector.extract_strided_slice %15 {offsets = [0, 128], sizes = [8, 128], strides = [1, 1]} : vector<8x384xf32> to vector<8x128xf32>
    %20 = vector.extract_strided_slice %15 {offsets = [0, 256], sizes = [8, 128], strides = [1, 1]} : vector<8x384xf32> to vector<8x128xf32>
    %21 = arith.mulf %19, %5 : vector<8x128xf32>
    %22 = arith.mulf %18, %17 : vector<8x128xf32>
    %23 = arith.addf %21, %22 : vector<8x128xf32>
    %24 = math.tanh %23 : vector<8x128xf32>
    %25 = arith.mulf %20, %24 : vector<8x128xf32>
    %26 = tpu.concatenate %25, %5 in 1 : vector<8x128xf32>, vector<8x128xf32> -> vector<8x256xf32>
    %27 = arith.truncf %26 : vector<8x256xf32> to vector<8x256xbf16>
    %cst_9 = arith.constant dense<0.000000e+00> : vector<8x512xf32>
    %28 = tpu.matmul %27, %1, %cst_9 {dimension_numbers = #tpu.dot_dimension_numbers<[1], [0], [0], [1], [0, 0, 1, 1], [], []>} : vector<8x256xbf16>, vector<256x512xbf16>, vector<8x512xf32> -> vector<8x512xf32>
    %29 = arith.addf %28, %4 : vector<8x512xf32>
    %30 = vector.extract_strided_slice %29 {offsets = [0, 0], sizes = [8, 384], strides = [1, 1]} : vector<8x512xf32> to vector<8x384xf32>
    %31 = arith.negf %30 : vector<8x384xf32>
    %32 = math.exp %31 : vector<8x384xf32>
    %cst_10 = arith.constant 1.000000e+00 : f32
    %33 = vector.broadcast %cst_10 : f32 to vector<8x384xf32>
    %34 = arith.addf %33, %32 : vector<8x384xf32>
    %35 = arith.divf %33, %34 : vector<8x384xf32>
    %36 = vector.extract_strided_slice %29 {offsets = [0, 384], sizes = [8, 128], strides = [1, 1]} : vector<8x512xf32> to vector<8x128xf32>
    %37 = math.tanh %36 : vector<8x128xf32>
    %38 = vector.extract_strided_slice %35 {offsets = [0, 0], sizes = [8, 128], strides = [1, 1]} : vector<8x384xf32> to vector<8x128xf32>
    %39 = vector.extract_strided_slice %35 {offsets = [0, 128], sizes = [8, 128], strides = [1, 1]} : vector<8x384xf32> to vector<8x128xf32>
    %40 = vector.extract_strided_slice %35 {offsets = [0, 256], sizes = [8, 128], strides = [1, 1]} : vector<8x384xf32> to vector<8x128xf32>
    %41 = arith.mulf %39, %5 : vector<8x128xf32>
    %42 = arith.mulf %38, %37 : vector<8x128xf32>
    %43 = arith.addf %41, %42 : vector<8x128xf32>
    %44 = math.tanh %43 : vector<8x128xf32>
    %45 = arith.mulf %40, %44 : vector<8x128xf32>
    %46 = arith.addf %5, %45 : vector<8x128xf32>
    %c8 = arith.constant 8 : index
    %c0_11 = arith.constant 0 : index
    %47 = vector.load %arg1[%c8, %c0_11] : memref<64x512xf32, #tpu.memory_space<vmem>>, vector<8x512xf32>
    %48 = arith.truncf %25 : vector<8x128xf32> to vector<8x128xbf16>
    %cst_12 = arith.constant dense<0.000000e+00> : vector<8x512xf32>
    %49 = tpu.matmul %48, %0, %cst_12 {dimension_numbers = #tpu.dot_dimension_numbers<[1], [0], [0], [1], [0, 0, 1, 1], [], []>} : vector<8x128xbf16>, vector<128x512xbf16>, vector<8x512xf32> -> vector<8x512xf32>
    %50 = arith.addf %47, %49 : vector<8x512xf32>
    %51 = vector.extract_strided_slice %50 {offsets = [0, 0], sizes = [8, 384], strides = [1, 1]} : vector<8x512xf32> to vector<8x384xf32>
    %52 = arith.negf %51 : vector<8x384xf32>
    %53 = math.exp %52 : vector<8x384xf32>
    %cst_13 = arith.constant 1.000000e+00 : f32
    %54 = vector.broadcast %cst_13 : f32 to vector<8x384xf32>
    %55 = arith.addf %54, %53 : vector<8x384xf32>
    %56 = arith.divf %54, %55 : vector<8x384xf32>
    %57 = vector.extract_strided_slice %50 {offsets = [0, 384], sizes = [8, 128], strides = [1, 1]} : vector<8x512xf32> to vector<8x128xf32>
    %58 = math.tanh %57 : vector<8x128xf32>
    %59 = vector.extract_strided_slice %56 {offsets = [0, 0], sizes = [8, 128], strides = [1, 1]} : vector<8x384xf32> to vector<8x128xf32>
    %60 = vector.extract_strided_slice %56 {offsets = [0, 128], sizes = [8, 128], strides = [1, 1]} : vector<8x384xf32> to vector<8x128xf32>
    %61 = vector.extract_strided_slice %56 {offsets = [0, 256], sizes = [8, 128], strides = [1, 1]} : vector<8x384xf32> to vector<8x128xf32>
    %62 = arith.mulf %60, %23 : vector<8x128xf32>
    %63 = arith.mulf %59, %58 : vector<8x128xf32>
    %64 = arith.addf %62, %63 : vector<8x128xf32>
    %65 = math.tanh %64 : vector<8x128xf32>
    %66 = arith.mulf %61, %65 : vector<8x128xf32>
    %67 = tpu.concatenate %66, %45 in 1 : vector<8x128xf32>, vector<8x128xf32> -> vector<8x256xf32>
    %68 = arith.truncf %67 : vector<8x256xf32> to vector<8x256xbf16>
    %cst_14 = arith.constant dense<0.000000e+00> : vector<8x512xf32>
    %69 = tpu.matmul %68, %1, %cst_14 {dimension_numbers = #tpu.dot_dimension_numbers<[1], [0], [0], [1], [0, 0, 1, 1], [], []>} : vector<8x256xbf16>, vector<256x512xbf16>, vector<8x512xf32> -> vector<8x512xf32>
    %70 = arith.addf %69, %4 : vector<8x512xf32>
    %71 = vector.extract_strided_slice %70 {offsets = [0, 0], sizes = [8, 384], strides = [1, 1]} : vector<8x512xf32> to vector<8x384xf32>
    %72 = arith.negf %71 : vector<8x384xf32>
    %73 = math.exp %72 : vector<8x384xf32>
    %cst_15 = arith.constant 1.000000e+00 : f32
    %74 = vector.broadcast %cst_15 : f32 to vector<8x384xf32>
    %75 = arith.addf %74, %73 : vector<8x384xf32>
    %76 = arith.divf %74, %75 : vector<8x384xf32>
    %77 = vector.extract_strided_slice %70 {offsets = [0, 384], sizes = [8, 128], strides = [1, 1]} : vector<8x512xf32> to vector<8x128xf32>
    %78 = math.tanh %77 : vector<8x128xf32>
    %79 = vector.extract_strided_slice %76 {offsets = [0, 0], sizes = [8, 128], strides = [1, 1]} : vector<8x384xf32> to vector<8x128xf32>
    %80 = vector.extract_strided_slice %76 {offsets = [0, 128], sizes = [8, 128], strides = [1, 1]} : vector<8x384xf32> to vector<8x128xf32>
    %81 = vector.extract_strided_slice %76 {offsets = [0, 256], sizes = [8, 128], strides = [1, 1]} : vector<8x384xf32> to vector<8x128xf32>
    %82 = arith.mulf %80, %43 : vector<8x128xf32>
    %83 = arith.mulf %79, %78 : vector<8x128xf32>
    %84 = arith.addf %82, %83 : vector<8x128xf32>
    %85 = math.tanh %84 : vector<8x128xf32>
    %86 = arith.mulf %81, %85 : vector<8x128xf32>
    %87 = arith.addf %46, %86 : vector<8x128xf32>
    %c16 = arith.constant 16 : index
    %c0_16 = arith.constant 0 : index
    %88 = vector.load %arg1[%c16, %c0_16] : memref<64x512xf32, #tpu.memory_space<vmem>>, vector<8x512xf32>
    %89 = arith.truncf %66 : vector<8x128xf32> to vector<8x128xbf16>
    %cst_17 = arith.constant dense<0.000000e+00> : vector<8x512xf32>
    %90 = tpu.matmul %89, %0, %cst_17 {dimension_numbers = #tpu.dot_dimension_numbers<[1], [0], [0], [1], [0, 0, 1, 1], [], []>} : vector<8x128xbf16>, vector<128x512xbf16>, vector<8x512xf32> -> vector<8x512xf32>
    %91 = arith.addf %88, %90 : vector<8x512xf32>
    %92 = vector.extract_strided_slice %91 {offsets = [0, 0], sizes = [8, 384], strides = [1, 1]} : vector<8x512xf32> to vector<8x384xf32>
    %93 = arith.negf %92 : vector<8x384xf32>
    %94 = math.exp %93 : vector<8x384xf32>
    %cst_18 = arith.constant 1.000000e+00 : f32
    %95 = vector.broadcast %cst_18 : f32 to vector<8x384xf32>
    %96 = arith.addf %95, %94 : vector<8x384xf32>
    %97 = arith.divf %95, %96 : vector<8x384xf32>
    %98 = vector.extract_strided_slice %91 {offsets = [0, 384], sizes = [8, 128], strides = [1, 1]} : vector<8x512xf32> to vector<8x128xf32>
    %99 = math.tanh %98 : vector<8x128xf32>
    %100 = vector.extract_strided_slice %97 {offsets = [0, 0], sizes = [8, 128], strides = [1, 1]} : vector<8x384xf32> to vector<8x128xf32>
    %101 = vector.extract_strided_slice %97 {offsets = [0, 128], sizes = [8, 128], strides = [1, 1]} : vector<8x384xf32> to vector<8x128xf32>
    %102 = vector.extract_strided_slice %97 {offsets = [0, 256], sizes = [8, 128], strides = [1, 1]} : vector<8x384xf32> to vector<8x128xf32>
    %103 = arith.mulf %101, %64 : vector<8x128xf32>
    %104 = arith.mulf %100, %99 : vector<8x128xf32>
    %105 = arith.addf %103, %104 : vector<8x128xf32>
    %106 = math.tanh %105 : vector<8x128xf32>
    %107 = arith.mulf %102, %106 : vector<8x128xf32>
    %108 = tpu.concatenate %107, %86 in 1 : vector<8x128xf32>, vector<8x128xf32> -> vector<8x256xf32>
    %109 = arith.truncf %108 : vector<8x256xf32> to vector<8x256xbf16>
    %cst_19 = arith.constant dense<0.000000e+00> : vector<8x512xf32>
    %110 = tpu.matmul %109, %1, %cst_19 {dimension_numbers = #tpu.dot_dimension_numbers<[1], [0], [0], [1], [0, 0, 1, 1], [], []>} : vector<8x256xbf16>, vector<256x512xbf16>, vector<8x512xf32> -> vector<8x512xf32>
    %111 = arith.addf %110, %4 : vector<8x512xf32>
    %112 = vector.extract_strided_slice %111 {offsets = [0, 0], sizes = [8, 384], strides = [1, 1]} : vector<8x512xf32> to vector<8x384xf32>
    %113 = arith.negf %112 : vector<8x384xf32>
    %114 = math.exp %113 : vector<8x384xf32>
    %cst_20 = arith.constant 1.000000e+00 : f32
    %115 = vector.broadcast %cst_20 : f32 to vector<8x384xf32>
    %116 = arith.addf %115, %114 : vector<8x384xf32>
    %117 = arith.divf %115, %116 : vector<8x384xf32>
    %118 = vector.extract_strided_slice %111 {offsets = [0, 384], sizes = [8, 128], strides = [1, 1]} : vector<8x512xf32> to vector<8x128xf32>
    %119 = math.tanh %118 : vector<8x128xf32>
    %120 = vector.extract_strided_slice %117 {offsets = [0, 0], sizes = [8, 128], strides = [1, 1]} : vector<8x384xf32> to vector<8x128xf32>
    %121 = vector.extract_strided_slice %117 {offsets = [0, 128], sizes = [8, 128], strides = [1, 1]} : vector<8x384xf32> to vector<8x128xf32>
    %122 = vector.extract_strided_slice %117 {offsets = [0, 256], sizes = [8, 128], strides = [1, 1]} : vector<8x384xf32> to vector<8x128xf32>
    %123 = arith.mulf %121, %84 : vector<8x128xf32>
    %124 = arith.mulf %120, %119 : vector<8x128xf32>
    %125 = arith.addf %123, %124 : vector<8x128xf32>
    %126 = math.tanh %125 : vector<8x128xf32>
    %127 = arith.mulf %122, %126 : vector<8x128xf32>
    %128 = arith.addf %87, %127 : vector<8x128xf32>
    %c24 = arith.constant 24 : index
    %c0_21 = arith.constant 0 : index
    %129 = vector.load %arg1[%c24, %c0_21] : memref<64x512xf32, #tpu.memory_space<vmem>>, vector<8x512xf32>
    %130 = arith.truncf %107 : vector<8x128xf32> to vector<8x128xbf16>
    %cst_22 = arith.constant dense<0.000000e+00> : vector<8x512xf32>
    %131 = tpu.matmul %130, %0, %cst_22 {dimension_numbers = #tpu.dot_dimension_numbers<[1], [0], [0], [1], [0, 0, 1, 1], [], []>} : vector<8x128xbf16>, vector<128x512xbf16>, vector<8x512xf32> -> vector<8x512xf32>
    %132 = arith.addf %129, %131 : vector<8x512xf32>
    %133 = vector.extract_strided_slice %132 {offsets = [0, 0], sizes = [8, 384], strides = [1, 1]} : vector<8x512xf32> to vector<8x384xf32>
    %134 = arith.negf %133 : vector<8x384xf32>
    %135 = math.exp %134 : vector<8x384xf32>
    %cst_23 = arith.constant 1.000000e+00 : f32
    %136 = vector.broadcast %cst_23 : f32 to vector<8x384xf32>
    %137 = arith.addf %136, %135 : vector<8x384xf32>
    %138 = arith.divf %136, %137 : vector<8x384xf32>
    %139 = vector.extract_strided_slice %132 {offsets = [0, 384], sizes = [8, 128], strides = [1, 1]} : vector<8x512xf32> to vector<8x128xf32>
    %140 = math.tanh %139 : vector<8x128xf32>
    %141 = vector.extract_strided_slice %138 {offsets = [0, 0], sizes = [8, 128], strides = [1, 1]} : vector<8x384xf32> to vector<8x128xf32>
    %142 = vector.extract_strided_slice %138 {offsets = [0, 128], sizes = [8, 128], strides = [1, 1]} : vector<8x384xf32> to vector<8x128xf32>
    %143 = vector.extract_strided_slice %138 {offsets = [0, 256], sizes = [8, 128], strides = [1, 1]} : vector<8x384xf32> to vector<8x128xf32>
    %144 = arith.mulf %142, %105 : vector<8x128xf32>
    %145 = arith.mulf %141, %140 : vector<8x128xf32>
    %146 = arith.addf %144, %145 : vector<8x128xf32>
    %147 = math.tanh %146 : vector<8x128xf32>
    %148 = arith.mulf %143, %147 : vector<8x128xf32>
    %149 = tpu.concatenate %148, %127 in 1 : vector<8x128xf32>, vector<8x128xf32> -> vector<8x256xf32>
    %150 = arith.truncf %149 : vector<8x256xf32> to vector<8x256xbf16>
    %cst_24 = arith.constant dense<0.000000e+00> : vector<8x512xf32>
    %151 = tpu.matmul %150, %1, %cst_24 {dimension_numbers = #tpu.dot_dimension_numbers<[1], [0], [0], [1], [0, 0, 1, 1], [], []>} : vector<8x256xbf16>, vector<256x512xbf16>, vector<8x512xf32> -> vector<8x512xf32>
    %152 = arith.addf %151, %4 : vector<8x512xf32>
    %153 = vector.extract_strided_slice %152 {offsets = [0, 0], sizes = [8, 384], strides = [1, 1]} : vector<8x512xf32> to vector<8x384xf32>
    %154 = arith.negf %153 : vector<8x384xf32>
    %155 = math.exp %154 : vector<8x384xf32>
    %cst_25 = arith.constant 1.000000e+00 : f32
    %156 = vector.broadcast %cst_25 : f32 to vector<8x384xf32>
    %157 = arith.addf %156, %155 : vector<8x384xf32>
    %158 = arith.divf %156, %157 : vector<8x384xf32>
    %159 = vector.extract_strided_slice %152 {offsets = [0, 384], sizes = [8, 128], strides = [1, 1]} : vector<8x512xf32> to vector<8x128xf32>
    %160 = math.tanh %159 : vector<8x128xf32>
    %161 = vector.extract_strided_slice %158 {offsets = [0, 0], sizes = [8, 128], strides = [1, 1]} : vector<8x384xf32> to vector<8x128xf32>
    %162 = vector.extract_strided_slice %158 {offsets = [0, 128], sizes = [8, 128], strides = [1, 1]} : vector<8x384xf32> to vector<8x128xf32>
    %163 = vector.extract_strided_slice %158 {offsets = [0, 256], sizes = [8, 128], strides = [1, 1]} : vector<8x384xf32> to vector<8x128xf32>
    %164 = arith.mulf %162, %125 : vector<8x128xf32>
    %165 = arith.mulf %161, %160 : vector<8x128xf32>
    %166 = arith.addf %164, %165 : vector<8x128xf32>
    %167 = math.tanh %166 : vector<8x128xf32>
    %168 = arith.mulf %163, %167 : vector<8x128xf32>
    %169 = arith.addf %128, %168 : vector<8x128xf32>
    %c32 = arith.constant 32 : index
    %c0_26 = arith.constant 0 : index
    %170 = vector.load %arg1[%c32, %c0_26] : memref<64x512xf32, #tpu.memory_space<vmem>>, vector<8x512xf32>
    %171 = arith.truncf %148 : vector<8x128xf32> to vector<8x128xbf16>
    %cst_27 = arith.constant dense<0.000000e+00> : vector<8x512xf32>
    %172 = tpu.matmul %171, %0, %cst_27 {dimension_numbers = #tpu.dot_dimension_numbers<[1], [0], [0], [1], [0, 0, 1, 1], [], []>} : vector<8x128xbf16>, vector<128x512xbf16>, vector<8x512xf32> -> vector<8x512xf32>
    %173 = arith.addf %170, %172 : vector<8x512xf32>
    %174 = vector.extract_strided_slice %173 {offsets = [0, 0], sizes = [8, 384], strides = [1, 1]} : vector<8x512xf32> to vector<8x384xf32>
    %175 = arith.negf %174 : vector<8x384xf32>
    %176 = math.exp %175 : vector<8x384xf32>
    %cst_28 = arith.constant 1.000000e+00 : f32
    %177 = vector.broadcast %cst_28 : f32 to vector<8x384xf32>
    %178 = arith.addf %177, %176 : vector<8x384xf32>
    %179 = arith.divf %177, %178 : vector<8x384xf32>
    %180 = vector.extract_strided_slice %173 {offsets = [0, 384], sizes = [8, 128], strides = [1, 1]} : vector<8x512xf32> to vector<8x128xf32>
    %181 = math.tanh %180 : vector<8x128xf32>
    %182 = vector.extract_strided_slice %179 {offsets = [0, 0], sizes = [8, 128], strides = [1, 1]} : vector<8x384xf32> to vector<8x128xf32>
    %183 = vector.extract_strided_slice %179 {offsets = [0, 128], sizes = [8, 128], strides = [1, 1]} : vector<8x384xf32> to vector<8x128xf32>
    %184 = vector.extract_strided_slice %179 {offsets = [0, 256], sizes = [8, 128], strides = [1, 1]} : vector<8x384xf32> to vector<8x128xf32>
    %185 = arith.mulf %183, %146 : vector<8x128xf32>
    %186 = arith.mulf %182, %181 : vector<8x128xf32>
    %187 = arith.addf %185, %186 : vector<8x128xf32>
    %188 = math.tanh %187 : vector<8x128xf32>
    %189 = arith.mulf %184, %188 : vector<8x128xf32>
    %190 = tpu.concatenate %189, %168 in 1 : vector<8x128xf32>, vector<8x128xf32> -> vector<8x256xf32>
    %191 = arith.truncf %190 : vector<8x256xf32> to vector<8x256xbf16>
    %cst_29 = arith.constant dense<0.000000e+00> : vector<8x512xf32>
    %192 = tpu.matmul %191, %1, %cst_29 {dimension_numbers = #tpu.dot_dimension_numbers<[1], [0], [0], [1], [0, 0, 1, 1], [], []>} : vector<8x256xbf16>, vector<256x512xbf16>, vector<8x512xf32> -> vector<8x512xf32>
    %193 = arith.addf %192, %4 : vector<8x512xf32>
    %194 = vector.extract_strided_slice %193 {offsets = [0, 0], sizes = [8, 384], strides = [1, 1]} : vector<8x512xf32> to vector<8x384xf32>
    %195 = arith.negf %194 : vector<8x384xf32>
    %196 = math.exp %195 : vector<8x384xf32>
    %cst_30 = arith.constant 1.000000e+00 : f32
    %197 = vector.broadcast %cst_30 : f32 to vector<8x384xf32>
    %198 = arith.addf %197, %196 : vector<8x384xf32>
    %199 = arith.divf %197, %198 : vector<8x384xf32>
    %200 = vector.extract_strided_slice %193 {offsets = [0, 384], sizes = [8, 128], strides = [1, 1]} : vector<8x512xf32> to vector<8x128xf32>
    %201 = math.tanh %200 : vector<8x128xf32>
    %202 = vector.extract_strided_slice %199 {offsets = [0, 0], sizes = [8, 128], strides = [1, 1]} : vector<8x384xf32> to vector<8x128xf32>
    %203 = vector.extract_strided_slice %199 {offsets = [0, 128], sizes = [8, 128], strides = [1, 1]} : vector<8x384xf32> to vector<8x128xf32>
    %204 = vector.extract_strided_slice %199 {offsets = [0, 256], sizes = [8, 128], strides = [1, 1]} : vector<8x384xf32> to vector<8x128xf32>
    %205 = arith.mulf %203, %166 : vector<8x128xf32>
    %206 = arith.mulf %202, %201 : vector<8x128xf32>
    %207 = arith.addf %205, %206 : vector<8x128xf32>
    %208 = math.tanh %207 : vector<8x128xf32>
    %209 = arith.mulf %204, %208 : vector<8x128xf32>
    %210 = arith.addf %169, %209 : vector<8x128xf32>
    %c40 = arith.constant 40 : index
    %c0_31 = arith.constant 0 : index
    %211 = vector.load %arg1[%c40, %c0_31] : memref<64x512xf32, #tpu.memory_space<vmem>>, vector<8x512xf32>
    %212 = arith.truncf %189 : vector<8x128xf32> to vector<8x128xbf16>
    %cst_32 = arith.constant dense<0.000000e+00> : vector<8x512xf32>
    %213 = tpu.matmul %212, %0, %cst_32 {dimension_numbers = #tpu.dot_dimension_numbers<[1], [0], [0], [1], [0, 0, 1, 1], [], []>} : vector<8x128xbf16>, vector<128x512xbf16>, vector<8x512xf32> -> vector<8x512xf32>
    %214 = arith.addf %211, %213 : vector<8x512xf32>
    %215 = vector.extract_strided_slice %214 {offsets = [0, 0], sizes = [8, 384], strides = [1, 1]} : vector<8x512xf32> to vector<8x384xf32>
    %216 = arith.negf %215 : vector<8x384xf32>
    %217 = math.exp %216 : vector<8x384xf32>
    %cst_33 = arith.constant 1.000000e+00 : f32
    %218 = vector.broadcast %cst_33 : f32 to vector<8x384xf32>
    %219 = arith.addf %218, %217 : vector<8x384xf32>
    %220 = arith.divf %218, %219 : vector<8x384xf32>
    %221 = vector.extract_strided_slice %214 {offsets = [0, 384], sizes = [8, 128], strides = [1, 1]} : vector<8x512xf32> to vector<8x128xf32>
    %222 = math.tanh %221 : vector<8x128xf32>
    %223 = vector.extract_strided_slice %220 {offsets = [0, 0], sizes = [8, 128], strides = [1, 1]} : vector<8x384xf32> to vector<8x128xf32>
    %224 = vector.extract_strided_slice %220 {offsets = [0, 128], sizes = [8, 128], strides = [1, 1]} : vector<8x384xf32> to vector<8x128xf32>
    %225 = vector.extract_strided_slice %220 {offsets = [0, 256], sizes = [8, 128], strides = [1, 1]} : vector<8x384xf32> to vector<8x128xf32>
    %226 = arith.mulf %224, %187 : vector<8x128xf32>
    %227 = arith.mulf %223, %222 : vector<8x128xf32>
    %228 = arith.addf %226, %227 : vector<8x128xf32>
    %229 = math.tanh %228 : vector<8x128xf32>
    %230 = arith.mulf %225, %229 : vector<8x128xf32>
    %231 = tpu.concatenate %230, %209 in 1 : vector<8x128xf32>, vector<8x128xf32> -> vector<8x256xf32>
    %232 = arith.truncf %231 : vector<8x256xf32> to vector<8x256xbf16>
    %cst_34 = arith.constant dense<0.000000e+00> : vector<8x512xf32>
    %233 = tpu.matmul %232, %1, %cst_34 {dimension_numbers = #tpu.dot_dimension_numbers<[1], [0], [0], [1], [0, 0, 1, 1], [], []>} : vector<8x256xbf16>, vector<256x512xbf16>, vector<8x512xf32> -> vector<8x512xf32>
    %234 = arith.addf %233, %4 : vector<8x512xf32>
    %235 = vector.extract_strided_slice %234 {offsets = [0, 0], sizes = [8, 384], strides = [1, 1]} : vector<8x512xf32> to vector<8x384xf32>
    %236 = arith.negf %235 : vector<8x384xf32>
    %237 = math.exp %236 : vector<8x384xf32>
    %cst_35 = arith.constant 1.000000e+00 : f32
    %238 = vector.broadcast %cst_35 : f32 to vector<8x384xf32>
    %239 = arith.addf %238, %237 : vector<8x384xf32>
    %240 = arith.divf %238, %239 : vector<8x384xf32>
    %241 = vector.extract_strided_slice %234 {offsets = [0, 384], sizes = [8, 128], strides = [1, 1]} : vector<8x512xf32> to vector<8x128xf32>
    %242 = math.tanh %241 : vector<8x128xf32>
    %243 = vector.extract_strided_slice %240 {offsets = [0, 0], sizes = [8, 128], strides = [1, 1]} : vector<8x384xf32> to vector<8x128xf32>
    %244 = vector.extract_strided_slice %240 {offsets = [0, 128], sizes = [8, 128], strides = [1, 1]} : vector<8x384xf32> to vector<8x128xf32>
    %245 = vector.extract_strided_slice %240 {offsets = [0, 256], sizes = [8, 128], strides = [1, 1]} : vector<8x384xf32> to vector<8x128xf32>
    %246 = arith.mulf %244, %207 : vector<8x128xf32>
    %247 = arith.mulf %243, %242 : vector<8x128xf32>
    %248 = arith.addf %246, %247 : vector<8x128xf32>
    %249 = math.tanh %248 : vector<8x128xf32>
    %250 = arith.mulf %245, %249 : vector<8x128xf32>
    %251 = arith.addf %210, %250 : vector<8x128xf32>
    %c48 = arith.constant 48 : index
    %c0_36 = arith.constant 0 : index
    %252 = vector.load %arg1[%c48, %c0_36] : memref<64x512xf32, #tpu.memory_space<vmem>>, vector<8x512xf32>
    %253 = arith.truncf %230 : vector<8x128xf32> to vector<8x128xbf16>
    %cst_37 = arith.constant dense<0.000000e+00> : vector<8x512xf32>
    %254 = tpu.matmul %253, %0, %cst_37 {dimension_numbers = #tpu.dot_dimension_numbers<[1], [0], [0], [1], [0, 0, 1, 1], [], []>} : vector<8x128xbf16>, vector<128x512xbf16>, vector<8x512xf32> -> vector<8x512xf32>
    %255 = arith.addf %252, %254 : vector<8x512xf32>
    %256 = vector.extract_strided_slice %255 {offsets = [0, 0], sizes = [8, 384], strides = [1, 1]} : vector<8x512xf32> to vector<8x384xf32>
    %257 = arith.negf %256 : vector<8x384xf32>
    %258 = math.exp %257 : vector<8x384xf32>
    %cst_38 = arith.constant 1.000000e+00 : f32
    %259 = vector.broadcast %cst_38 : f32 to vector<8x384xf32>
    %260 = arith.addf %259, %258 : vector<8x384xf32>
    %261 = arith.divf %259, %260 : vector<8x384xf32>
    %262 = vector.extract_strided_slice %255 {offsets = [0, 384], sizes = [8, 128], strides = [1, 1]} : vector<8x512xf32> to vector<8x128xf32>
    %263 = math.tanh %262 : vector<8x128xf32>
    %264 = vector.extract_strided_slice %261 {offsets = [0, 0], sizes = [8, 128], strides = [1, 1]} : vector<8x384xf32> to vector<8x128xf32>
    %265 = vector.extract_strided_slice %261 {offsets = [0, 128], sizes = [8, 128], strides = [1, 1]} : vector<8x384xf32> to vector<8x128xf32>
    %266 = vector.extract_strided_slice %261 {offsets = [0, 256], sizes = [8, 128], strides = [1, 1]} : vector<8x384xf32> to vector<8x128xf32>
    %267 = arith.mulf %265, %228 : vector<8x128xf32>
    %268 = arith.mulf %264, %263 : vector<8x128xf32>
    %269 = arith.addf %267, %268 : vector<8x128xf32>
    %270 = math.tanh %269 : vector<8x128xf32>
    %271 = arith.mulf %266, %270 : vector<8x128xf32>
    %272 = tpu.concatenate %271, %250 in 1 : vector<8x128xf32>, vector<8x128xf32> -> vector<8x256xf32>
    %273 = arith.truncf %272 : vector<8x256xf32> to vector<8x256xbf16>
    %cst_39 = arith.constant dense<0.000000e+00> : vector<8x512xf32>
    %274 = tpu.matmul %273, %1, %cst_39 {dimension_numbers = #tpu.dot_dimension_numbers<[1], [0], [0], [1], [0, 0, 1, 1], [], []>} : vector<8x256xbf16>, vector<256x512xbf16>, vector<8x512xf32> -> vector<8x512xf32>
    %275 = arith.addf %274, %4 : vector<8x512xf32>
    %276 = vector.extract_strided_slice %275 {offsets = [0, 0], sizes = [8, 384], strides = [1, 1]} : vector<8x512xf32> to vector<8x384xf32>
    %277 = arith.negf %276 : vector<8x384xf32>
    %278 = math.exp %277 : vector<8x384xf32>
    %cst_40 = arith.constant 1.000000e+00 : f32
    %279 = vector.broadcast %cst_40 : f32 to vector<8x384xf32>
    %280 = arith.addf %279, %278 : vector<8x384xf32>
    %281 = arith.divf %279, %280 : vector<8x384xf32>
    %282 = vector.extract_strided_slice %275 {offsets = [0, 384], sizes = [8, 128], strides = [1, 1]} : vector<8x512xf32> to vector<8x128xf32>
    %283 = math.tanh %282 : vector<8x128xf32>
    %284 = vector.extract_strided_slice %281 {offsets = [0, 0], sizes = [8, 128], strides = [1, 1]} : vector<8x384xf32> to vector<8x128xf32>
    %285 = vector.extract_strided_slice %281 {offsets = [0, 128], sizes = [8, 128], strides = [1, 1]} : vector<8x384xf32> to vector<8x128xf32>
    %286 = vector.extract_strided_slice %281 {offsets = [0, 256], sizes = [8, 128], strides = [1, 1]} : vector<8x384xf32> to vector<8x128xf32>
    %287 = arith.mulf %285, %248 : vector<8x128xf32>
    %288 = arith.mulf %284, %283 : vector<8x128xf32>
    %289 = arith.addf %287, %288 : vector<8x128xf32>
    %290 = math.tanh %289 : vector<8x128xf32>
    %291 = arith.mulf %286, %290 : vector<8x128xf32>
    %292 = arith.addf %251, %291 : vector<8x128xf32>
    %c56 = arith.constant 56 : index
    %c0_41 = arith.constant 0 : index
    %293 = vector.load %arg1[%c56, %c0_41] : memref<64x512xf32, #tpu.memory_space<vmem>>, vector<8x512xf32>
    %294 = arith.truncf %271 : vector<8x128xf32> to vector<8x128xbf16>
    %cst_42 = arith.constant dense<0.000000e+00> : vector<8x512xf32>
    %295 = tpu.matmul %294, %0, %cst_42 {dimension_numbers = #tpu.dot_dimension_numbers<[1], [0], [0], [1], [0, 0, 1, 1], [], []>} : vector<8x128xbf16>, vector<128x512xbf16>, vector<8x512xf32> -> vector<8x512xf32>
    %296 = arith.addf %293, %295 : vector<8x512xf32>
    %297 = vector.extract_strided_slice %296 {offsets = [0, 0], sizes = [8, 384], strides = [1, 1]} : vector<8x512xf32> to vector<8x384xf32>
    %298 = arith.negf %297 : vector<8x384xf32>
    %299 = math.exp %298 : vector<8x384xf32>
    %cst_43 = arith.constant 1.000000e+00 : f32
    %300 = vector.broadcast %cst_43 : f32 to vector<8x384xf32>
    %301 = arith.addf %300, %299 : vector<8x384xf32>
    %302 = arith.divf %300, %301 : vector<8x384xf32>
    %303 = vector.extract_strided_slice %296 {offsets = [0, 384], sizes = [8, 128], strides = [1, 1]} : vector<8x512xf32> to vector<8x128xf32>
    %304 = math.tanh %303 : vector<8x128xf32>
    %305 = vector.extract_strided_slice %302 {offsets = [0, 0], sizes = [8, 128], strides = [1, 1]} : vector<8x384xf32> to vector<8x128xf32>
    %306 = vector.extract_strided_slice %302 {offsets = [0, 128], sizes = [8, 128], strides = [1, 1]} : vector<8x384xf32> to vector<8x128xf32>
    %307 = vector.extract_strided_slice %302 {offsets = [0, 256], sizes = [8, 128], strides = [1, 1]} : vector<8x384xf32> to vector<8x128xf32>
    %308 = arith.mulf %306, %269 : vector<8x128xf32>
    %309 = arith.mulf %305, %304 : vector<8x128xf32>
    %310 = arith.addf %308, %309 : vector<8x128xf32>
    %311 = math.tanh %310 : vector<8x128xf32>
    %312 = arith.mulf %307, %311 : vector<8x128xf32>
    %313 = tpu.concatenate %312, %291 in 1 : vector<8x128xf32>, vector<8x128xf32> -> vector<8x256xf32>
    %314 = arith.truncf %313 : vector<8x256xf32> to vector<8x256xbf16>
    %cst_44 = arith.constant dense<0.000000e+00> : vector<8x512xf32>
    %315 = tpu.matmul %314, %1, %cst_44 {dimension_numbers = #tpu.dot_dimension_numbers<[1], [0], [0], [1], [0, 0, 1, 1], [], []>} : vector<8x256xbf16>, vector<256x512xbf16>, vector<8x512xf32> -> vector<8x512xf32>
    %316 = arith.addf %315, %4 : vector<8x512xf32>
    %317 = vector.extract_strided_slice %316 {offsets = [0, 0], sizes = [8, 384], strides = [1, 1]} : vector<8x512xf32> to vector<8x384xf32>
    %318 = arith.negf %317 : vector<8x384xf32>
    %319 = math.exp %318 : vector<8x384xf32>
    %cst_45 = arith.constant 1.000000e+00 : f32
    %320 = vector.broadcast %cst_45 : f32 to vector<8x384xf32>
    %321 = arith.addf %320, %319 : vector<8x384xf32>
    %322 = arith.divf %320, %321 : vector<8x384xf32>
    %323 = vector.extract_strided_slice %316 {offsets = [0, 384], sizes = [8, 128], strides = [1, 1]} : vector<8x512xf32> to vector<8x128xf32>
    %324 = math.tanh %323 : vector<8x128xf32>
    %325 = vector.extract_strided_slice %322 {offsets = [0, 0], sizes = [8, 128], strides = [1, 1]} : vector<8x384xf32> to vector<8x128xf32>
    %326 = vector.extract_strided_slice %322 {offsets = [0, 128], sizes = [8, 128], strides = [1, 1]} : vector<8x384xf32> to vector<8x128xf32>
    %327 = vector.extract_strided_slice %322 {offsets = [0, 256], sizes = [8, 128], strides = [1, 1]} : vector<8x384xf32> to vector<8x128xf32>
    %328 = arith.mulf %326, %289 : vector<8x128xf32>
    %329 = arith.mulf %325, %324 : vector<8x128xf32>
    %330 = arith.addf %328, %329 : vector<8x128xf32>
    %331 = math.tanh %330 : vector<8x128xf32>
    %332 = arith.mulf %327, %331 : vector<8x128xf32>
    %333 = arith.addf %292, %332 : vector<8x128xf32>
    %c0_46 = arith.constant 0 : index
    %c0_47 = arith.constant 0 : index
    %334 = vector.load %arg5[%c0_46, %c0_47] : memref<128x7xf32, #tpu.memory_space<vmem>>, vector<128x7xf32>
    %cst_48 = arith.constant dense<0.000000e+00> : vector<8x7xf32>
    %335 = tpu.matmul %333, %334, %cst_48 {dimension_numbers = #tpu.dot_dimension_numbers<[1], [0], [0], [1], [0, 0, 1, 1], [], []>} : vector<8x128xf32>, vector<128x7xf32>, vector<8x7xf32> -> vector<8x7xf32>
    %c0_49 = arith.constant 0 : index
    %c0_50 = arith.constant 0 : index
    %336 = vector.load %arg6[%c0_49, %c0_50] : memref<1x7xf32, #tpu.memory_space<vmem>>, vector<1x7xf32>
    %337 = vector.broadcast %336 : vector<1x7xf32> to vector<8x7xf32>
    %338 = arith.addf %335, %337 : vector<8x7xf32>
    %c0_51 = arith.constant 0 : index
    %c0_52 = arith.constant 0 : index
    %339 = vector.load %arg7[%c0_51, %c0_52] : memref<8x7xf32, #tpu.memory_space<vmem>>, vector<8x7xf32>
    tpu.vector_store %arg7[%c0_51, %c0_52], %338 {strides = array<i32>} : memref<8x7xf32, #tpu.memory_space<vmem>>, vector<8x7xf32>,
    return
  }
  func.func @transform_0(%arg0: i32) -> (i32, i32) {
    %c0_i32 = arith.constant 0 : i32
    %c0_i32_0 = arith.constant 0 : i32
    %c0_i32_1 = arith.constant 0 : i32
    return %c0_i32, %c0_i32_0 : i32, i32
  }
  func.func @transform_1(%arg0: i32) -> (i32, i32) {
    %c0_i32 = arith.constant 0 : i32
    %c0_i32_0 = arith.constant 0 : i32
    %c0_i32_1 = arith.constant 0 : i32
    return %c0_i32, %c0_i32_0 : i32, i32
  }
  func.func @transform_2(%arg0: i32) -> (i32, i32) {
    %c0_i32 = arith.constant 0 : i32
    %c0_i32_0 = arith.constant 0 : i32
    %c0_i32_1 = arith.constant 0 : i32
    return %c0_i32, %c0_i32_0 : i32, i32
  }
  func.func @transform_3(%arg0: i32) -> (i32, i32) {
    %c0_i32 = arith.constant 0 : i32
    %c0_i32_0 = arith.constant 0 : i32
    %c0_i32_1 = arith.constant 0 : i32
    return %c0_i32, %c0_i32_0 : i32, i32
  }
  func.func @transform_4(%arg0: i32) -> (i32, i32) {
    %c0_i32 = arith.constant 0 : i32
    %c0_i32_0 = arith.constant 0 : i32
    %c0_i32_1 = arith.constant 0 : i32
    return %c0_i32, %c0_i32_0 : i32, i32
  }
  func.func @transform_5(%arg0: i32) -> (i32, i32) {
    %c0_i32 = arith.constant 0 : i32
    %c0_i32_0 = arith.constant 0 : i32
    %c0_i32_1 = arith.constant 0 : i32
    return %c0_i32, %c0_i32_0 : i32, i32
  }
  func.func @transform_6(%arg0: i32) -> (i32, i32) {
    %c0_i32 = arith.constant 0 : i32
    %c0_i32_0 = arith.constant 0 : i32
    %c0_i32_1 = arith.constant 0 : i32
    return %c0_i32, %c0_i32_0 : i32, i32
  }
}

</mosaic_0001>

<llo_original>
// kernel: tpu_custom_call.1
$region0: #{tpu_custom_call.1}
  #allocation0 [shape = 'u32[]', space=smem, size = 0x4, offset = 0x4, fixed_abs, tag = 'smem constant byte address 0x4 - core index']
  #allocation1 [shape = 'u32[144,128]{1,0:T(1,128)}', space=vmem, size = 0x12000, scoped, tag = 'internal scratch']
  %s0 = inlined_call_operand.hbm [shape: f32[64,512], index: 0, kind: input, shape index: {}]
  %s1 = inlined_call_operand.hbm [shape: bf16[128,512], index: 1, kind: input, shape index: {}]
  %s2 = inlined_call_operand.hbm [shape: bf16[256,512], index: 2, kind: input, shape index: {}]
  %s3 = inlined_call_operand.vmem [shape: f32[1,512], index: 3, kind: input, shape index: {}]
  %s4 = inlined_call_operand.vmem [shape: f32[128,7], index: 4, kind: input, shape index: {}]
  %s5 = inlined_call_operand.vmem [shape: f32[1,7], index: 5, kind: input, shape index: {}]
  %s6 = inlined_call_operand.hbm [shape: f32[8,7], index: 6, kind: output, shape index: {}]
  %s7 = sld [smem:[#allocation0]]
  $region46: #{tpu_custom_call.1} parent=0
    _
  %s9 = ssub.s32 1, %s7
  %s10 = scalar_select 0, %s9, %s7
  $region1: #{tpu_custom_call.1} parent=0
    #allocation2 [shape = 'u8[131072]{0}', space=vmem, size = 0x20000, scoped, tag = 'input window, operand 0, single buffered']
    #allocation3 [shape = 's32[1]{0}', space=sflag, size = 0x4, scoped, tag = 'scoped memory for tpu_custom_call.1']
    #allocation4 [shape = 's32[1]{0}', space=sflag, size = 0x4, scoped, tag = 'scoped memory for tpu_custom_call.1']
    #allocation5 [shape = 'u8[131072]{0}', space=vmem, size = 0x20000, scoped, tag = 'input window, operand 1, single buffered']
    #allocation6 [shape = 's32[1]{0}', space=sflag, size = 0x4, scoped, tag = 'scoped memory for tpu_custom_call.1']
    #allocation7 [shape = 'u8[262144]{0}', space=vmem, size = 0x40000, scoped, tag = 'input window, operand 2, single buffered']
    #allocation8 [shape = 'u8[4096]{0}', space=vmem, size = 0x1000, scoped, tag = 'output window, operand 0, single buffered']
    %11 = vsyncpa [#allocation3], 0
    %12 = vsyncpa [#allocation6], 0
    %13 = vsyncpa [#allocation4], 0
    // Predicated region
    $region2: #{tpu_custom_call.1} parent=1 // pred_check
      _
    $region3: #{tpu_custom_call.1} parent=1 // pred_check_branch
      %15 = sbr.rel (0) target = $region5
    $region4: #{tpu_custom_call.1} parent=1 // pred_region
      %s17 = ssub.s32 4096, 4096
      %18 = vsyncadd [#allocation3], %s17
      %s19 = sshll.u32 [#allocation2], 4
      %s20 = int_to_ptr.vmem [resolvable:$true] %s19
      %25 = dma.hbm_to_vmem [thread:$0]  %s0, 4096, %s20, [#allocation3], 512, 512, 32
    $region5: #{tpu_custom_call.1} parent=1 // pred_fallthru
      _
    // Predicated region
    $region6: #{tpu_custom_call.1} parent=1 // pred_check
      _
    $region7: #{tpu_custom_call.1} parent=1 // pred_check_branch
      %27 = sbr.rel (0) target = $region9
    $region8: #{tpu_custom_call.1} parent=1 // pred_region
      %s29 = ssub.s32 4096, 4096
      %30 = vsyncadd [#allocation6], %s29
      %s31 = sshll.u32 [#allocation5], 4
      %s32 = int_to_ptr.vmem [resolvable:$true] %s31
      %37 = dma.hbm_to_vmem [thread:$0]  %s1, 4096, %s32, [#allocation6], 256, 256, 16
    $region9: #{tpu_custom_call.1} parent=1 // pred_fallthru
      _
    // Predicated region
    $region10: #{tpu_custom_call.1} parent=1 // pred_check
      _
    $region11: #{tpu_custom_call.1} parent=1 // pred_check_branch
      %39 = sbr.rel (0) target = $region13
    $region12: #{tpu_custom_call.1} parent=1 // pred_region
      %s41 = ssub.s32 8192, 8192
      %42 = vsyncadd [#allocation6], %s41
      %s43 = sshll.u32 [#allocation7], 4
      %s44 = int_to_ptr.vmem [resolvable:$true] %s43
      %49 = dma.hbm_to_vmem [thread:$0]  %s2, 8192, %s44, [#allocation6], 256, 256, 16
    $region13: #{tpu_custom_call.1} parent=1 // pred_fallthru
      _
    // Predicated region
    $region14: #{tpu_custom_call.1} parent=1 // pred_check
      _
    $region15: #{tpu_custom_call.1} parent=1 // pred_check_branch
      %51 = sbr.rel (0) target = $region17
    $region16: #{tpu_custom_call.1} parent=1 // pred_region
      _
    $region17: #{tpu_custom_call.1} parent=1 // pred_fallthru
      _
    // Predicated region
    $region18: #{tpu_custom_call.1} parent=1 // pred_check
      _
    $region19: #{tpu_custom_call.1} parent=1 // pred_check_branch
      %53 = sbr.rel (0) target = $region21
    $region20: #{tpu_custom_call.1} parent=1 // pred_region
      _
    $region21: #{tpu_custom_call.1} parent=1 // pred_fallthru
      _
    // Predicated region
    $region22: #{tpu_custom_call.1} parent=1 // pred_check
      _
    $region23: #{tpu_custom_call.1} parent=1 // pred_check_branch
      %55 = sbr.rel (0) target = $region25
    $region24: #{tpu_custom_call.1} parent=1 // pred_region
      _
    $region25: #{tpu_custom_call.1} parent=1 // pred_fallthru
      _
    // Predicated region
    $region26: #{tpu_custom_call.1} parent=1 // pred_check
      _
    $region27: #{tpu_custom_call.1} parent=1 // pred_check_branch
      %57 = sbr.rel (0) target = $region29
    $region28: #{tpu_custom_call.1} parent=1 // pred_region
      %58 = dma.done [#allocation3], 4096
    $region29: #{tpu_custom_call.1} parent=1 // pred_fallthru
      _
    // Predicated region
    $region30: #{tpu_custom_call.1} parent=1 // pred_check
      _
    $region31: #{tpu_custom_call.1} parent=1 // pred_check_branch
      %60 = sbr.rel (0) target = $region33
    $region32: #{tpu_custom_call.1} parent=1 // pred_region
      %61 = dma.done [#allocation6], 4096
    $region33: #{tpu_custom_call.1} parent=1 // pred_fallthru
      _
    // Predicated region
    $region34: #{tpu_custom_call.1} parent=1 // pred_check
      _
    $region35: #{tpu_custom_call.1} parent=1 // pred_check_branch
      %63 = sbr.rel (0) target = $region37
    $region36: #{tpu_custom_call.1} parent=1 // pred_region
      %64 = dma.done [#allocation6], 8192
    $region37: #{tpu_custom_call.1} parent=1 // pred_fallthru
      _
    %v66 = vld [vmem:[#allocation5] sm:$0xff]
    %v67 = vld [vmem:[#allocation5 + $0x8] sm:$0xff]
    %v68 = vld [vmem:[#allocation5 + $0x10] sm:$0xff]
    %v69 = vld [vmem:[#allocation5 + $0x18] sm:$0xff]
    %v70 = vld [vmem:[#allocation5 + $0x20] sm:$0xff]
    %v71 = vld [vmem:[#allocation5 + $0x28] sm:$0xff]
    %v72 = vld [vmem:[#allocation5 + $0x30] sm:$0xff]
    %v73 = vld [vmem:[#allocation5 + $0x38] sm:$0xff]
    %v74 = vld [vmem:[#allocation5 + $0x40] sm:$0xff]
    %v75 = vld [vmem:[#allocation5 + $0x48] sm:$0xff]
    %v76 = vld [vmem:[#allocation5 + $0x50] sm:$0xff]
    %v77 = vld [vmem:[#allocation5 + $0x58] sm:$0xff]
    %v78 = vld [vmem:[#allocation5 + $0x60] sm:$0xff]
    %v79 = vld [vmem:[#allocation5 + $0x68] sm:$0xff]
    %v80 = vld [vmem:[#allocation5 + $0x70] sm:$0xff]
    %v81 = vld [vmem:[#allocation5 + $0x78] sm:$0xff]
    %v82 = vld [vmem:[#allocation5 + $0x80] sm:$0xff]
    %v83 = vld [vmem:[#allocation5 + $0x88] sm:$0xff]
    %v84 = vld [vmem:[#allocation5 + $0x90] sm:$0xff]
    %v85 = vld [vmem:[#allocation5 + $0x98] sm:$0xff]
    %v86 = vld [vmem:[#allocation5 + $0xa0] sm:$0xff]
    %v87 = vld [vmem:[#allocation5 + $0xa8] sm:$0xff]
    %v88 = vld [vmem:[#allocation5 + $0xb0] sm:$0xff]
    %v89 = vld [vmem:[#allocation5 + $0xb8] sm:$0xff]
    %v90 = vld [vmem:[#allocation5 + $0xc0] sm:$0xff]
    %v91 = vld [vmem:[#allocation5 + $0xc8] sm:$0xff]
    %v92 = vld [vmem:[#allocation5 + $0xd0] sm:$0xff]
    %v93 = vld [vmem:[#allocation5 + $0xd8] sm:$0xff]
    %v94 = vld [vmem:[#allocation5 + $0xe0] sm:$0xff]
    %v95 = vld [vmem:[#allocation5 + $0xe8] sm:$0xff]
    %v96 = vld [vmem:[#allocation5 + $0xf0] sm:$0xff]
    %v97 = vld [vmem:[#allocation5 + $0xf8] sm:$0xff]
    %v98 = vld [vmem:[#allocation7] sm:$0xff]
    %v99 = vld [vmem:[#allocation7 + $0x8] sm:$0xff]
    %v100 = vld [vmem:[#allocation7 + $0x10] sm:$0xff]
    %v101 = vld [vmem:[#allocation7 + $0x18] sm:$0xff]
    %v102 = vld [vmem:[#allocation7 + $0x20] sm:$0xff]
    %v103 = vld [vmem:[#allocation7 + $0x28] sm:$0xff]
    %v104 = vld [vmem:[#allocation7 + $0x30] sm:$0xff]
    %v105 = vld [vmem:[#allocation7 + $0x38] sm:$0xff]
    %v106 = vld [vmem:[#allocation7 + $0x40] sm:$0xff]
    %v107 = vld [vmem:[#allocation7 + $0x48] sm:$0xff]
    %v108 = vld [vmem:[#allocation7 + $0x50] sm:$0xff]
    %v109 = vld [vmem:[#allocation7 + $0x58] sm:$0xff]
    %v110 = vld [vmem:[#allocation7 + $0x60] sm:$0xff]
    %v111 = vld [vmem:[#allocation7 + $0x68] sm:$0xff]
    %v112 = vld [vmem:[#allocation7 + $0x70] sm:$0xff]
    %v113 = vld [vmem:[#allocation7 + $0x78] sm:$0xff]
    %v114 = vld [vmem:[#allocation7 + $0x80] sm:$0xff]
    %v115 = vld [vmem:[#allocation7 + $0x88] sm:$0xff]
    %v116 = vld [vmem:[#allocation7 + $0x90] sm:$0xff]
    %v117 = vld [vmem:[#allocation7 + $0x98] sm:$0xff]
    %v118 = vld [vmem:[#allocation7 + $0xa0] sm:$0xff]
    %v119 = vld [vmem:[#allocation7 + $0xa8] sm:$0xff]
    %v120 = vld [vmem:[#allocation7 + $0xb0] sm:$0xff]
    %v121 = vld [vmem:[#allocation7 + $0xb8] sm:$0xff]
    %v122 = vld [vmem:[#allocation7 + $0xc0] sm:$0xff]
    %v123 = vld [vmem:[#allocation7 + $0xc8] sm:$0xff]
    %v124 = vld [vmem:[#allocation7 + $0xd0] sm:$0xff]
    %v125 = vld [vmem:[#allocation7 + $0xd8] sm:$0xff]
    %v126 = vld [vmem:[#allocation7 + $0xe0] sm:$0xff]
    %v127 = vld [vmem:[#allocation7 + $0xe8] sm:$0xff]
    %v128 = vld [vmem:[#allocation7 + $0xf0] sm:$0xff]
    %v129 = vld [vmem:[#allocation7 + $0xf8] sm:$0xff]
    %v130 = vld [vmem:[#allocation7 + $0x100] sm:$0xff]
    %v131 = vld [vmem:[#allocation7 + $0x108] sm:$0xff]
    %v132 = vld [vmem:[#allocation7 + $0x110] sm:$0xff]
    %v133 = vld [vmem:[#allocation7 + $0x118] sm:$0xff]
    %v134 = vld [vmem:[#allocation7 + $0x120] sm:$0xff]
    %v135 = vld [vmem:[#allocation7 + $0x128] sm:$0xff]
    %v136 = vld [vmem:[#allocation7 + $0x130] sm:$0xff]
    %v137 = vld [vmem:[#allocation7 + $0x138] sm:$0xff]
    %v138 = vld [vmem:[#allocation7 + $0x140] sm:$0xff]
    %v139 = vld [vmem:[#allocation7 + $0x148] sm:$0xff]
    %v140 = vld [vmem:[#allocation7 + $0x150] sm:$0xff]
    %v141 = vld [vmem:[#allocation7 + $0x158] sm:$0xff]
    %v142 = vld [vmem:[#allocation7 + $0x160] sm:$0xff]
    %v143 = vld [vmem:[#allocation7 + $0x168] sm:$0xff]
    %v144 = vld [vmem:[#allocation7 + $0x170] sm:$0xff]
    %v145 = vld [vmem:[#allocation7 + $0x178] sm:$0xff]
    %v146 = vld [vmem:[#allocation7 + $0x180] sm:$0xff]
    %v147 = vld [vmem:[#allocation7 + $0x188] sm:$0xff]
    %v148 = vld [vmem:[#allocation7 + $0x190] sm:$0xff]
    %v149 = vld [vmem:[#allocation7 + $0x198] sm:$0xff]
    %v150 = vld [vmem:[#allocation7 + $0x1a0] sm:$0xff]
    %v151 = vld [vmem:[#allocation7 + $0x1a8] sm:$0xff]
    %v152 = vld [vmem:[#allocation7 + $0x1b0] sm:$0xff]
    %v153 = vld [vmem:[#allocation7 + $0x1b8] sm:$0xff]
    %v154 = vld [vmem:[#allocation7 + $0x1c0] sm:$0xff]
    %v155 = vld [vmem:[#allocation7 + $0x1c8] sm:$0xff]
    %v156 = vld [vmem:[#allocation7 + $0x1d0] sm:$0xff]
    %v157 = vld [vmem:[#allocation7 + $0x1d8] sm:$0xff]
    %v158 = vld [vmem:[#allocation7 + $0x1e0] sm:$0xff]
    %v159 = vld [vmem:[#allocation7 + $0x1e8] sm:$0xff]
    %v160 = vld [vmem:[#allocation7 + $0x1f0] sm:$0xff]
    %v161 = vld [vmem:[#allocation7 + $0x1f8] sm:$0xff]
    %v162 = vld [vmem:[%s3] sm:$0xf]
    %v164 = vlaneseq
    %v165 = vshrl.u32 %v164, 7
    %v166 = vsub.s32 0, %v165
    %v167 = vrot.slane %v162, %v166
    %v168 = vlaneseq
    %v169 = vshrl.u32 %v168, 7
    %v170 = vsub.s32 1, %v169
    %v171 = vrot.slane %v162, %v170
    %v172 = vlaneseq
    %v173 = vshrl.u32 %v172, 7
    %v174 = vsub.s32 2, %v173
    %v175 = vrot.slane %v162, %v174
    %v176 = vlaneseq
    %v177 = vshrl.u32 %v176, 7
    %v178 = vsub.s32 3, %v177
    %v179 = vrot.slane %v162, %v178
    %v184 = vld [vmem:[#allocation2] sm:$0xff]
    %v185 = vld [vmem:[#allocation2 + $0x8] sm:$0xff]
    %v186 = vld [vmem:[#allocation2 + $0x10] sm:$0xff]
    %v187 = vld [vmem:[#allocation2 + $0x18] sm:$0xff]
    %v220 = vunpack.c.l.b16 %v66
    %v221 = vunpack.c.h.b16 %v66
    %v222 = vunpack.c.l.b16 %v67
    %v223 = vunpack.c.h.b16 %v67
    %v224 = vunpack.c.l.b16 %v68
    %v225 = vunpack.c.h.b16 %v68
    %v226 = vunpack.c.l.b16 %v69
    %v227 = vunpack.c.h.b16 %v69
    %v228 = vunpack.c.l.b16 %v70
    %v229 = vunpack.c.h.b16 %v70
    %v230 = vunpack.c.l.b16 %v71
    %v231 = vunpack.c.h.b16 %v71
    %v232 = vunpack.c.l.b16 %v72
    %v233 = vunpack.c.h.b16 %v72
    %v234 = vunpack.c.l.b16 %v73
    %v235 = vunpack.c.h.b16 %v73
    %v236 = vunpack.c.l.b16 %v74
    %v237 = vunpack.c.h.b16 %v74
    %v238 = vunpack.c.l.b16 %v75
    %v239 = vunpack.c.h.b16 %v75
    %v240 = vunpack.c.l.b16 %v76
    %v241 = vunpack.c.h.b16 %v76
    %v242 = vunpack.c.l.b16 %v77
    %v243 = vunpack.c.h.b16 %v77
    %v244 = vunpack.c.l.b16 %v78
    %v245 = vunpack.c.h.b16 %v78
    %v246 = vunpack.c.l.b16 %v79
    %v247 = vunpack.c.h.b16 %v79
    %v248 = vunpack.c.l.b16 %v80
    %v249 = vunpack.c.h.b16 %v80
    %v250 = vunpack.c.l.b16 %v81
    %v251 = vunpack.c.h.b16 %v81
    %v252 = vunpack.c.l.b16 %v82
    %v253 = vunpack.c.h.b16 %v82
    %v254 = vunpack.c.l.b16 %v83
    %v255 = vunpack.c.h.b16 %v83
    %v256 = vunpack.c.l.b16 %v84
    %v257 = vunpack.c.h.b16 %v84
    %v258 = vunpack.c.l.b16 %v85
    %v259 = vunpack.c.h.b16 %v85
    %v260 = vunpack.c.l.b16 %v86
    %v261 = vunpack.c.h.b16 %v86
    %v262 = vunpack.c.l.b16 %v87
    %v263 = vunpack.c.h.b16 %v87
    %v264 = vunpack.c.l.b16 %v88
    %v265 = vunpack.c.h.b16 %v88
    %v266 = vunpack.c.l.b16 %v89
    %v267 = vunpack.c.h.b16 %v89
    %v268 = vunpack.c.l.b16 %v90
    %v269 = vunpack.c.h.b16 %v90
    %v270 = vunpack.c.l.b16 %v91
    %v271 = vunpack.c.h.b16 %v91
    %v272 = vunpack.c.l.b16 %v92
    %v273 = vunpack.c.h.b16 %v92
    %v274 = vunpack.c.l.b16 %v93
    %v275 = vunpack.c.h.b16 %v93
    %v276 = vunpack.c.l.b16 %v94
    %v277 = vunpack.c.h.b16 %v94
    %v278 = vunpack.c.l.b16 %v95
    %v279 = vunpack.c.h.b16 %v95
    %v280 = vunpack.c.l.b16 %v96
    %v281 = vunpack.c.h.b16 %v96
    %v282 = vunpack.c.l.b16 %v97
    %v283 = vunpack.c.h.b16 %v97
    %v284 = vpack.c.b16 %v224, %v220
    %v285 = vpack.c.b16 %v225, %v221
    %v286 = vpack.c.b16 %v226, %v222
    %v287 = vpack.c.b16 %v227, %v223
    %v288 = vpack.c.b16 %v232, %v228
    %v289 = vpack.c.b16 %v233, %v229
    %v290 = vpack.c.b16 %v234, %v230
    %v291 = vpack.c.b16 %v235, %v231
    %v292 = vpack.c.b16 %v240, %v236
    %v293 = vpack.c.b16 %v241, %v237
    %v294 = vpack.c.b16 %v242, %v238
    %v295 = vpack.c.b16 %v243, %v239
    %v296 = vpack.c.b16 %v248, %v244
    %v297 = vpack.c.b16 %v249, %v245
    %v298 = vpack.c.b16 %v250, %v246
    %v299 = vpack.c.b16 %v251, %v247
    %v300 = vpack.c.b16 %v256, %v252
    %v301 = vpack.c.b16 %v257, %v253
    %v302 = vpack.c.b16 %v258, %v254
    %v303 = vpack.c.b16 %v259, %v255
    %v304 = vpack.c.b16 %v264, %v260
    %v305 = vpack.c.b16 %v265, %v261
    %v306 = vpack.c.b16 %v266, %v262
    %v307 = vpack.c.b16 %v267, %v263
    %v308 = vpack.c.b16 %v272, %v268
    %v309 = vpack.c.b16 %v273, %v269
    %v310 = vpack.c.b16 %v274, %v270
    %v311 = vpack.c.b16 %v275, %v271
    %v312 = vpack.c.b16 %v280, %v276
    %v313 = vpack.c.b16 %v281, %v277
    %v314 = vpack.c.b16 %v282, %v278
    %v315 = vpack.c.b16 %v283, %v279
    %348 = vmatprep.subr.bf16.mxu0 %v285
    %349 = vmatpush1.bf16.msra.mxu0 %v284
    %350 = vmatprep.subr.bf16.mxu0 %v289
    %351 = vmatpush1.bf16.msra.mxu0 %v288
    %352 = vmatprep.subr.bf16.mxu0 %v293
    %353 = vmatpush1.bf16.msra.mxu0 %v292
    %354 = vmatprep.subr.bf16.mxu0 %v297
    %355 = vmatpush1.bf16.msra.mxu0 %v296
    %356 = vmatprep.subr.bf16.mxu0 %v301
    %357 = vmatpush1.bf16.msra.mxu0 %v300
    %358 = vmatprep.subr.bf16.mxu0 %v305
    %359 = vmatpush1.bf16.msra.mxu0 %v304
    %360 = vmatprep.subr.bf16.mxu0 %v309
    %361 = vmatpush1.bf16.msra.mxu0 %v308
    %362 = vmatprep.subr.bf16.mxu0 %v313
    %363 = vmatpush1.bf16.msra.mxu0 %v312
    %364 = vmatprep.subr.bf16.mxu0 0
    %365 = vmatpush1.bf16.msra.mxu0 0
    %366 = vmatprep.subr.bf16.mxu0 0
    %367 = vmatpush1.bf16.msra.mxu0 0
    %368 = vmatprep.subr.bf16.mxu0 0
    %369 = vmatpush1.bf16.msra.mxu0 0
    %370 = vmatprep.subr.bf16.mxu0 0
    %371 = vmatpush1.bf16.msra.mxu0 0
    %372 = vmatprep.subr.bf16.mxu0 0
    %373 = vmatpush1.bf16.msra.mxu0 0
    %374 = vmatprep.subr.bf16.mxu0 0
    %375 = vmatpush1.bf16.msra.mxu0 0
    %376 = vmatprep.subr.bf16.mxu0 0
    %377 = vmatpush1.bf16.msra.mxu0 0
    %378 = vmatprep.subr.bf16.mxu0 0
    %379 = vmatpush1.bf16.msra.mxu0 0
    %380 = vmatprep.mubr.bf16.mxu0 0
    %381 = vmatmul.mubr.bf16.gmra.mrb[0].mxu0 0
    %v382 = vpop.f32.mrb[0].mxu0
    %v383 = vadd.f32 0.0, %v382
    %v384 = vpop.f32.mrb[0].mxu0
    %v385 = vadd.f32 0.0, %v384
    %v386 = vpop.f32.mrb[0].mxu0
    %v387 = vpop.f32.mrb[0].mxu0
    %388 = vdwg.mxu0
    %389 = vmatprep.subr.bf16.mxu0 %v287
    %390 = vmatpush1.bf16.msra.mxu0 %v286
    %391 = vmatprep.subr.bf16.mxu0 %v291
    %392 = vmatpush1.bf16.msra.mxu0 %v290
    %393 = vmatprep.subr.bf16.mxu0 %v295
    %394 = vmatpush1.bf16.msra.mxu0 %v294
    %395 = vmatprep.subr.bf16.mxu0 %v299
    %396 = vmatpush1.bf16.msra.mxu0 %v298
    %397 = vmatprep.subr.bf16.mxu0 %v303
    %398 = vmatpush1.bf16.msra.mxu0 %v302
    %399 = vmatprep.subr.bf16.mxu0 %v307
    %400 = vmatpush1.bf16.msra.mxu0 %v306
    %401 = vmatprep.subr.bf16.mxu0 %v311
    %402 = vmatpush1.bf16.msra.mxu0 %v310
    %403 = vmatprep.subr.bf16.mxu0 %v315
    %404 = vmatpush1.bf16.msra.mxu0 %v314
    %405 = vmatprep.subr.bf16.mxu0 0
    %406 = vmatpush1.bf16.msra.mxu0 0
    %407 = vmatprep.subr.bf16.mxu0 0
    %408 = vmatpush1.bf16.msra.mxu0 0
    %409 = vmatprep.subr.bf16.mxu0 0
    %410 = vmatpush1.bf16.msra.mxu0 0
    %411 = vmatprep.subr.bf16.mxu0 0
    %412 = vmatpush1.bf16.msra.mxu0 0
    %413 = vmatprep.subr.bf16.mxu0 0
    %414 = vmatpush1.bf16.msra.mxu0 0
    %415 = vmatprep.subr.bf16.mxu0 0
    %416 = vmatpush1.bf16.msra.mxu0 0
    %417 = vmatprep.subr.bf16.mxu0 0
    %418 = vmatpush1.bf16.msra.mxu0 0
    %419 = vmatprep.subr.bf16.mxu0 0
    %420 = vmatpush1.bf16.msra.mxu0 0
    %421 = vmatprep.mubr.bf16.mxu0 0
    %422 = vmatmul.mubr.bf16.gmra.mrb[0].mxu0 0
    %v423 = vpop.f32.mrb[0].mxu0
    %v424 = vadd.f32 0.0, %v423
    %v425 = vpop.f32.mrb[0].mxu0
    %v426 = vadd.f32 0.0, %v425
    %v427 = vpop.f32.mrb[0].mxu0
    %v428 = vpop.f32.mrb[0].mxu0
    %429 = vdwg.mxu0
    %v430 = vadd.f32 %v184, %v383
    %v431 = vadd.f32 %v185, %v385
    %v432 = vadd.f32 %v186, %v424
    %v433 = vadd.f32 %v187, %v426
    %v434 = vxor.u32 %v430, 2147483648
    %v435 = vxor.u32 %v431, 2147483648
    %v436 = vxor.u32 %v432, 2147483648
    %v437 = vmul.f32 %v434, 1.442695
    %v438 = vpow.pop %v437
    %v439 = vmul.f32 %v435, 1.442695
    %v440 = vpow.pop %v439
    %v441 = vmul.f32 %v436, 1.442695
    %v442 = vpow.pop %v441
    %v443 = vadd.f32 %v438, 1.0
    %v444 = vadd.f32 %v440, 1.0
    %v445 = vadd.f32 %v442, 1.0
    %v446 = vrcp.pop %v443
    %v447 = vmul.f32 1.0, %v446
    %v448 = vrcp.pop %v444
    %v449 = vmul.f32 1.0, %v448
    %v450 = vrcp.pop %v445
    %v451 = vmul.f32 1.0, %v450
    %v452 = vtanh.pop %v433
    %v453 = vmul.f32 %v449, 0.0
    %v454 = vmul.f32 %v447, %v452
    %v455 = vadd.f32 %v453, %v454
    %v456 = vtanh.pop %v455
    %v457 = vmul.f32 %v451, %v456
    %v458 = vpack.c.bf16 %v457, %v457
    %v459 = vpack.c.bf16 0.0, 0.0
    %v524 = vunpack.c.l.b16 %v98
    %v525 = vunpack.c.h.b16 %v98
    %v526 = vunpack.c.l.b16 %v99
    %v527 = vunpack.c.h.b16 %v99
    %v528 = vunpack.c.l.b16 %v100
    %v529 = vunpack.c.h.b16 %v100
    %v530 = vunpack.c.l.b16 %v101
    %v531 = vunpack.c.h.b16 %v101
    %v532 = vunpack.c.l.b16 %v102
    %v533 = vunpack.c.h.b16 %v102
    %v534 = vunpack.c.l.b16 %v103
    %v535 = vunpack.c.h.b16 %v103
    %v536 = vunpack.c.l.b16 %v104
    %v537 = vunpack.c.h.b16 %v104
    %v538 = vunpack.c.l.b16 %v105
    %v539 = vunpack.c.h.b16 %v105
    %v540 = vunpack.c.l.b16 %v106
    %v541 = vunpack.c.h.b16 %v106
    %v542 = vunpack.c.l.b16 %v107
    %v543 = vunpack.c.h.b16 %v107
    %v544 = vunpack.c.l.b16 %v108
    %v545 = vunpack.c.h.b16 %v108
    %v546 = vunpack.c.l.b16 %v109
    %v547 = vunpack.c.h.b16 %v109
    %v548 = vunpack.c.l.b16 %v110
    %v549 = vunpack.c.h.b16 %v110
    %v550 = vunpack.c.l.b16 %v111
    %v551 = vunpack.c.h.b16 %v111
    %v552 = vunpack.c.l.b16 %v112
    %v553 = vunpack.c.h.b16 %v112
    %v554 = vunpack.c.l.b16 %v113
    %v555 = vunpack.c.h.b16 %v113
    %v556 = vunpack.c.l.b16 %v114
    %v557 = vunpack.c.h.b16 %v114
    %v558 = vunpack.c.l.b16 %v115
    %v559 = vunpack.c.h.b16 %v115
    %v560 = vunpack.c.l.b16 %v116
    %v561 = vunpack.c.h.b16 %v116
    %v562 = vunpack.c.l.b16 %v117
    %v563 = vunpack.c.h.b16 %v117
    %v564 = vunpack.c.l.b16 %v118
    %v565 = vunpack.c.h.b16 %v118
    %v566 = vunpack.c.l.b16 %v119
    %v567 = vunpack.c.h.b16 %v119
    %v568 = vunpack.c.l.b16 %v120
    %v569 = vunpack.c.h.b16 %v120
    %v570 = vunpack.c.l.b16 %v121
    %v571 = vunpack.c.h.b16 %v121
    %v572 = vunpack.c.l.b16 %v122
    %v573 = vunpack.c.h.b16 %v122
    %v574 = vunpack.c.l.b16 %v123
    %v575 = vunpack.c.h.b16 %v123
    %v576 = vunpack.c.l.b16 %v124
    %v577 = vunpack.c.h.b16 %v124
    %v578 = vunpack.c.l.b16 %v125
    %v579 = vunpack.c.h.b16 %v125
    %v580 = vunpack.c.l.b16 %v126
    %v581 = vunpack.c.h.b16 %v126
    %v582 = vunpack.c.l.b16 %v127
    %v583 = vunpack.c.h.b16 %v127
    %v584 = vunpack.c.l.b16 %v128
    %v585 = vunpack.c.h.b16 %v128
    %v586 = vunpack.c.l.b16 %v129
    %v587 = vunpack.c.h.b16 %v129
    %v588 = vunpack.c.l.b16 %v130
    %v589 = vunpack.c.h.b16 %v130
    %v590 = vunpack.c.l.b16 %v131
    %v591 = vunpack.c.h.b16 %v131
    %v592 = vunpack.c.l.b16 %v132
    %v593 = vunpack.c.h.b16 %v132
    %v594 = vunpack.c.l.b16 %v133
    %v595 = vunpack.c.h.b16 %v133
    %v596 = vunpack.c.l.b16 %v134
    %v597 = vunpack.c.h.b16 %v134
    %v598 = vunpack.c.l.b16 %v135
    %v599 = vunpack.c.h.b16 %v135
    %v600 = vunpack.c.l.b16 %v136
    %v601 = vunpack.c.h.b16 %v136
    %v602 = vunpack.c.l.b16 %v137
    %v603 = vunpack.c.h.b16 %v137
    %v604 = vunpack.c.l.b16 %v138
    %v605 = vunpack.c.h.b16 %v138
    %v606 = vunpack.c.l.b16 %v139
    %v607 = vunpack.c.h.b16 %v139
    %v608 = vunpack.c.l.b16 %v140
    %v609 = vunpack.c.h.b16 %v140
    %v610 = vunpack.c.l.b16 %v141
    %v611 = vunpack.c.h.b16 %v141
    %v612 = vunpack.c.l.b16 %v142
    %v613 = vunpack.c.h.b16 %v142
    %v614 = vunpack.c.l.b16 %v143
    %v615 = vunpack.c.h.b16 %v143
    %v616 = vunpack.c.l.b16 %v144
    %v617 = vunpack.c.h.b16 %v144
    %v618 = vunpack.c.l.b16 %v145
    %v619 = vunpack.c.h.b16 %v145
    %v620 = vunpack.c.l.b16 %v146
    %v621 = vunpack.c.h.b16 %v146
    %v622 = vunpack.c.l.b16 %v147
    %v623 = vunpack.c.h.b16 %v147
    %v624 = vunpack.c.l.b16 %v148
    %v625 = vunpack.c.h.b16 %v148
    %v626 = vunpack.c.l.b16 %v149
    %v627 = vunpack.c.h.b16 %v149
    %v628 = vunpack.c.l.b16 %v150
    %v629 = vunpack.c.h.b16 %v150
    %v630 = vunpack.c.l.b16 %v151
    %v631 = vunpack.c.h.b16 %v151
    %v632 = vunpack.c.l.b16 %v152
    %v633 = vunpack.c.h.b16 %v152
    %v634 = vunpack.c.l.b16 %v153
    %v635 = vunpack.c.h.b16 %v153
    %v636 = vunpack.c.l.b16 %v154
    %v637 = vunpack.c.h.b16 %v154
    %v638 = vunpack.c.l.b16 %v155
    %v639 = vunpack.c.h.b16 %v155
    %v640 = vunpack.c.l.b16 %v156
    %v641 = vunpack.c.h.b16 %v156
    %v642 = vunpack.c.l.b16 %v157
    %v643 = vunpack.c.h.b16 %v157
    %v644 = vunpack.c.l.b16 %v158
    %v645 = vunpack.c.h.b16 %v158
    %v646 = vunpack.c.l.b16 %v159
    %v647 = vunpack.c.h.b16 %v159
    %v648 = vunpack.c.l.b16 %v160
    %v649 = vunpack.c.h.b16 %v160
    %v650 = vunpack.c.l.b16 %v161
    %v651 = vunpack.c.h.b16 %v161
    %v652 = vpack.c.b16 %v528, %v524
    %v653 = vpack.c.b16 %v529, %v525
    %v654 = vpack.c.b16 %v530, %v526
    %v655 = vpack.c.b16 %v531, %v527
    %v656 = vpack.c.b16 %v536, %v532
    %v657 = vpack.c.b16 %v537, %v533
    %v658 = vpack.c.b16 %v538, %v534
    %v659 = vpack.c.b16 %v539, %v535
    %v660 = vpack.c.b16 %v544, %v540
    %v661 = vpack.c.b16 %v545, %v541
    %v662 = vpack.c.b16 %v546, %v542
    %v663 = vpack.c.b16 %v547, %v543
    %v664 = vpack.c.b16 %v552, %v548
    %v665 = vpack.c.b16 %v553, %v549
    %v666 = vpack.c.b16 %v554, %v550
    %v667 = vpack.c.b16 %v555, %v551
    %v668 = vpack.c.b16 %v560, %v556
    %v669 = vpack.c.b16 %v561, %v557
    %v670 = vpack.c.b16 %v562, %v558
    %v671 = vpack.c.b16 %v563, %v559
    %v672 = vpack.c.b16 %v568, %v564
    %v673 = vpack.c.b16 %v569, %v565
    %v674 = vpack.c.b16 %v570, %v566
    %v675 = vpack.c.b16 %v571, %v567
    %v676 = vpack.c.b16 %v576, %v572
    %v677 = vpack.c.b16 %v577, %v573
    %v678 = vpack.c.b16 %v578, %v574
    %v679 = vpack.c.b16 %v579, %v575
    %v680 = vpack.c.b16 %v584, %v580
    %v681 = vpack.c.b16 %v585, %v581
    %v682 = vpack.c.b16 %v586, %v582
    %v683 = vpack.c.b16 %v587, %v583
    %v684 = vpack.c.b16 %v592, %v588
    %v685 = vpack.c.b16 %v593, %v589
    %v686 = vpack.c.b16 %v594, %v590
    %v687 = vpack.c.b16 %v595, %v591
    %v688 = vpack.c.b16 %v600, %v596
    %v689 = vpack.c.b16 %v601, %v597
    %v690 = vpack.c.b16 %v602, %v598
    %v691 = vpack.c.b16 %v603, %v599
    %v692 = vpack.c.b16 %v608, %v604
    %v693 = vpack.c.b16 %v609, %v605
    %v694 = vpack.c.b16 %v610, %v606
    %v695 = vpack.c.b16 %v611, %v607
    %v696 = vpack.c.b16 %v616, %v612
    %v697 = vpack.c.b16 %v617, %v613
    %v698 = vpack.c.b16 %v618, %v614
    %v699 = vpack.c.b16 %v619, %v615
    %v700 = vpack.c.b16 %v624, %v620
    %v701 = vpack.c.b16 %v625, %v621
    %v702 = vpack.c.b16 %v626, %v622
    %v703 = vpack.c.b16 %v627, %v623
    %v704 = vpack.c.b16 %v632, %v628
    %v705 = vpack.c.b16 %v633, %v629
    %v706 = vpack.c.b16 %v634, %v630
    %v707 = vpack.c.b16 %v635, %v631
    %v708 = vpack.c.b16 %v640, %v636
    %v709 = vpack.c.b16 %v641, %v637
    %v710 = vpack.c.b16 %v642, %v638
    %v711 = vpack.c.b16 %v643, %v639
    %v712 = vpack.c.b16 %v648, %v644
    %v713 = vpack.c.b16 %v649, %v645
    %v714 = vpack.c.b16 %v650, %v646
    %v715 = vpack.c.b16 %v651, %v647
    %780 = vmatprep.subr.bf16.mxu0 %v653
    %781 = vmatpush1.bf16.msra.mxu0 %v652
    %782 = vmatprep.subr.bf16.mxu0 %v657
    %783 = vmatpush1.bf16.msra.mxu0 %v656
    %784 = vmatprep.subr.bf16.mxu0 %v661
    %785 = vmatpush1.bf16.msra.mxu0 %v660
    %786 = vmatprep.subr.bf16.mxu0 %v665
    %787 = vmatpush1.bf16.msra.mxu0 %v664
    %788 = vmatprep.subr.bf16.mxu0 %v669
    %789 = vmatpush1.bf16.msra.mxu0 %v668
    %790 = vmatprep.subr.bf16.mxu0 %v673
    %791 = vmatpush1.bf16.msra.mxu0 %v672
    %792 = vmatprep.subr.bf16.mxu0 %v677
    %793 = vmatpush1.bf16.msra.mxu0 %v676
    %794 = vmatprep.subr.bf16.mxu0 %v681
    %795 = vmatpush1.bf16.msra.mxu0 %v680
    %796 = vmatprep.subr.bf16.mxu0 %v685
    %797 = vmatpush1.bf16.msra.mxu0 %v684
    %798 = vmatprep.subr.bf16.mxu0 %v689
    %799 = vmatpush1.bf16.msra.mxu0 %v688
    %800 = vmatprep.subr.bf16.mxu0 %v693
    %801 = vmatpush1.bf16.msra.mxu0 %v692
    %802 = vmatprep.subr.bf16.mxu0 %v697
    %803 = vmatpush1.bf16.msra.mxu0 %v696
    %804 = vmatprep.subr.bf16.mxu0 %v701
    %805 = vmatpush1.bf16.msra.mxu0 %v700
    %806 = vmatprep.subr.bf16.mxu0 %v705
    %807 = vmatpush1.bf16.msra.mxu0 %v704
    %808 = vmatprep.subr.bf16.mxu0 %v709
    %809 = vmatpush1.bf16.msra.mxu0 %v708
    %810 = vmatprep.subr.bf16.mxu0 %v713
    %811 = vmatpush1.bf16.msra.mxu0 %v712
    %812 = vmatprep.mubr.bf16.mxu0 %v459
    %813 = vmatmul.mubr.bf16.gmra.mrb[0].mxu0 %v458
    %v814 = vpop.f32.mrb[0].mxu0
    %v815 = vadd.f32 %v167, %v814
    %v816 = vpop.f32.mrb[0].mxu0
    %v817 = vadd.f32 %v171, %v816
    %v818 = vpop.f32.mrb[0].mxu0
    %v819 = vpop.f32.mrb[0].mxu0
    %820 = vdwg.mxu0
    %821 = vmatprep.subr.bf16.mxu0 %v655
    %822 = vmatpush1.bf16.msra.mxu0 %v654
    %823 = vmatprep.subr.bf16.mxu0 %v659
    %824 = vmatpush1.bf16.msra.mxu0 %v658
    %825 = vmatprep.subr.bf16.mxu0 %v663
    %826 = vmatpush1.bf16.msra.mxu0 %v662
    %827 = vmatprep.subr.bf16.mxu0 %v667
    %828 = vmatpush1.bf16.msra.mxu0 %v666
    %829 = vmatprep.subr.bf16.mxu0 %v671
    %830 = vmatpush1.bf16.msra.mxu0 %v670
    %831 = vmatprep.subr.bf16.mxu0 %v675
    %832 = vmatpush1.bf16.msra.mxu0 %v674
    %833 = vmatprep.subr.bf16.mxu0 %v679
    %834 = vmatpush1.bf16.msra.mxu0 %v678
    %835 = vmatprep.subr.bf16.mxu0 %v683
    %836 = vmatpush1.bf16.msra.mxu0 %v682
    %837 = vmatprep.subr.bf16.mxu0 %v687
    %838 = vmatpush1.bf16.msra.mxu0 %v686
    %839 = vmatprep.subr.bf16.mxu0 %v691
    %840 = vmatpush1.bf16.msra.mxu0 %v690
    %841 = vmatprep.subr.bf16.mxu0 %v695
    %842 = vmatpush1.bf16.msra.mxu0 %v694
    %843 = vmatprep.subr.bf16.mxu0 %v699
    %844 = vmatpush1.bf16.msra.mxu0 %v698
    %845 = vmatprep.subr.bf16.mxu0 %v703
    %846 = vmatpush1.bf16.msra.mxu0 %v702
    %847 = vmatprep.subr.bf16.mxu0 %v707
    %848 = vmatpush1.bf16.msra.mxu0 %v706
    %849 = vmatprep.subr.bf16.mxu0 %v711
    %850 = vmatpush1.bf16.msra.mxu0 %v710
    %851 = vmatprep.subr.bf16.mxu0 %v715
    %852 = vmatpush1.bf16.msra.mxu0 %v714
    %853 = vmatprep.mubr.bf16.mxu0 %v459
    %854 = vmatmul.mubr.bf16.gmra.mrb[0].mxu0 %v458
    %v855 = vpop.f32.mrb[0].mxu0
    %v856 = vadd.f32 %v175, %v855
    %v857 = vpop.f32.mrb[0].mxu0
    %v858 = vadd.f32 %v179, %v857
    %v859 = vpop.f32.mrb[0].mxu0
    %v860 = vpop.f32.mrb[0].mxu0
    %861 = vdwg.mxu0
    %v862 = vxor.u32 %v815, 2147483648
    %v863 = vxor.u32 %v817, 2147483648
    %v864 = vxor.u32 %v856, 2147483648
    %v865 = vmul.f32 %v862, 1.442695
    %v866 = vpow.pop %v865
    %v867 = vmul.f32 %v863, 1.442695
    %v868 = vpow.pop %v867
    %v869 = vmul.f32 %v864, 1.442695
    %v870 = vpow.pop %v869
    %v871 = vadd.f32 %v866, 1.0
    %v872 = vadd.f32 %v868, 1.0
    %v873 = vadd.f32 %v870, 1.0
    %v874 = vrcp.pop %v871
    %v875 = vmul.f32 1.0, %v874
    %v876 = vrcp.pop %v872
    %v877 = vmul.f32 1.0, %v876
    %v878 = vrcp.pop %v873
    %v879 = vmul.f32 1.0, %v878
    %v880 = vtanh.pop %v858
    %v881 = vmul.f32 %v877, 0.0
    %v882 = vmul.f32 %v875, %v880
    %v883 = vadd.f32 %v881, %v882
    %v884 = vtanh.pop %v883
    %v885 = vmul.f32 %v879, %v884
    %v886 = vadd.f32 %v885, 0.0
    %v887 = vld [vmem:[#allocation2 + $0x20] sm:$0xff]
    %v888 = vld [vmem:[#allocation2 + $0x28] sm:$0xff]
    %v889 = vld [vmem:[#allocation2 + $0x30] sm:$0xff]
    %v890 = vld [vmem:[#allocation2 + $0x38] sm:$0xff]
    %891 = vmatprep.subr.bf16.mxu0 %v285
    %892 = vmatpush1.bf16.msra.mxu0 %v284
    %893 = vmatprep.subr.bf16.mxu0 %v289
    %894 = vmatpush1.bf16.msra.mxu0 %v288
    %895 = vmatprep.subr.bf16.mxu0 %v293
    %896 = vmatpush1.bf16.msra.mxu0 %v292
    %897 = vmatprep.subr.bf16.mxu0 %v297
    %898 = vmatpush1.bf16.msra.mxu0 %v296
    %899 = vmatprep.subr.bf16.mxu0 %v301
    %900 = vmatpush1.bf16.msra.mxu0 %v300
    %901 = vmatprep.subr.bf16.mxu0 %v305
    %902 = vmatpush1.bf16.msra.mxu0 %v304
    %903 = vmatprep.subr.bf16.mxu0 %v309
    %904 = vmatpush1.bf16.msra.mxu0 %v308
    %905 = vmatprep.subr.bf16.mxu0 %v313
    %906 = vmatpush1.bf16.msra.mxu0 %v312
    %907 = vmatprep.subr.bf16.mxu0 0
    %908 = vmatpush1.bf16.msra.mxu0 0
    %909 = vmatprep.subr.bf16.mxu0 0
    %910 = vmatpush1.bf16.msra.mxu0 0
    %911 = vmatprep.subr.bf16.mxu0 0
    %912 = vmatpush1.bf16.msra.mxu0 0
    %913 = vmatprep.subr.bf16.mxu0 0
    %914 = vmatpush1.bf16.msra.mxu0 0
    %915 = vmatprep.subr.bf16.mxu0 0
    %916 = vmatpush1.bf16.msra.mxu0 0
    %917 = vmatprep.subr.bf16.mxu0 0
    %918 = vmatpush1.bf16.msra.mxu0 0
    %919 = vmatprep.subr.bf16.mxu0 0
    %920 = vmatpush1.bf16.msra.mxu0 0
    %921 = vmatprep.subr.bf16.mxu0 0
    %922 = vmatpush1.bf16.msra.mxu0 0
    %923 = vmatprep.mubr.bf16.mxu0 0
    %924 = vmatmul.mubr.bf16.gmra.mrb[0].mxu0 %v458
    %v925 = vpop.f32.mrb[0].mxu0
    %v926 = vadd.f32 0.0, %v925
    %v927 = vpop.f32.mrb[0].mxu0
    %v928 = vadd.f32 0.0, %v927
    %v929 = vpop.f32.mrb[0].mxu0
    %v930 = vpop.f32.mrb[0].mxu0
    %931 = vdwg.mxu0
    %932 = vmatprep.subr.bf16.mxu0 %v287
    %933 = vmatpush1.bf16.msra.mxu0 %v286
    %934 = vmatprep.subr.bf16.mxu0 %v291
    %935 = vmatpush1.bf16.msra.mxu0 %v290
    %936 = vmatprep.subr.bf16.mxu0 %v295
    %937 = vmatpush1.bf16.msra.mxu0 %v294
    %938 = vmatprep.subr.bf16.mxu0 %v299
    %939 = vmatpush1.bf16.msra.mxu0 %v298
    %940 = vmatprep.subr.bf16.mxu0 %v303
    %941 = vmatpush1.bf16.msra.mxu0 %v302
    %942 = vmatprep.subr.bf16.mxu0 %v307
    %943 = vmatpush1.bf16.msra.mxu0 %v306
    %944 = vmatprep.subr.bf16.mxu0 %v311
    %945 = vmatpush1.bf16.msra.mxu0 %v310
    %946 = vmatprep.subr.bf16.mxu0 %v315
    %947 = vmatpush1.bf16.msra.mxu0 %v314
    %948 = vmatprep.subr.bf16.mxu0 0
    %949 = vmatpush1.bf16.msra.mxu0 0
    %950 = vmatprep.subr.bf16.mxu0 0
    %951 = vmatpush1.bf16.msra.mxu0 0
    %952 = vmatprep.subr.bf16.mxu0 0
    %953 = vmatpush1.bf16.msra.mxu0 0
    %954 = vmatprep.subr.bf16.mxu0 0
    %955 = vmatpush1.bf16.msra.mxu0 0
    %956 = vmatprep.subr.bf16.mxu0 0
    %957 = vmatpush1.bf16.msra.mxu0 0
    %958 = vmatprep.subr.bf16.mxu0 0
    %959 = vmatpush1.bf16.msra.mxu0 0
    %960 = vmatprep.subr.bf16.mxu0 0
    %961 = vmatpush1.bf16.msra.mxu0 0
    %962 = vmatprep.subr.bf16.mxu0 0
    %963 = vmatpush1.bf16.msra.mxu0 0
    %964 = vmatprep.mubr.bf16.mxu0 0
    %965 = vmatmul.mubr.bf16.gmra.mrb[0].mxu0 %v458
    %v966 = vpop.f32.mrb[0].mxu0
    %v967 = vadd.f32 0.0, %v966
    %v968 = vpop.f32.mrb[0].mxu0
    %v969 = vadd.f32 0.0, %v968
    %v970 = vpop.f32.mrb[0].mxu0
    %v971 = vpop.f32.mrb[0].mxu0
    %972 = vdwg.mxu0
    %v973 = vadd.f32 %v887, %v926
    %v974 = vadd.f32 %v888, %v928
    %v975 = vadd.f32 %v889, %v967
    %v976 = vadd.f32 %v890, %v969
    %v977 = vxor.u32 %v973, 2147483648
    %v978 = vxor.u32 %v974, 2147483648
    %v979 = vxor.u32 %v975, 2147483648
    %v980 = vmul.f32 %v977, 1.442695
    %v981 = vpow.pop %v980
    %v982 = vmul.f32 %v978, 1.442695
    %v983 = vpow.pop %v982
    %v984 = vmul.f32 %v979, 1.442695
    %v985 = vpow.pop %v984
    %v986 = vadd.f32 %v981, 1.0
    %v987 = vadd.f32 %v983, 1.0
    %v988 = vadd.f32 %v985, 1.0
    %v989 = vrcp.pop %v986
    %v990 = vmul.f32 1.0, %v989
    %v991 = vrcp.pop %v987
    %v992 = vmul.f32 1.0, %v991
    %v993 = vrcp.pop %v988
    %v994 = vmul.f32 1.0, %v993
    %v995 = vtanh.pop %v976
    %v996 = vmul.f32 %v992, %v455
    %v997 = vmul.f32 %v990, %v995
    %v998 = vadd.f32 %v996, %v997
    %v999 = vtanh.pop %v998
    %v1000 = vmul.f32 %v994, %v999
    %v1001 = vpack.c.bf16 %v1000, %v1000
    %v1002 = vpack.c.bf16 %v885, %v885
    %1003 = vmatprep.subr.bf16.mxu0 %v653
    %1004 = vmatpush1.bf16.msra.mxu0 %v652
    %1005 = vmatprep.subr.bf16.mxu0 %v657
    %1006 = vmatpush1.bf16.msra.mxu0 %v656
    %1007 = vmatprep.subr.bf16.mxu0 %v661
    %1008 = vmatpush1.bf16.msra.mxu0 %v660
    %1009 = vmatprep.subr.bf16.mxu0 %v665
    %1010 = vmatpush1.bf16.msra.mxu0 %v664
    %1011 = vmatprep.subr.bf16.mxu0 %v669
    %1012 = vmatpush1.bf16.msra.mxu0 %v668
    %1013 = vmatprep.subr.bf16.mxu0 %v673
    %1014 = vmatpush1.bf16.msra.mxu0 %v672
    %1015 = vmatprep.subr.bf16.mxu0 %v677
    %1016 = vmatpush1.bf16.msra.mxu0 %v676
    %1017 = vmatprep.subr.bf16.mxu0 %v681
    %1018 = vmatpush1.bf16.msra.mxu0 %v680
    %1019 = vmatprep.subr.bf16.mxu0 %v685
    %1020 = vmatpush1.bf16.msra.mxu0 %v684
    %1021 = vmatprep.subr.bf16.mxu0 %v689
    %1022 = vmatpush1.bf16.msra.mxu0 %v688
    %1023 = vmatprep.subr.bf16.mxu0 %v693
    %1024 = vmatpush1.bf16.msra.mxu0 %v692
    %1025 = vmatprep.subr.bf16.mxu0 %v697
    %1026 = vmatpush1.bf16.msra.mxu0 %v696
    %1027 = vmatprep.subr.bf16.mxu0 %v701
    %1028 = vmatpush1.bf16.msra.mxu0 %v700
    %1029 = vmatprep.subr.bf16.mxu0 %v705
    %1030 = vmatpush1.bf16.msra.mxu0 %v704
    %1031 = vmatprep.subr.bf16.mxu0 %v709
    %1032 = vmatpush1.bf16.msra.mxu0 %v708
    %1033 = vmatprep.subr.bf16.mxu0 %v713
    %1034 = vmatpush1.bf16.msra.mxu0 %v712
    %1035 = vmatprep.mubr.bf16.mxu0 %v1002
    %1036 = vmatmul.mubr.bf16.gmra.mrb[0].mxu0 %v1001
    %v1037 = vpop.f32.mrb[0].mxu0
    %v1038 = vadd.f32 %v167, %v1037
    %v1039 = vpop.f32.mrb[0].mxu0
    %v1040 = vadd.f32 %v171, %v1039
    %v1041 = vpop.f32.mrb[0].mxu0
    %v1042 = vpop.f32.mrb[0].mxu0
    %1043 = vdwg.mxu0
    %1044 = vmatprep.subr.bf16.mxu0 %v655
    %1045 = vmatpush1.bf16.msra.mxu0 %v654
    %1046 = vmatprep.subr.bf16.mxu0 %v659
    %1047 = vmatpush1.bf16.msra.mxu0 %v658
    %1048 = vmatprep.subr.bf16.mxu0 %v663
    %1049 = vmatpush1.bf16.msra.mxu0 %v662
    %1050 = vmatprep.subr.bf16.mxu0 %v667
    %1051 = vmatpush1.bf16.msra.mxu0 %v666
    %1052 = vmatprep.subr.bf16.mxu0 %v671
    %1053 = vmatpush1.bf16.msra.mxu0 %v670
    %1054 = vmatprep.subr.bf16.mxu0 %v675
    %1055 = vmatpush1.bf16.msra.mxu0 %v674
    %1056 = vmatprep.subr.bf16.mxu0 %v679
    %1057 = vmatpush1.bf16.msra.mxu0 %v678
    %1058 = vmatprep.subr.bf16.mxu0 %v683
    %1059 = vmatpush1.bf16.msra.mxu0 %v682
    %1060 = vmatprep.subr.bf16.mxu0 %v687
    %1061 = vmatpush1.bf16.msra.mxu0 %v686
    %1062 = vmatprep.subr.bf16.mxu0 %v691
    %1063 = vmatpush1.bf16.msra.mxu0 %v690
    %1064 = vmatprep.subr.bf16.mxu0 %v695
    %1065 = vmatpush1.bf16.msra.mxu0 %v694
    %1066 = vmatprep.subr.bf16.mxu0 %v699
    %1067 = vmatpush1.bf16.msra.mxu0 %v698
    %1068 = vmatprep.subr.bf16.mxu0 %v703
    %1069 = vmatpush1.bf16.msra.mxu0 %v702
    %1070 = vmatprep.subr.bf16.mxu0 %v707
    %1071 = vmatpush1.bf16.msra.mxu0 %v706
    %1072 = vmatprep.subr.bf16.mxu0 %v711
    %1073 = vmatpush1.bf16.msra.mxu0 %v710
    %1074 = vmatprep.subr.bf16.mxu0 %v715
    %1075 = vmatpush1.bf16.msra.mxu0 %v714
    %1076 = vmatprep.mubr.bf16.mxu0 %v1002
    %1077 = vmatmul.mubr.bf16.gmra.mrb[0].mxu0 %v1001
    %v1078 = vpop.f32.mrb[0].mxu0
    %v1079 = vadd.f32 %v175, %v1078
    %v1080 = vpop.f32.mrb[0].mxu0
    %v1081 = vadd.f32 %v179, %v1080
    %v1082 = vpop.f32.mrb[0].mxu0
    %v1083 = vpop.f32.mrb[0].mxu0
    %1084 = vdwg.mxu0
    %v1085 = vxor.u32 %v1038, 2147483648
    %v1086 = vxor.u32 %v1040, 2147483648
    %v1087 = vxor.u32 %v1079, 2147483648
    %v1088 = vmul.f32 %v1085, 1.442695
    %v1089 = vpow.pop %v1088
    %v1090 = vmul.f32 %v1086, 1.442695
    %v1091 = vpow.pop %v1090
    %v1092 = vmul.f32 %v1087, 1.442695
    %v1093 = vpow.pop %v1092
    %v1094 = vadd.f32 %v1089, 1.0
    %v1095 = vadd.f32 %v1091, 1.0
    %v1096 = vadd.f32 %v1093, 1.0
    %v1097 = vrcp.pop %v1094
    %v1098 = vmul.f32 1.0, %v1097
    %v1099 = vrcp.pop %v1095
    %v1100 = vmul.f32 1.0, %v1099
    %v1101 = vrcp.pop %v1096
    %v1102 = vmul.f32 1.0, %v1101
    %v1103 = vtanh.pop %v1081
    %v1104 = vmul.f32 %v1100, %v883
    %v1105 = vmul.f32 %v1098, %v1103
    %v1106 = vadd.f32 %v1104, %v1105
    %v1107 = vtanh.pop %v1106
    %v1108 = vmul.f32 %v1102, %v1107
    %v1109 = vadd.f32 %v886, %v1108
    %v1110 = vld [vmem:[#allocation2 + $0x40] sm:$0xff]
    %v1111 = vld [vmem:[#allocation2 + $0x48] sm:$0xff]
    %v1112 = vld [vmem:[#allocation2 + $0x50] sm:$0xff]
    %v1113 = vld [vmem:[#allocation2 + $0x58] sm:$0xff]
    %1114 = vmatprep.subr.bf16.mxu0 %v285
    %1115 = vmatpush1.bf16.msra.mxu0 %v284
    %1116 = vmatprep.subr.bf16.mxu0 %v289
    %1117 = vmatpush1.bf16.msra.mxu0 %v288
    %1118 = vmatprep.subr.bf16.mxu0 %v293
    %1119 = vmatpush1.bf16.msra.mxu0 %v292
    %1120 = vmatprep.subr.bf16.mxu0 %v297
    %1121 = vmatpush1.bf16.msra.mxu0 %v296
    %1122 = vmatprep.subr.bf16.mxu0 %v301
    %1123 = vmatpush1.bf16.msra.mxu0 %v300
    %1124 = vmatprep.subr.bf16.mxu0 %v305
    %1125 = vmatpush1.bf16.msra.mxu0 %v304
    %1126 = vmatprep.subr.bf16.mxu0 %v309
    %1127 = vmatpush1.bf16.msra.mxu0 %v308
    %1128 = vmatprep.subr.bf16.mxu0 %v313
    %1129 = vmatpush1.bf16.msra.mxu0 %v312
    %1130 = vmatprep.subr.bf16.mxu0 0
    %1131 = vmatpush1.bf16.msra.mxu0 0
    %1132 = vmatprep.subr.bf16.mxu0 0
    %1133 = vmatpush1.bf16.msra.mxu0 0
    %1134 = vmatprep.subr.bf16.mxu0 0
    %1135 = vmatpush1.bf16.msra.mxu0 0
    %1136 = vmatprep.subr.bf16.mxu0 0
    %1137 = vmatpush1.bf16.msra.mxu0 0
    %1138 = vmatprep.subr.bf16.mxu0 0
    %1139 = vmatpush1.bf16.msra.mxu0 0
    %1140 = vmatprep.subr.bf16.mxu0 0
    %1141 = vmatpush1.bf16.msra.mxu0 0
    %1142 = vmatprep.subr.bf16.mxu0 0
    %1143 = vmatpush1.bf16.msra.mxu0 0
    %1144 = vmatprep.subr.bf16.mxu0 0
    %1145 = vmatpush1.bf16.msra.mxu0 0
    %1146 = vmatprep.mubr.bf16.mxu0 0
    %1147 = vmatmul.mubr.bf16.gmra.mrb[0].mxu0 %v1001
    %v1148 = vpop.f32.mrb[0].mxu0
    %v1149 = vadd.f32 0.0, %v1148
    %v1150 = vpop.f32.mrb[0].mxu0
    %v1151 = vadd.f32 0.0, %v1150
    %v1152 = vpop.f32.mrb[0].mxu0
    %v1153 = vpop.f32.mrb[0].mxu0
    %1154 = vdwg.mxu0
    %1155 = vmatprep.subr.bf16.mxu0 %v287
    %1156 = vmatpush1.bf16.msra.mxu0 %v286
    %1157 = vmatprep.subr.bf16.mxu0 %v291
    %1158 = vmatpush1.bf16.msra.mxu0 %v290
    %1159 = vmatprep.subr.bf16.mxu0 %v295
    %1160 = vmatpush1.bf16.msra.mxu0 %v294
    %1161 = vmatprep.subr.bf16.mxu0 %v299
    %1162 = vmatpush1.bf16.msra.mxu0 %v298
    %1163 = vmatprep.subr.bf16.mxu0 %v303
    %1164 = vmatpush1.bf16.msra.mxu0 %v302
    %1165 = vmatprep.subr.bf16.mxu0 %v307
    %1166 = vmatpush1.bf16.msra.mxu0 %v306
    %1167 = vmatprep.subr.bf16.mxu0 %v311
    %1168 = vmatpush1.bf16.msra.mxu0 %v310
    %1169 = vmatprep.subr.bf16.mxu0 %v315
    %1170 = vmatpush1.bf16.msra.mxu0 %v314
    %1171 = vmatprep.subr.bf16.mxu0 0
    %1172 = vmatpush1.bf16.msra.mxu0 0
    %1173 = vmatprep.subr.bf16.mxu0 0
    %1174 = vmatpush1.bf16.msra.mxu0 0
    %1175 = vmatprep.subr.bf16.mxu0 0
    %1176 = vmatpush1.bf16.msra.mxu0 0
    %1177 = vmatprep.subr.bf16.mxu0 0
    %1178 = vmatpush1.bf16.msra.mxu0 0
    %1179 = vmatprep.subr.bf16.mxu0 0
    %1180 = vmatpush1.bf16.msra.mxu0 0
    %1181 = vmatprep.subr.bf16.mxu0 0
    %1182 = vmatpush1.bf16.msra.mxu0 0
    %1183 = vmatprep.subr.bf16.mxu0 0
    %1184 = vmatpush1.bf16.msra.mxu0 0
    %1185 = vmatprep.subr.bf16.mxu0 0
    %1186 = vmatpush1.bf16.msra.mxu0 0
    %1187 = vmatprep.mubr.bf16.mxu0 0
    %1188 = vmatmul.mubr.bf16.gmra.mrb[0].mxu0 %v1001
    %v1189 = vpop.f32.mrb[0].mxu0
    %v1190 = vadd.f32 0.0, %v1189
    %v1191 = vpop.f32.mrb[0].mxu0
    %v1192 = vadd.f32 0.0, %v1191
    %v1193 = vpop.f32.mrb[0].mxu0
    %v1194 = vpop.f32.mrb[0].mxu0
    %1195 = vdwg.mxu0
    %v1196 = vadd.f32 %v1110, %v1149
    %v1197 = vadd.f32 %v1111, %v1151
    %v1198 = vadd.f32 %v1112, %v1190
    %v1199 = vadd.f32 %v1113, %v1192
    %v1200 = vxor.u32 %v1196, 2147483648
    %v1201 = vxor.u32 %v1197, 2147483648
    %v1202 = vxor.u32 %v1198, 2147483648
    %v1203 = vmul.f32 %v1200, 1.442695
    %v1204 = vpow.pop %v1203
    %v1205 = vmul.f32 %v1201, 1.442695
    %v1206 = vpow.pop %v1205
    %v1207 = vmul.f32 %v1202, 1.442695
    %v1208 = vpow.pop %v1207
    %v1209 = vadd.f32 %v1204, 1.0
    %v1210 = vadd.f32 %v1206, 1.0
    %v1211 = vadd.f32 %v1208, 1.0
    %v1212 = vrcp.pop %v1209
    %v1213 = vmul.f32 1.0, %v1212
    %v1214 = vrcp.pop %v1210
    %v1215 = vmul.f32 1.0, %v1214
    %v1216 = vrcp.pop %v1211
    %v1217 = vmul.f32 1.0, %v1216
    %v1218 = vtanh.pop %v1199
    %v1219 = vmul.f32 %v1215, %v998
    %v1220 = vmul.f32 %v1213, %v1218
    %v1221 = vadd.f32 %v1219, %v1220
    %v1222 = vtanh.pop %v1221
    %v1223 = vmul.f32 %v1217, %v1222
    %v1224 = vpack.c.bf16 %v1223, %v1223
    %v1225 = vpack.c.bf16 %v1108, %v1108
    %1226 = vmatprep.subr.bf16.mxu0 %v653
    %1227 = vmatpush1.bf16.msra.mxu0 %v652
    %1228 = vmatprep.subr.bf16.mxu0 %v657
    %1229 = vmatpush1.bf16.msra.mxu0 %v656
    %1230 = vmatprep.subr.bf16.mxu0 %v661
    %1231 = vmatpush1.bf16.msra.mxu0 %v660
    %1232 = vmatprep.subr.bf16.mxu0 %v665
    %1233 = vmatpush1.bf16.msra.mxu0 %v664
    %1234 = vmatprep.subr.bf16.mxu0 %v669
    %1235 = vmatpush1.bf16.msra.mxu0 %v668
    %1236 = vmatprep.subr.bf16.mxu0 %v673
    %1237 = vmatpush1.bf16.msra.mxu0 %v672
    %1238 = vmatprep.subr.bf16.mxu0 %v677
    %1239 = vmatpush1.bf16.msra.mxu0 %v676
    %1240 = vmatprep.subr.bf16.mxu0 %v681
    %1241 = vmatpush1.bf16.msra.mxu0 %v680
    %1242 = vmatprep.subr.bf16.mxu0 %v685
    %1243 = vmatpush1.bf16.msra.mxu0 %v684
    %1244 = vmatprep.subr.bf16.mxu0 %v689
    %1245 = vmatpush1.bf16.msra.mxu0 %v688
    %1246 = vmatprep.subr.bf16.mxu0 %v693
    %1247 = vmatpush1.bf16.msra.mxu0 %v692
    %1248 = vmatprep.subr.bf16.mxu0 %v697
    %1249 = vmatpush1.bf16.msra.mxu0 %v696
    %1250 = vmatprep.subr.bf16.mxu0 %v701
    %1251 = vmatpush1.bf16.msra.mxu0 %v700
    %1252 = vmatprep.subr.bf16.mxu0 %v705
    %1253 = vmatpush1.bf16.msra.mxu0 %v704
    %1254 = vmatprep.subr.bf16.mxu0 %v709
    %1255 = vmatpush1.bf16.msra.mxu0 %v708
    %1256 = vmatprep.subr.bf16.mxu0 %v713
    %1257 = vmatpush1.bf16.msra.mxu0 %v712
    %1258 = vmatprep.mubr.bf16.mxu0 %v1225
    %1259 = vmatmul.mubr.bf16.gmra.mrb[0].mxu0 %v1224
    %v1260 = vpop.f32.mrb[0].mxu0
    %v1261 = vadd.f32 %v167, %v1260
    %v1262 = vpop.f32.mrb[0].mxu0
    %v1263 = vadd.f32 %v171, %v1262
    %v1264 = vpop.f32.mrb[0].mxu0
    %v1265 = vpop.f32.mrb[0].mxu0
    %1266 = vdwg.mxu0
    %1267 = vmatprep.subr.bf16.mxu0 %v655
    %1268 = vmatpush1.bf16.msra.mxu0 %v654
    %1269 = vmatprep.subr.bf16.mxu0 %v659
    %1270 = vmatpush1.bf16.msra.mxu0 %v658
    %1271 = vmatprep.subr.bf16.mxu0 %v663
    %1272 = vmatpush1.bf16.msra.mxu0 %v662
    %1273 = vmatprep.subr.bf16.mxu0 %v667
    %1274 = vmatpush1.bf16.msra.mxu0 %v666
    %1275 = vmatprep.subr.bf16.mxu0 %v671
    %1276 = vmatpush1.bf16.msra.mxu0 %v670
    %1277 = vmatprep.subr.bf16.mxu0 %v675
    %1278 = vmatpush1.bf16.msra.mxu0 %v674
    %1279 = vmatprep.subr.bf16.mxu0 %v679
    %1280 = vmatpush1.bf16.msra.mxu0 %v678
    %1281 = vmatprep.subr.bf16.mxu0 %v683
    %1282 = vmatpush1.bf16.msra.mxu0 %v682
    %1283 = vmatprep.subr.bf16.mxu0 %v687
    %1284 = vmatpush1.bf16.msra.mxu0 %v686
    %1285 = vmatprep.subr.bf16.mxu0 %v691
    %1286 = vmatpush1.bf16.msra.mxu0 %v690
    %1287 = vmatprep.subr.bf16.mxu0 %v695
    %1288 = vmatpush1.bf16.msra.mxu0 %v694
    %1289 = vmatprep.subr.bf16.mxu0 %v699
    %1290 = vmatpush1.bf16.msra.mxu0 %v698
    %1291 = vmatprep.subr.bf16.mxu0 %v703
    %1292 = vmatpush1.bf16.msra.mxu0 %v702
    %1293 = vmatprep.subr.bf16.mxu0 %v707
    %1294 = vmatpush1.bf16.msra.mxu0 %v706
    %1295 = vmatprep.subr.bf16.mxu0 %v711
    %1296 = vmatpush1.bf16.msra.mxu0 %v710
    %1297 = vmatprep.subr.bf16.mxu0 %v715
    %1298 = vmatpush1.bf16.msra.mxu0 %v714
    %1299 = vmatprep.mubr.bf16.mxu0 %v1225
    %1300 = vmatmul.mubr.bf16.gmra.mrb[0].mxu0 %v1224
    %v1301 = vpop.f32.mrb[0].mxu0
    %v1302 = vadd.f32 %v175, %v1301
    %v1303 = vpop.f32.mrb[0].mxu0
    %v1304 = vadd.f32 %v179, %v1303
    %v1305 = vpop.f32.mrb[0].mxu0
    %v1306 = vpop.f32.mrb[0].mxu0
    %1307 = vdwg.mxu0
    %v1308 = vxor.u32 %v1261, 2147483648
    %v1309 = vxor.u32 %v1263, 2147483648
    %v1310 = vxor.u32 %v1302, 2147483648
    %v1311 = vmul.f32 %v1308, 1.442695
    %v1312 = vpow.pop %v1311
    %v1313 = vmul.f32 %v1309, 1.442695
    %v1314 = vpow.pop %v1313
    %v1315 = vmul.f32 %v1310, 1.442695
    %v1316 = vpow.pop %v1315
    %v1317 = vadd.f32 %v1312, 1.0
    %v1318 = vadd.f32 %v1314, 1.0
    %v1319 = vadd.f32 %v1316, 1.0
    %v1320 = vrcp.pop %v1317
    %v1321 = vmul.f32 1.0, %v1320
    %v1322 = vrcp.pop %v1318
    %v1323 = vmul.f32 1.0, %v1322
    %v1324 = vrcp.pop %v1319
    %v1325 = vmul.f32 1.0, %v1324
    %v1326 = vtanh.pop %v1304
    %v1327 = vmul.f32 %v1323, %v1106
    %v1328 = vmul.f32 %v1321, %v1326
    %v1329 = vadd.f32 %v1327, %v1328
    %v1330 = vtanh.pop %v1329
    %v1331 = vmul.f32 %v1325, %v1330
    %v1332 = vadd.f32 %v1109, %v1331
    %v1333 = vld [vmem:[#allocation2 + $0x60] sm:$0xff]
    %v1334 = vld [vmem:[#allocation2 + $0x68] sm:$0xff]
    %v1335 = vld [vmem:[#allocation2 + $0x70] sm:$0xff]
    %v1336 = vld [vmem:[#allocation2 + $0x78] sm:$0xff]
    %1337 = vmatprep.subr.bf16.mxu0 %v285
    %1338 = vmatpush1.bf16.msra.mxu0 %v284
    %1339 = vmatprep.subr.bf16.mxu0 %v289
    %1340 = vmatpush1.bf16.msra.mxu0 %v288
    %1341 = vmatprep.subr.bf16.mxu0 %v293
    %1342 = vmatpush1.bf16.msra.mxu0 %v292
    %1343 = vmatprep.subr.bf16.mxu0 %v297
    %1344 = vmatpush1.bf16.msra.mxu0 %v296
    %1345 = vmatprep.subr.bf16.mxu0 %v301
    %1346 = vmatpush1.bf16.msra.mxu0 %v300
    %1347 = vmatprep.subr.bf16.mxu0 %v305
    %1348 = vmatpush1.bf16.msra.mxu0 %v304
    %1349 = vmatprep.subr.bf16.mxu0 %v309
    %1350 = vmatpush1.bf16.msra.mxu0 %v308
    %1351 = vmatprep.subr.bf16.mxu0 %v313
    %1352 = vmatpush1.bf16.msra.mxu0 %v312
    %1353 = vmatprep.subr.bf16.mxu0 0
    %1354 = vmatpush1.bf16.msra.mxu0 0
    %1355 = vmatprep.subr.bf16.mxu0 0
    %1356 = vmatpush1.bf16.msra.mxu0 0
    %1357 = vmatprep.subr.bf16.mxu0 0
    %1358 = vmatpush1.bf16.msra.mxu0 0
    %1359 = vmatprep.subr.bf16.mxu0 0
    %1360 = vmatpush1.bf16.msra.mxu0 0
    %1361 = vmatprep.subr.bf16.mxu0 0
    %1362 = vmatpush1.bf16.msra.mxu0 0
    %1363 = vmatprep.subr.bf16.mxu0 0
    %1364 = vmatpush1.bf16.msra.mxu0 0
    %1365 = vmatprep.subr.bf16.mxu0 0
    %1366 = vmatpush1.bf16.msra.mxu0 0
    %1367 = vmatprep.subr.bf16.mxu0 0
    %1368 = vmatpush1.bf16.msra.mxu0 0
    %1369 = vmatprep.mubr.bf16.mxu0 0
    %1370 = vmatmul.mubr.bf16.gmra.mrb[0].mxu0 %v1224
    %v1371 = vpop.f32.mrb[0].mxu0
    %v1372 = vadd.f32 0.0, %v1371
    %v1373 = vpop.f32.mrb[0].mxu0
    %v1374 = vadd.f32 0.0, %v1373
    %v1375 = vpop.f32.mrb[0].mxu0
    %v1376 = vpop.f32.mrb[0].mxu0
    %1377 = vdwg.mxu0
    %1378 = vmatprep.subr.bf16.mxu0 %v287
    %1379 = vmatpush1.bf16.msra.mxu0 %v286
    %1380 = vmatprep.subr.bf16.mxu0 %v291
    %1381 = vmatpush1.bf16.msra.mxu0 %v290
    %1382 = vmatprep.subr.bf16.mxu0 %v295
    %1383 = vmatpush1.bf16.msra.mxu0 %v294
    %1384 = vmatprep.subr.bf16.mxu0 %v299
    %1385 = vmatpush1.bf16.msra.mxu0 %v298
    %1386 = vmatprep.subr.bf16.mxu0 %v303
    %1387 = vmatpush1.bf16.msra.mxu0 %v302
    %1388 = vmatprep.subr.bf16.mxu0 %v307
    %1389 = vmatpush1.bf16.msra.mxu0 %v306
    %1390 = vmatprep.subr.bf16.mxu0 %v311
    %1391 = vmatpush1.bf16.msra.mxu0 %v310
    %1392 = vmatprep.subr.bf16.mxu0 %v315
    %1393 = vmatpush1.bf16.msra.mxu0 %v314
    %1394 = vmatprep.subr.bf16.mxu0 0
    %1395 = vmatpush1.bf16.msra.mxu0 0
    %1396 = vmatprep.subr.bf16.mxu0 0
    %1397 = vmatpush1.bf16.msra.mxu0 0
    %1398 = vmatprep.subr.bf16.mxu0 0
    %1399 = vmatpush1.bf16.msra.mxu0 0
    %1400 = vmatprep.subr.bf16.mxu0 0
    %1401 = vmatpush1.bf16.msra.mxu0 0
    %1402 = vmatprep.subr.bf16.mxu0 0
    %1403 = vmatpush1.bf16.msra.mxu0 0
    %1404 = vmatprep.subr.bf16.mxu0 0
    %1405 = vmatpush1.bf16.msra.mxu0 0
    %1406 = vmatprep.subr.bf16.mxu0 0
    %1407 = vmatpush1.bf16.msra.mxu0 0
    %1408 = vmatprep.subr.bf16.mxu0 0
    %1409 = vmatpush1.bf16.msra.mxu0 0
    %1410 = vmatprep.mubr.bf16.mxu0 0
    %1411 = vmatmul.mubr.bf16.gmra.mrb[0].mxu0 %v1224
    %v1412 = vpop.f32.mrb[0].mxu0
    %v1413 = vadd.f32 0.0, %v1412
    %v1414 = vpop.f32.mrb[0].mxu0
    %v1415 = vadd.f32 0.0, %v1414
    %v1416 = vpop.f32.mrb[0].mxu0
    %v1417 = vpop.f32.mrb[0].mxu0
    %1418 = vdwg.mxu0
    %v1419 = vadd.f32 %v1333, %v1372
    %v1420 = vadd.f32 %v1334, %v1374
    %v1421 = vadd.f32 %v1335, %v1413
    %v1422 = vadd.f32 %v1336, %v1415
    %v1423 = vxor.u32 %v1419, 2147483648
    %v1424 = vxor.u32 %v1420, 2147483648
    %v1425 = vxor.u32 %v1421, 2147483648
    %v1426 = vmul.f32 %v1423, 1.442695
    %v1427 = vpow.pop %v1426
    %v1428 = vmul.f32 %v1424, 1.442695
    %v1429 = vpow.pop %v1428
    %v1430 = vmul.f32 %v1425, 1.442695
    %v1431 = vpow.pop %v1430
    %v1432 = vadd.f32 %v1427, 1.0
    %v1433 = vadd.f32 %v1429, 1.0
    %v1434 = vadd.f32 %v1431, 1.0
    %v1435 = vrcp.pop %v1432
    %v1436 = vmul.f32 1.0, %v1435
    %v1437 = vrcp.pop %v1433
    %v1438 = vmul.f32 1.0, %v1437
    %v1439 = vrcp.pop %v1434
    %v1440 = vmul.f32 1.0, %v1439
    %v1441 = vtanh.pop %v1422
    %v1442 = vmul.f32 %v1438, %v1221
    %v1443 = vmul.f32 %v1436, %v1441
    %v1444 = vadd.f32 %v1442, %v1443
    %v1445 = vtanh.pop %v1444
    %v1446 = vmul.f32 %v1440, %v1445
    %v1447 = vpack.c.bf16 %v1446, %v1446
    %v1448 = vpack.c.bf16 %v1331, %v1331
    %1449 = vmatprep.subr.bf16.mxu0 %v653
    %1450 = vmatpush1.bf16.msra.mxu0 %v652
    %1451 = vmatprep.subr.bf16.mxu0 %v657
    %1452 = vmatpush1.bf16.msra.mxu0 %v656
    %1453 = vmatprep.subr.bf16.mxu0 %v661
    %1454 = vmatpush1.bf16.msra.mxu0 %v660
    %1455 = vmatprep.subr.bf16.mxu0 %v665
    %1456 = vmatpush1.bf16.msra.mxu0 %v664
    %1457 = vmatprep.subr.bf16.mxu0 %v669
    %1458 = vmatpush1.bf16.msra.mxu0 %v668
    %1459 = vmatprep.subr.bf16.mxu0 %v673
    %1460 = vmatpush1.bf16.msra.mxu0 %v672
    %1461 = vmatprep.subr.bf16.mxu0 %v677
    %1462 = vmatpush1.bf16.msra.mxu0 %v676
    %1463 = vmatprep.subr.bf16.mxu0 %v681
    %1464 = vmatpush1.bf16.msra.mxu0 %v680
    %1465 = vmatprep.subr.bf16.mxu0 %v685
    %1466 = vmatpush1.bf16.msra.mxu0 %v684
    %1467 = vmatprep.subr.bf16.mxu0 %v689
    %1468 = vmatpush1.bf16.msra.mxu0 %v688
    %1469 = vmatprep.subr.bf16.mxu0 %v693
    %1470 = vmatpush1.bf16.msra.mxu0 %v692
    %1471 = vmatprep.subr.bf16.mxu0 %v697
    %1472 = vmatpush1.bf16.msra.mxu0 %v696
    %1473 = vmatprep.subr.bf16.mxu0 %v701
    %1474 = vmatpush1.bf16.msra.mxu0 %v700
    %1475 = vmatprep.subr.bf16.mxu0 %v705
    %1476 = vmatpush1.bf16.msra.mxu0 %v704
    %1477 = vmatprep.subr.bf16.mxu0 %v709
    %1478 = vmatpush1.bf16.msra.mxu0 %v708
    %1479 = vmatprep.subr.bf16.mxu0 %v713
    %1480 = vmatpush1.bf16.msra.mxu0 %v712
    %1481 = vmatprep.mubr.bf16.mxu0 %v1448
    %1482 = vmatmul.mubr.bf16.gmra.mrb[0].mxu0 %v1447
    %v1483 = vpop.f32.mrb[0].mxu0
    %v1484 = vadd.f32 %v167, %v1483
    %v1485 = vpop.f32.mrb[0].mxu0
    %v1486 = vadd.f32 %v171, %v1485
    %v1487 = vpop.f32.mrb[0].mxu0
    %v1488 = vpop.f32.mrb[0].mxu0
    %1489 = vdwg.mxu0
    %1490 = vmatprep.subr.bf16.mxu0 %v655
    %1491 = vmatpush1.bf16.msra.mxu0 %v654
    %1492 = vmatprep.subr.bf16.mxu0 %v659
    %1493 = vmatpush1.bf16.msra.mxu0 %v658
    %1494 = vmatprep.subr.bf16.mxu0 %v663
    %1495 = vmatpush1.bf16.msra.mxu0 %v662
    %1496 = vmatprep.subr.bf16.mxu0 %v667
    %1497 = vmatpush1.bf16.msra.mxu0 %v666
    %1498 = vmatprep.subr.bf16.mxu0 %v671
    %1499 = vmatpush1.bf16.msra.mxu0 %v670
    %1500 = vmatprep.subr.bf16.mxu0 %v675
    %1501 = vmatpush1.bf16.msra.mxu0 %v674
    %1502 = vmatprep.subr.bf16.mxu0 %v679
    %1503 = vmatpush1.bf16.msra.mxu0 %v678
    %1504 = vmatprep.subr.bf16.mxu0 %v683
    %1505 = vmatpush1.bf16.msra.mxu0 %v682
    %1506 = vmatprep.subr.bf16.mxu0 %v687
    %1507 = vmatpush1.bf16.msra.mxu0 %v686
    %1508 = vmatprep.subr.bf16.mxu0 %v691
    %1509 = vmatpush1.bf16.msra.mxu0 %v690
    %1510 = vmatprep.subr.bf16.mxu0 %v695
    %1511 = vmatpush1.bf16.msra.mxu0 %v694
    %1512 = vmatprep.subr.bf16.mxu0 %v699
    %1513 = vmatpush1.bf16.msra.mxu0 %v698
    %1514 = vmatprep.subr.bf16.mxu0 %v703
    %1515 = vmatpush1.bf16.msra.mxu0 %v702
    %1516 = vmatprep.subr.bf16.mxu0 %v707
    %1517 = vmatpush1.bf16.msra.mxu0 %v706
    %1518 = vmatprep.subr.bf16.mxu0 %v711
    %1519 = vmatpush1.bf16.msra.mxu0 %v710
    %1520 = vmatprep.subr.bf16.mxu0 %v715
    %1521 = vmatpush1.bf16.msra.mxu0 %v714
    %1522 = vmatprep.mubr.bf16.mxu0 %v1448
    %1523 = vmatmul.mubr.bf16.gmra.mrb[0].mxu0 %v1447
    %v1524 = vpop.f32.mrb[0].mxu0
    %v1525 = vadd.f32 %v175, %v1524
    %v1526 = vpop.f32.mrb[0].mxu0
    %v1527 = vadd.f32 %v179, %v1526
    %v1528 = vpop.f32.mrb[0].mxu0
    %v1529 = vpop.f32.mrb[0].mxu0
    %1530 = vdwg.mxu0
    %v1531 = vxor.u32 %v1484, 2147483648
    %v1532 = vxor.u32 %v1486, 2147483648
    %v1533 = vxor.u32 %v1525, 2147483648
    %v1534 = vmul.f32 %v1531, 1.442695
    %v1535 = vpow.pop %v1534
    %v1536 = vmul.f32 %v1532, 1.442695
    %v1537 = vpow.pop %v1536
    %v1538 = vmul.f32 %v1533, 1.442695
    %v1539 = vpow.pop %v1538
    %v1540 = vadd.f32 %v1535, 1.0
    %v1541 = vadd.f32 %v1537, 1.0
    %v1542 = vadd.f32 %v1539, 1.0
    %v1543 = vrcp.pop %v1540
    %v1544 = vmul.f32 1.0, %v1543
    %v1545 = vrcp.pop %v1541
    %v1546 = vmul.f32 1.0, %v1545
    %v1547 = vrcp.pop %v1542
    %v1548 = vmul.f32 1.0, %v1547
    %v1549 = vtanh.pop %v1527
    %v1550 = vmul.f32 %v1546, %v1329
    %v1551 = vmul.f32 %v1544, %v1549
    %v1552 = vadd.f32 %v1550, %v1551
    %v1553 = vtanh.pop %v1552
    %v1554 = vmul.f32 %v1548, %v1553
    %v1555 = vadd.f32 %v1332, %v1554
    %v1556 = vld [vmem:[#allocation2 + $0x80] sm:$0xff]
    %v1557 = vld [vmem:[#allocation2 + $0x88] sm:$0xff]
    %v1558 = vld [vmem:[#allocation2 + $0x90] sm:$0xff]
    %v1559 = vld [vmem:[#allocation2 + $0x98] sm:$0xff]
    %1560 = vmatprep.subr.bf16.mxu0 %v285
    %1561 = vmatpush1.bf16.msra.mxu0 %v284
    %1562 = vmatprep.subr.bf16.mxu0 %v289
    %1563 = vmatpush1.bf16.msra.mxu0 %v288
    %1564 = vmatprep.subr.bf16.mxu0 %v293
    %1565 = vmatpush1.bf16.msra.mxu0 %v292
    %1566 = vmatprep.subr.bf16.mxu0 %v297
    %1567 = vmatpush1.bf16.msra.mxu0 %v296
    %1568 = vmatprep.subr.bf16.mxu0 %v301
    %1569 = vmatpush1.bf16.msra.mxu0 %v300
    %1570 = vmatprep.subr.bf16.mxu0 %v305
    %1571 = vmatpush1.bf16.msra.mxu0 %v304
    %1572 = vmatprep.subr.bf16.mxu0 %v309
    %1573 = vmatpush1.bf16.msra.mxu0 %v308
    %1574 = vmatprep.subr.bf16.mxu0 %v313
    %1575 = vmatpush1.bf16.msra.mxu0 %v312
    %1576 = vmatprep.subr.bf16.mxu0 0
    %1577 = vmatpush1.bf16.msra.mxu0 0
    %1578 = vmatprep.subr.bf16.mxu0 0
    %1579 = vmatpush1.bf16.msra.mxu0 0
    %1580 = vmatprep.subr.bf16.mxu0 0
    %1581 = vmatpush1.bf16.msra.mxu0 0
    %1582 = vmatprep.subr.bf16.mxu0 0
    %1583 = vmatpush1.bf16.msra.mxu0 0
    %1584 = vmatprep.subr.bf16.mxu0 0
    %1585 = vmatpush1.bf16.msra.mxu0 0
    %1586 = vmatprep.subr.bf16.mxu0 0
    %1587 = vmatpush1.bf16.msra.mxu0 0
    %1588 = vmatprep.subr.bf16.mxu0 0
    %1589 = vmatpush1.bf16.msra.mxu0 0
    %1590 = vmatprep.subr.bf16.mxu0 0
    %1591 = vmatpush1.bf16.msra.mxu0 0
    %1592 = vmatprep.mubr.bf16.mxu0 0
    %1593 = vmatmul.mubr.bf16.gmra.mrb[0].mxu0 %v1447
    %v1594 = vpop.f32.mrb[0].mxu0
    %v1595 = vadd.f32 0.0, %v1594
    %v1596 = vpop.f32.mrb[0].mxu0
    %v1597 = vadd.f32 0.0, %v1596
    %v1598 = vpop.f32.mrb[0].mxu0
    %v1599 = vpop.f32.mrb[0].mxu0
    %1600 = vdwg.mxu0
    %1601 = vmatprep.subr.bf16.mxu0 %v287
    %1602 = vmatpush1.bf16.msra.mxu0 %v286
    %1603 = vmatprep.subr.bf16.mxu0 %v291
    %1604 = vmatpush1.bf16.msra.mxu0 %v290
    %1605 = vmatprep.subr.bf16.mxu0 %v295
    %1606 = vmatpush1.bf16.msra.mxu0 %v294
    %1607 = vmatprep.subr.bf16.mxu0 %v299
    %1608 = vmatpush1.bf16.msra.mxu0 %v298
    %1609 = vmatprep.subr.bf16.mxu0 %v303
    %1610 = vmatpush1.bf16.msra.mxu0 %v302
    %1611 = vmatprep.subr.bf16.mxu0 %v307
    %1612 = vmatpush1.bf16.msra.mxu0 %v306
    %1613 = vmatprep.subr.bf16.mxu0 %v311
    %1614 = vmatpush1.bf16.msra.mxu0 %v310
    %1615 = vmatprep.subr.bf16.mxu0 %v315
    %1616 = vmatpush1.bf16.msra.mxu0 %v314
    %1617 = vmatprep.subr.bf16.mxu0 0
    %1618 = vmatpush1.bf16.msra.mxu0 0
    %1619 = vmatprep.subr.bf16.mxu0 0
    %1620 = vmatpush1.bf16.msra.mxu0 0
    %1621 = vmatprep.subr.bf16.mxu0 0
    %1622 = vmatpush1.bf16.msra.mxu0 0
    %1623 = vmatprep.subr.bf16.mxu0 0
    %1624 = vmatpush1.bf16.msra.mxu0 0
    %1625 = vmatprep.subr.bf16.mxu0 0
    %1626 = vmatpush1.bf16.msra.mxu0 0
    %1627 = vmatprep.subr.bf16.mxu0 0
    %1628 = vmatpush1.bf16.msra.mxu0 0
    %1629 = vmatprep.subr.bf16.mxu0 0
    %1630 = vmatpush1.bf16.msra.mxu0 0
    %1631 = vmatprep.subr.bf16.mxu0 0
    %1632 = vmatpush1.bf16.msra.mxu0 0
    %1633 = vmatprep.mubr.bf16.mxu0 0
    %1634 = vmatmul.mubr.bf16.gmra.mrb[0].mxu0 %v1447
    %v1635 = vpop.f32.mrb[0].mxu0
    %v1636 = vadd.f32 0.0, %v1635
    %v1637 = vpop.f32.mrb[0].mxu0
    %v1638 = vadd.f32 0.0, %v1637
    %v1639 = vpop.f32.mrb[0].mxu0
    %v1640 = vpop.f32.mrb[0].mxu0
    %1641 = vdwg.mxu0
    %v1642 = vadd.f32 %v1556, %v1595
    %v1643 = vadd.f32 %v1557, %v1597
    %v1644 = vadd.f32 %v1558, %v1636
    %v1645 = vadd.f32 %v1559, %v1638
    %v1646 = vxor.u32 %v1642, 2147483648
    %v1647 = vxor.u32 %v1643, 2147483648
    %v1648 = vxor.u32 %v1644, 2147483648
    %v1649 = vmul.f32 %v1646, 1.442695
    %v1650 = vpow.pop %v1649
    %v1651 = vmul.f32 %v1647, 1.442695
    %v1652 = vpow.pop %v1651
    %v1653 = vmul.f32 %v1648, 1.442695
    %v1654 = vpow.pop %v1653
    %v1655 = vadd.f32 %v1650, 1.0
    %v1656 = vadd.f32 %v1652, 1.0
    %v1657 = vadd.f32 %v1654, 1.0
    %v1658 = vrcp.pop %v1655
    %v1659 = vmul.f32 1.0, %v1658
    %v1660 = vrcp.pop %v1656
    %v1661 = vmul.f32 1.0, %v1660
    %v1662 = vrcp.pop %v1657
    %v1663 = vmul.f32 1.0, %v1662
    %v1664 = vtanh.pop %v1645
    %v1665 = vmul.f32 %v1661, %v1444
    %v1666 = vmul.f32 %v1659, %v1664
    %v1667 = vadd.f32 %v1665, %v1666
    %v1668 = vtanh.pop %v1667
    %v1669 = vmul.f32 %v1663, %v1668
    %v1670 = vpack.c.bf16 %v1669, %v1669
    %v1671 = vpack.c.bf16 %v1554, %v1554
    %1672 = vmatprep.subr.bf16.mxu0 %v653
    %1673 = vmatpush1.bf16.msra.mxu0 %v652
    %1674 = vmatprep.subr.bf16.mxu0 %v657
    %1675 = vmatpush1.bf16.msra.mxu0 %v656
    %1676 = vmatprep.subr.bf16.mxu0 %v661
    %1677 = vmatpush1.bf16.msra.mxu0 %v660
    %1678 = vmatprep.subr.bf16.mxu0 %v665
    %1679 = vmatpush1.bf16.msra.mxu0 %v664
    %1680 = vmatprep.subr.bf16.mxu0 %v669
    %1681 = vmatpush1.bf16.msra.mxu0 %v668
    %1682 = vmatprep.subr.bf16.mxu0 %v673
    %1683 = vmatpush1.bf16.msra.mxu0 %v672
    %1684 = vmatprep.subr.bf16.mxu0 %v677
    %1685 = vmatpush1.bf16.msra.mxu0 %v676
    %1686 = vmatprep.subr.bf16.mxu0 %v681
    %1687 = vmatpush1.bf16.msra.mxu0 %v680
    %1688 = vmatprep.subr.bf16.mxu0 %v685
    %1689 = vmatpush1.bf16.msra.mxu0 %v684
    %1690 = vmatprep.subr.bf16.mxu0 %v689
    %1691 = vmatpush1.bf16.msra.mxu0 %v688
    %1692 = vmatprep.subr.bf16.mxu0 %v693
    %1693 = vmatpush1.bf16.msra.mxu0 %v692
    %1694 = vmatprep.subr.bf16.mxu0 %v697
    %1695 = vmatpush1.bf16.msra.mxu0 %v696
    %1696 = vmatprep.subr.bf16.mxu0 %v701
    %1697 = vmatpush1.bf16.msra.mxu0 %v700
    %1698 = vmatprep.subr.bf16.mxu0 %v705
    %1699 = vmatpush1.bf16.msra.mxu0 %v704
    %1700 = vmatprep.subr.bf16.mxu0 %v709
    %1701 = vmatpush1.bf16.msra.mxu0 %v708
    %1702 = vmatprep.subr.bf16.mxu0 %v713
    %1703 = vmatpush1.bf16.msra.mxu0 %v712
    %1704 = vmatprep.mubr.bf16.mxu0 %v1671
    %1705 = vmatmul.mubr.bf16.gmra.mrb[0].mxu0 %v1670
    %v1706 = vpop.f32.mrb[0].mxu0
    %v1707 = vadd.f32 %v167, %v1706
    %v1708 = vpop.f32.mrb[0].mxu0
    %v1709 = vadd.f32 %v171, %v1708
    %v1710 = vpop.f32.mrb[0].mxu0
    %v1711 = vpop.f32.mrb[0].mxu0
    %1712 = vdwg.mxu0
    %1713 = vmatprep.subr.bf16.mxu0 %v655
    %1714 = vmatpush1.bf16.msra.mxu0 %v654
    %1715 = vmatprep.subr.bf16.mxu0 %v659
    %1716 = vmatpush1.bf16.msra.mxu0 %v658
    %1717 = vmatprep.subr.bf16.mxu0 %v663
    %1718 = vmatpush1.bf16.msra.mxu0 %v662
    %1719 = vmatprep.subr.bf16.mxu0 %v667
    %1720 = vmatpush1.bf16.msra.mxu0 %v666
    %1721 = vmatprep.subr.bf16.mxu0 %v671
    %1722 = vmatpush1.bf16.msra.mxu0 %v670
    %1723 = vmatprep.subr.bf16.mxu0 %v675
    %1724 = vmatpush1.bf16.msra.mxu0 %v674
    %1725 = vmatprep.subr.bf16.mxu0 %v679
    %1726 = vmatpush1.bf16.msra.mxu0 %v678
    %1727 = vmatprep.subr.bf16.mxu0 %v683
    %1728 = vmatpush1.bf16.msra.mxu0 %v682
    %1729 = vmatprep.subr.bf16.mxu0 %v687
    %1730 = vmatpush1.bf16.msra.mxu0 %v686
    %1731 = vmatprep.subr.bf16.mxu0 %v691
    %1732 = vmatpush1.bf16.msra.mxu0 %v690
    %1733 = vmatprep.subr.bf16.mxu0 %v695
    %1734 = vmatpush1.bf16.msra.mxu0 %v694
    %1735 = vmatprep.subr.bf16.mxu0 %v699
    %1736 = vmatpush1.bf16.msra.mxu0 %v698
    %1737 = vmatprep.subr.bf16.mxu0 %v703
    %1738 = vmatpush1.bf16.msra.mxu0 %v702
    %1739 = vmatprep.subr.bf16.mxu0 %v707
    %1740 = vmatpush1.bf16.msra.mxu0 %v706
    %1741 = vmatprep.subr.bf16.mxu0 %v711
    %1742 = vmatpush1.bf16.msra.mxu0 %v710
    %1743 = vmatprep.subr.bf16.mxu0 %v715
    %1744 = vmatpush1.bf16.msra.mxu0 %v714
    %1745 = vmatprep.mubr.bf16.mxu0 %v1671
    %1746 = vmatmul.mubr.bf16.gmra.mrb[0].mxu0 %v1670
    %v1747 = vpop.f32.mrb[0].mxu0
    %v1748 = vadd.f32 %v175, %v1747
    %v1749 = vpop.f32.mrb[0].mxu0
    %v1750 = vadd.f32 %v179, %v1749
    %v1751 = vpop.f32.mrb[0].mxu0
    %v1752 = vpop.f32.mrb[0].mxu0
    %1753 = vdwg.mxu0
    %v1754 = vxor.u32 %v1707, 2147483648
    %v1755 = vxor.u32 %v1709, 2147483648
    %v1756 = vxor.u32 %v1748, 2147483648
    %v1757 = vmul.f32 %v1754, 1.442695
    %v1758 = vpow.pop %v1757
    %v1759 = vmul.f32 %v1755, 1.442695
    %v1760 = vpow.pop %v1759
    %v1761 = vmul.f32 %v1756, 1.442695
    %v1762 = vpow.pop %v1761
    %v1763 = vadd.f32 %v1758, 1.0
    %v1764 = vadd.f32 %v1760, 1.0
    %v1765 = vadd.f32 %v1762, 1.0
    %v1766 = vrcp.pop %v1763
    %v1767 = vmul.f32 1.0, %v1766
    %v1768 = vrcp.pop %v1764
    %v1769 = vmul.f32 1.0, %v1768
    %v1770 = vrcp.pop %v1765
    %v1771 = vmul.f32 1.0, %v1770
    %v1772 = vtanh.pop %v1750
    %v1773 = vmul.f32 %v1769, %v1552
    %v1774 = vmul.f32 %v1767, %v1772
    %v1775 = vadd.f32 %v1773, %v1774
    %v1776 = vtanh.pop %v1775
    %v1777 = vmul.f32 %v1771, %v1776
    %v1778 = vadd.f32 %v1555, %v1777
    %v1779 = vld [vmem:[#allocation2 + $0xa0] sm:$0xff]
    %v1780 = vld [vmem:[#allocation2 + $0xa8] sm:$0xff]
    %v1781 = vld [vmem:[#allocation2 + $0xb0] sm:$0xff]
    %v1782 = vld [vmem:[#allocation2 + $0xb8] sm:$0xff]
    %1783 = vmatprep.subr.bf16.mxu0 %v285
    %1784 = vmatpush1.bf16.msra.mxu0 %v284
    %1785 = vmatprep.subr.bf16.mxu0 %v289
    %1786 = vmatpush1.bf16.msra.mxu0 %v288
    %1787 = vmatprep.subr.bf16.mxu0 %v293
    %1788 = vmatpush1.bf16.msra.mxu0 %v292
    %1789 = vmatprep.subr.bf16.mxu0 %v297
    %1790 = vmatpush1.bf16.msra.mxu0 %v296
    %1791 = vmatprep.subr.bf16.mxu0 %v301
    %1792 = vmatpush1.bf16.msra.mxu0 %v300
    %1793 = vmatprep.subr.bf16.mxu0 %v305
    %1794 = vmatpush1.bf16.msra.mxu0 %v304
    %1795 = vmatprep.subr.bf16.mxu0 %v309
    %1796 = vmatpush1.bf16.msra.mxu0 %v308
    %1797 = vmatprep.subr.bf16.mxu0 %v313
    %1798 = vmatpush1.bf16.msra.mxu0 %v312
    %1799 = vmatprep.subr.bf16.mxu0 0
    %1800 = vmatpush1.bf16.msra.mxu0 0
    %1801 = vmatprep.subr.bf16.mxu0 0
    %1802 = vmatpush1.bf16.msra.mxu0 0
    %1803 = vmatprep.subr.bf16.mxu0 0
    %1804 = vmatpush1.bf16.msra.mxu0 0
    %1805 = vmatprep.subr.bf16.mxu0 0
    %1806 = vmatpush1.bf16.msra.mxu0 0
    %1807 = vmatprep.subr.bf16.mxu0 0
    %1808 = vmatpush1.bf16.msra.mxu0 0
    %1809 = vmatprep.subr.bf16.mxu0 0
    %1810 = vmatpush1.bf16.msra.mxu0 0
    %1811 = vmatprep.subr.bf16.mxu0 0
    %1812 = vmatpush1.bf16.msra.mxu0 0
    %1813 = vmatprep.subr.bf16.mxu0 0
    %1814 = vmatpush1.bf16.msra.mxu0 0
    %1815 = vmatprep.mubr.bf16.mxu0 0
    %1816 = vmatmul.mubr.bf16.gmra.mrb[0].mxu0 %v1670
    %v1817 = vpop.f32.mrb[0].mxu0
    %v1818 = vadd.f32 0.0, %v1817
    %v1819 = vpop.f32.mrb[0].mxu0
    %v1820 = vadd.f32 0.0, %v1819
    %v1821 = vpop.f32.mrb[0].mxu0
    %v1822 = vpop.f32.mrb[0].mxu0
    %1823 = vdwg.mxu0
    %1824 = vmatprep.subr.bf16.mxu0 %v287
    %1825 = vmatpush1.bf16.msra.mxu0 %v286
    %1826 = vmatprep.subr.bf16.mxu0 %v291
    %1827 = vmatpush1.bf16.msra.mxu0 %v290
    %1828 = vmatprep.subr.bf16.mxu0 %v295
    %1829 = vmatpush1.bf16.msra.mxu0 %v294
    %1830 = vmatprep.subr.bf16.mxu0 %v299
    %1831 = vmatpush1.bf16.msra.mxu0 %v298
    %1832 = vmatprep.subr.bf16.mxu0 %v303
    %1833 = vmatpush1.bf16.msra.mxu0 %v302
    %1834 = vmatprep.subr.bf16.mxu0 %v307
    %1835 = vmatpush1.bf16.msra.mxu0 %v306
    %1836 = vmatprep.subr.bf16.mxu0 %v311
    %1837 = vmatpush1.bf16.msra.mxu0 %v310
    %1838 = vmatprep.subr.bf16.mxu0 %v315
    %1839 = vmatpush1.bf16.msra.mxu0 %v314
    %1840 = vmatprep.subr.bf16.mxu0 0
    %1841 = vmatpush1.bf16.msra.mxu0 0
    %1842 = vmatprep.subr.bf16.mxu0 0
    %1843 = vmatpush1.bf16.msra.mxu0 0
    %1844 = vmatprep.subr.bf16.mxu0 0
    %1845 = vmatpush1.bf16.msra.mxu0 0
    %1846 = vmatprep.subr.bf16.mxu0 0
    %1847 = vmatpush1.bf16.msra.mxu0 0
    %1848 = vmatprep.subr.bf16.mxu0 0
    %1849 = vmatpush1.bf16.msra.mxu0 0
    %1850 = vmatprep.subr.bf16.mxu0 0
    %1851 = vmatpush1.bf16.msra.mxu0 0
    %1852 = vmatprep.subr.bf16.mxu0 0
    %1853 = vmatpush1.bf16.msra.mxu0 0
    %1854 = vmatprep.subr.bf16.mxu0 0
    %1855 = vmatpush1.bf16.msra.mxu0 0
    %1856 = vmatprep.mubr.bf16.mxu0 0
    %1857 = vmatmul.mubr.bf16.gmra.mrb[0].mxu0 %v1670
    %v1858 = vpop.f32.mrb[0].mxu0
    %v1859 = vadd.f32 0.0, %v1858
    %v1860 = vpop.f32.mrb[0].mxu0
    %v1861 = vadd.f32 0.0, %v1860
    %v1862 = vpop.f32.mrb[0].mxu0
    %v1863 = vpop.f32.mrb[0].mxu0
    %1864 = vdwg.mxu0
    %v1865 = vadd.f32 %v1779, %v1818
    %v1866 = vadd.f32 %v1780, %v1820
    %v1867 = vadd.f32 %v1781, %v1859
    %v1868 = vadd.f32 %v1782, %v1861
    %v1869 = vxor.u32 %v1865, 2147483648
    %v1870 = vxor.u32 %v1866, 2147483648
    %v1871 = vxor.u32 %v1867, 2147483648
    %v1872 = vmul.f32 %v1869, 1.442695
    %v1873 = vpow.pop %v1872
    %v1874 = vmul.f32 %v1870, 1.442695
    %v1875 = vpow.pop %v1874
    %v1876 = vmul.f32 %v1871, 1.442695
    %v1877 = vpow.pop %v1876
    %v1878 = vadd.f32 %v1873, 1.0
    %v1879 = vadd.f32 %v1875, 1.0
    %v1880 = vadd.f32 %v1877, 1.0
    %v1881 = vrcp.pop %v1878
    %v1882 = vmul.f32 1.0, %v1881
    %v1883 = vrcp.pop %v1879
    %v1884 = vmul.f32 1.0, %v1883
    %v1885 = vrcp.pop %v1880
    %v1886 = vmul.f32 1.0, %v1885
    %v1887 = vtanh.pop %v1868
    %v1888 = vmul.f32 %v1884, %v1667
    %v1889 = vmul.f32 %v1882, %v1887
    %v1890 = vadd.f32 %v1888, %v1889
    %v1891 = vtanh.pop %v1890
    %v1892 = vmul.f32 %v1886, %v1891
    %v1893 = vpack.c.bf16 %v1892, %v1892
    %v1894 = vpack.c.bf16 %v1777, %v1777
    %1895 = vmatprep.subr.bf16.mxu0 %v653
    %1896 = vmatpush1.bf16.msra.mxu0 %v652
    %1897 = vmatprep.subr.bf16.mxu0 %v657
    %1898 = vmatpush1.bf16.msra.mxu0 %v656
    %1899 = vmatprep.subr.bf16.mxu0 %v661
    %1900 = vmatpush1.bf16.msra.mxu0 %v660
    %1901 = vmatprep.subr.bf16.mxu0 %v665
    %1902 = vmatpush1.bf16.msra.mxu0 %v664
    %1903 = vmatprep.subr.bf16.mxu0 %v669
    %1904 = vmatpush1.bf16.msra.mxu0 %v668
    %1905 = vmatprep.subr.bf16.mxu0 %v673
    %1906 = vmatpush1.bf16.msra.mxu0 %v672
    %1907 = vmatprep.subr.bf16.mxu0 %v677
    %1908 = vmatpush1.bf16.msra.mxu0 %v676
    %1909 = vmatprep.subr.bf16.mxu0 %v681
    %1910 = vmatpush1.bf16.msra.mxu0 %v680
    %1911 = vmatprep.subr.bf16.mxu0 %v685
    %1912 = vmatpush1.bf16.msra.mxu0 %v684
    %1913 = vmatprep.subr.bf16.mxu0 %v689
    %1914 = vmatpush1.bf16.msra.mxu0 %v688
    %1915 = vmatprep.subr.bf16.mxu0 %v693
    %1916 = vmatpush1.bf16.msra.mxu0 %v692
    %1917 = vmatprep.subr.bf16.mxu0 %v697
    %1918 = vmatpush1.bf16.msra.mxu0 %v696
    %1919 = vmatprep.subr.bf16.mxu0 %v701
    %1920 = vmatpush1.bf16.msra.mxu0 %v700
    %1921 = vmatprep.subr.bf16.mxu0 %v705
    %1922 = vmatpush1.bf16.msra.mxu0 %v704
    %1923 = vmatprep.subr.bf16.mxu0 %v709
    %1924 = vmatpush1.bf16.msra.mxu0 %v708
    %1925 = vmatprep.subr.bf16.mxu0 %v713
    %1926 = vmatpush1.bf16.msra.mxu0 %v712
    %1927 = vmatprep.mubr.bf16.mxu0 %v1894
    %1928 = vmatmul.mubr.bf16.gmra.mrb[0].mxu0 %v1893
    %v1929 = vpop.f32.mrb[0].mxu0
    %v1930 = vadd.f32 %v167, %v1929
    %v1931 = vpop.f32.mrb[0].mxu0
    %v1932 = vadd.f32 %v171, %v1931
    %v1933 = vpop.f32.mrb[0].mxu0
    %v1934 = vpop.f32.mrb[0].mxu0
    %1935 = vdwg.mxu0
    %1936 = vmatprep.subr.bf16.mxu0 %v655
    %1937 = vmatpush1.bf16.msra.mxu0 %v654
    %1938 = vmatprep.subr.bf16.mxu0 %v659
    %1939 = vmatpush1.bf16.msra.mxu0 %v658
    %1940 = vmatprep.subr.bf16.mxu0 %v663
    %1941 = vmatpush1.bf16.msra.mxu0 %v662
    %1942 = vmatprep.subr.bf16.mxu0 %v667
    %1943 = vmatpush1.bf16.msra.mxu0 %v666
    %1944 = vmatprep.subr.bf16.mxu0 %v671
    %1945 = vmatpush1.bf16.msra.mxu0 %v670
    %1946 = vmatprep.subr.bf16.mxu0 %v675
    %1947 = vmatpush1.bf16.msra.mxu0 %v674
    %1948 = vmatprep.subr.bf16.mxu0 %v679
    %1949 = vmatpush1.bf16.msra.mxu0 %v678
    %1950 = vmatprep.subr.bf16.mxu0 %v683
    %1951 = vmatpush1.bf16.msra.mxu0 %v682
    %1952 = vmatprep.subr.bf16.mxu0 %v687
    %1953 = vmatpush1.bf16.msra.mxu0 %v686
    %1954 = vmatprep.subr.bf16.mxu0 %v691
    %1955 = vmatpush1.bf16.msra.mxu0 %v690
    %1956 = vmatprep.subr.bf16.mxu0 %v695
    %1957 = vmatpush1.bf16.msra.mxu0 %v694
    %1958 = vmatprep.subr.bf16.mxu0 %v699
    %1959 = vmatpush1.bf16.msra.mxu0 %v698
    %1960 = vmatprep.subr.bf16.mxu0 %v703
    %1961 = vmatpush1.bf16.msra.mxu0 %v702
    %1962 = vmatprep.subr.bf16.mxu0 %v707
    %1963 = vmatpush1.bf16.msra.mxu0 %v706
    %1964 = vmatprep.subr.bf16.mxu0 %v711
    %1965 = vmatpush1.bf16.msra.mxu0 %v710
    %1966 = vmatprep.subr.bf16.mxu0 %v715
    %1967 = vmatpush1.bf16.msra.mxu0 %v714
    %1968 = vmatprep.mubr.bf16.mxu0 %v1894
    %1969 = vmatmul.mubr.bf16.gmra.mrb[0].mxu0 %v1893
    %v1970 = vpop.f32.mrb[0].mxu0
    %v1971 = vadd.f32 %v175, %v1970
    %v1972 = vpop.f32.mrb[0].mxu0
    %v1973 = vadd.f32 %v179, %v1972
    %v1974 = vpop.f32.mrb[0].mxu0
    %v1975 = vpop.f32.mrb[0].mxu0
    %1976 = vdwg.mxu0
    %v1977 = vxor.u32 %v1930, 2147483648
    %v1978 = vxor.u32 %v1932, 2147483648
    %v1979 = vxor.u32 %v1971, 2147483648
    %v1980 = vmul.f32 %v1977, 1.442695
    %v1981 = vpow.pop %v1980
    %v1982 = vmul.f32 %v1978, 1.442695
    %v1983 = vpow.pop %v1982
    %v1984 = vmul.f32 %v1979, 1.442695
    %v1985 = vpow.pop %v1984
    %v1986 = vadd.f32 %v1981, 1.0
    %v1987 = vadd.f32 %v1983, 1.0
    %v1988 = vadd.f32 %v1985, 1.0
    %v1989 = vrcp.pop %v1986
    %v1990 = vmul.f32 1.0, %v1989
    %v1991 = vrcp.pop %v1987
    %v1992 = vmul.f32 1.0, %v1991
    %v1993 = vrcp.pop %v1988
    %v1994 = vmul.f32 1.0, %v1993
    %v1995 = vtanh.pop %v1973
    %v1996 = vmul.f32 %v1992, %v1775
    %v1997 = vmul.f32 %v1990, %v1995
    %v1998 = vadd.f32 %v1996, %v1997
    %v1999 = vtanh.pop %v1998
    %v2000 = vmul.f32 %v1994, %v1999
    %v2001 = vadd.f32 %v1778, %v2000
    %v2002 = vld [vmem:[#allocation2 + $0xc0] sm:$0xff]
    %v2003 = vld [vmem:[#allocation2 + $0xc8] sm:$0xff]
    %v2004 = vld [vmem:[#allocation2 + $0xd0] sm:$0xff]
    %v2005 = vld [vmem:[#allocation2 + $0xd8] sm:$0xff]
    %2006 = vmatprep.subr.bf16.mxu0 %v285
    %2007 = vmatpush1.bf16.msra.mxu0 %v284
    %2008 = vmatprep.subr.bf16.mxu0 %v289
    %2009 = vmatpush1.bf16.msra.mxu0 %v288
    %2010 = vmatprep.subr.bf16.mxu0 %v293
    %2011 = vmatpush1.bf16.msra.mxu0 %v292
    %2012 = vmatprep.subr.bf16.mxu0 %v297
    %2013 = vmatpush1.bf16.msra.mxu0 %v296
    %2014 = vmatprep.subr.bf16.mxu0 %v301
    %2015 = vmatpush1.bf16.msra.mxu0 %v300
    %2016 = vmatprep.subr.bf16.mxu0 %v305
    %2017 = vmatpush1.bf16.msra.mxu0 %v304
    %2018 = vmatprep.subr.bf16.mxu0 %v309
    %2019 = vmatpush1.bf16.msra.mxu0 %v308
    %2020 = vmatprep.subr.bf16.mxu0 %v313
    %2021 = vmatpush1.bf16.msra.mxu0 %v312
    %2022 = vmatprep.subr.bf16.mxu0 0
    %2023 = vmatpush1.bf16.msra.mxu0 0
    %2024 = vmatprep.subr.bf16.mxu0 0
    %2025 = vmatpush1.bf16.msra.mxu0 0
    %2026 = vmatprep.subr.bf16.mxu0 0
    %2027 = vmatpush1.bf16.msra.mxu0 0
    %2028 = vmatprep.subr.bf16.mxu0 0
    %2029 = vmatpush1.bf16.msra.mxu0 0
    %2030 = vmatprep.subr.bf16.mxu0 0
    %2031 = vmatpush1.bf16.msra.mxu0 0
    %2032 = vmatprep.subr.bf16.mxu0 0
    %2033 = vmatpush1.bf16.msra.mxu0 0
    %2034 = vmatprep.subr.bf16.mxu0 0
    %2035 = vmatpush1.bf16.msra.mxu0 0
    %2036 = vmatprep.subr.bf16.mxu0 0
    %2037 = vmatpush1.bf16.msra.mxu0 0
    %2038 = vmatprep.mubr.bf16.mxu0 0
    %2039 = vmatmul.mubr.bf16.gmra.mrb[0].mxu0 %v1893
    %v2040 = vpop.f32.mrb[0].mxu0
    %v2041 = vadd.f32 0.0, %v2040
    %v2042 = vpop.f32.mrb[0].mxu0
    %v2043 = vadd.f32 0.0, %v2042
    %v2044 = vpop.f32.mrb[0].mxu0
    %v2045 = vpop.f32.mrb[0].mxu0
    %2046 = vdwg.mxu0
    %2047 = vmatprep.subr.bf16.mxu0 %v287
    %2048 = vmatpush1.bf16.msra.mxu0 %v286
    %2049 = vmatprep.subr.bf16.mxu0 %v291
    %2050 = vmatpush1.bf16.msra.mxu0 %v290
    %2051 = vmatprep.subr.bf16.mxu0 %v295
    %2052 = vmatpush1.bf16.msra.mxu0 %v294
    %2053 = vmatprep.subr.bf16.mxu0 %v299
    %2054 = vmatpush1.bf16.msra.mxu0 %v298
    %2055 = vmatprep.subr.bf16.mxu0 %v303
    %2056 = vmatpush1.bf16.msra.mxu0 %v302
    %2057 = vmatprep.subr.bf16.mxu0 %v307
    %2058 = vmatpush1.bf16.msra.mxu0 %v306
    %2059 = vmatprep.subr.bf16.mxu0 %v311
    %2060 = vmatpush1.bf16.msra.mxu0 %v310
    %2061 = vmatprep.subr.bf16.mxu0 %v315
    %2062 = vmatpush1.bf16.msra.mxu0 %v314
    %2063 = vmatprep.subr.bf16.mxu0 0
    %2064 = vmatpush1.bf16.msra.mxu0 0
    %2065 = vmatprep.subr.bf16.mxu0 0
    %2066 = vmatpush1.bf16.msra.mxu0 0
    %2067 = vmatprep.subr.bf16.mxu0 0
    %2068 = vmatpush1.bf16.msra.mxu0 0
    %2069 = vmatprep.subr.bf16.mxu0 0
    %2070 = vmatpush1.bf16.msra.mxu0 0
    %2071 = vmatprep.subr.bf16.mxu0 0
    %2072 = vmatpush1.bf16.msra.mxu0 0
    %2073 = vmatprep.subr.bf16.mxu0 0
    %2074 = vmatpush1.bf16.msra.mxu0 0
    %2075 = vmatprep.subr.bf16.mxu0 0
    %2076 = vmatpush1.bf16.msra.mxu0 0
    %2077 = vmatprep.subr.bf16.mxu0 0
    %2078 = vmatpush1.bf16.msra.mxu0 0
    %2079 = vmatprep.mubr.bf16.mxu0 0
    %2080 = vmatmul.mubr.bf16.gmra.mrb[0].mxu0 %v1893
    %v2081 = vpop.f32.mrb[0].mxu0
    %v2082 = vadd.f32 0.0, %v2081
    %v2083 = vpop.f32.mrb[0].mxu0
    %v2084 = vadd.f32 0.0, %v2083
    %v2085 = vpop.f32.mrb[0].mxu0
    %v2086 = vpop.f32.mrb[0].mxu0
    %2087 = vdwg.mxu0
    %v2088 = vadd.f32 %v2002, %v2041
    %v2089 = vadd.f32 %v2003, %v2043
    %v2090 = vadd.f32 %v2004, %v2082
    %v2091 = vadd.f32 %v2005, %v2084
    %v2092 = vxor.u32 %v2088, 2147483648
    %v2093 = vxor.u32 %v2089, 2147483648
    %v2094 = vxor.u32 %v2090, 2147483648
    %v2095 = vmul.f32 %v2092, 1.442695
    %v2096 = vpow.pop %v2095
    %v2097 = vmul.f32 %v2093, 1.442695
    %v2098 = vpow.pop %v2097
    %v2099 = vmul.f32 %v2094, 1.442695
    %v2100 = vpow.pop %v2099
    %v2101 = vadd.f32 %v2096, 1.0
    %v2102 = vadd.f32 %v2098, 1.0
    %v2103 = vadd.f32 %v2100, 1.0
    %v2104 = vrcp.pop %v2101
    %v2105 = vmul.f32 1.0, %v2104
    %v2106 = vrcp.pop %v2102
    %v2107 = vmul.f32 1.0, %v2106
    %v2108 = vrcp.pop %v2103
    %v2109 = vmul.f32 1.0, %v2108
    %v2110 = vtanh.pop %v2091
    %v2111 = vmul.f32 %v2107, %v1890
    %v2112 = vmul.f32 %v2105, %v2110
    %v2113 = vadd.f32 %v2111, %v2112
    %v2114 = vtanh.pop %v2113
    %v2115 = vmul.f32 %v2109, %v2114
    %v2116 = vpack.c.bf16 %v2115, %v2115
    %v2117 = vpack.c.bf16 %v2000, %v2000
    %2118 = vmatprep.subr.bf16.mxu0 %v653
    %2119 = vmatpush1.bf16.msra.mxu0 %v652
    %2120 = vmatprep.subr.bf16.mxu0 %v657
    %2121 = vmatpush1.bf16.msra.mxu0 %v656
    %2122 = vmatprep.subr.bf16.mxu0 %v661
    %2123 = vmatpush1.bf16.msra.mxu0 %v660
    %2124 = vmatprep.subr.bf16.mxu0 %v665
    %2125 = vmatpush1.bf16.msra.mxu0 %v664
    %2126 = vmatprep.subr.bf16.mxu0 %v669
    %2127 = vmatpush1.bf16.msra.mxu0 %v668
    %2128 = vmatprep.subr.bf16.mxu0 %v673
    %2129 = vmatpush1.bf16.msra.mxu0 %v672
    %2130 = vmatprep.subr.bf16.mxu0 %v677
    %2131 = vmatpush1.bf16.msra.mxu0 %v676
    %2132 = vmatprep.subr.bf16.mxu0 %v681
    %2133 = vmatpush1.bf16.msra.mxu0 %v680
    %2134 = vmatprep.subr.bf16.mxu0 %v685
    %2135 = vmatpush1.bf16.msra.mxu0 %v684
    %2136 = vmatprep.subr.bf16.mxu0 %v689
    %2137 = vmatpush1.bf16.msra.mxu0 %v688
    %2138 = vmatprep.subr.bf16.mxu0 %v693
    %2139 = vmatpush1.bf16.msra.mxu0 %v692
    %2140 = vmatprep.subr.bf16.mxu0 %v697
    %2141 = vmatpush1.bf16.msra.mxu0 %v696
    %2142 = vmatprep.subr.bf16.mxu0 %v701
    %2143 = vmatpush1.bf16.msra.mxu0 %v700
    %2144 = vmatprep.subr.bf16.mxu0 %v705
    %2145 = vmatpush1.bf16.msra.mxu0 %v704
    %2146 = vmatprep.subr.bf16.mxu0 %v709
    %2147 = vmatpush1.bf16.msra.mxu0 %v708
    %2148 = vmatprep.subr.bf16.mxu0 %v713
    %2149 = vmatpush1.bf16.msra.mxu0 %v712
    %2150 = vmatprep.mubr.bf16.mxu0 %v2117
    %2151 = vmatmul.mubr.bf16.gmra.mrb[0].mxu0 %v2116
    %v2152 = vpop.f32.mrb[0].mxu0
    %v2153 = vadd.f32 %v167, %v2152
    %v2154 = vpop.f32.mrb[0].mxu0
    %v2155 = vadd.f32 %v171, %v2154
    %v2156 = vpop.f32.mrb[0].mxu0
    %v2157 = vpop.f32.mrb[0].mxu0
    %2158 = vdwg.mxu0
    %2159 = vmatprep.subr.bf16.mxu0 %v655
    %2160 = vmatpush1.bf16.msra.mxu0 %v654
    %2161 = vmatprep.subr.bf16.mxu0 %v659
    %2162 = vmatpush1.bf16.msra.mxu0 %v658
    %2163 = vmatprep.subr.bf16.mxu0 %v663
    %2164 = vmatpush1.bf16.msra.mxu0 %v662
    %2165 = vmatprep.subr.bf16.mxu0 %v667
    %2166 = vmatpush1.bf16.msra.mxu0 %v666
    %2167 = vmatprep.subr.bf16.mxu0 %v671
    %2168 = vmatpush1.bf16.msra.mxu0 %v670
    %2169 = vmatprep.subr.bf16.mxu0 %v675
    %2170 = vmatpush1.bf16.msra.mxu0 %v674
    %2171 = vmatprep.subr.bf16.mxu0 %v679
    %2172 = vmatpush1.bf16.msra.mxu0 %v678
    %2173 = vmatprep.subr.bf16.mxu0 %v683
    %2174 = vmatpush1.bf16.msra.mxu0 %v682
    %2175 = vmatprep.subr.bf16.mxu0 %v687
    %2176 = vmatpush1.bf16.msra.mxu0 %v686
    %2177 = vmatprep.subr.bf16.mxu0 %v691
    %2178 = vmatpush1.bf16.msra.mxu0 %v690
    %2179 = vmatprep.subr.bf16.mxu0 %v695
    %2180 = vmatpush1.bf16.msra.mxu0 %v694
    %2181 = vmatprep.subr.bf16.mxu0 %v699
    %2182 = vmatpush1.bf16.msra.mxu0 %v698
    %2183 = vmatprep.subr.bf16.mxu0 %v703
    %2184 = vmatpush1.bf16.msra.mxu0 %v702
    %2185 = vmatprep.subr.bf16.mxu0 %v707
    %2186 = vmatpush1.bf16.msra.mxu0 %v706
    %2187 = vmatprep.subr.bf16.mxu0 %v711
    %2188 = vmatpush1.bf16.msra.mxu0 %v710
    %2189 = vmatprep.subr.bf16.mxu0 %v715
    %2190 = vmatpush1.bf16.msra.mxu0 %v714
    %2191 = vmatprep.mubr.bf16.mxu0 %v2117
    %2192 = vmatmul.mubr.bf16.gmra.mrb[0].mxu0 %v2116
    %v2193 = vpop.f32.mrb[0].mxu0
    %v2194 = vadd.f32 %v175, %v2193
    %v2195 = vpop.f32.mrb[0].mxu0
    %v2196 = vadd.f32 %v179, %v2195
    %v2197 = vpop.f32.mrb[0].mxu0
    %v2198 = vpop.f32.mrb[0].mxu0
    %2199 = vdwg.mxu0
    %v2200 = vxor.u32 %v2153, 2147483648
    %v2201 = vxor.u32 %v2155, 2147483648
    %v2202 = vxor.u32 %v2194, 2147483648
    %v2203 = vmul.f32 %v2200, 1.442695
    %v2204 = vpow.pop %v2203
    %v2205 = vmul.f32 %v2201, 1.442695
    %v2206 = vpow.pop %v2205
    %v2207 = vmul.f32 %v2202, 1.442695
    %v2208 = vpow.pop %v2207
    %v2209 = vadd.f32 %v2204, 1.0
    %v2210 = vadd.f32 %v2206, 1.0
    %v2211 = vadd.f32 %v2208, 1.0
    %v2212 = vrcp.pop %v2209
    %v2213 = vmul.f32 1.0, %v2212
    %v2214 = vrcp.pop %v2210
    %v2215 = vmul.f32 1.0, %v2214
    %v2216 = vrcp.pop %v2211
    %v2217 = vmul.f32 1.0, %v2216
    %v2218 = vtanh.pop %v2196
    %v2219 = vmul.f32 %v2215, %v1998
    %v2220 = vmul.f32 %v2213, %v2218
    %v2221 = vadd.f32 %v2219, %v2220
    %v2222 = vtanh.pop %v2221
    %v2223 = vmul.f32 %v2217, %v2222
    %v2224 = vadd.f32 %v2001, %v2223
    %v2225 = vld [vmem:[#allocation2 + $0xe0] sm:$0xff]
    %v2226 = vld [vmem:[#allocation2 + $0xe8] sm:$0xff]
    %v2227 = vld [vmem:[#allocation2 + $0xf0] sm:$0xff]
    %v2228 = vld [vmem:[#allocation2 + $0xf8] sm:$0xff]
    %2229 = vmatprep.subr.bf16.mxu0 %v285
    %2230 = vmatpush1.bf16.msra.mxu0 %v284
    %2231 = vmatprep.subr.bf16.mxu0 %v289
    %2232 = vmatpush1.bf16.msra.mxu0 %v288
    %2233 = vmatprep.subr.bf16.mxu0 %v293
    %2234 = vmatpush1.bf16.msra.mxu0 %v292
    %2235 = vmatprep.subr.bf16.mxu0 %v297
    %2236 = vmatpush1.bf16.msra.mxu0 %v296
    %2237 = vmatprep.subr.bf16.mxu0 %v301
    %2238 = vmatpush1.bf16.msra.mxu0 %v300
    %2239 = vmatprep.subr.bf16.mxu0 %v305
    %2240 = vmatpush1.bf16.msra.mxu0 %v304
    %2241 = vmatprep.subr.bf16.mxu0 %v309
    %2242 = vmatpush1.bf16.msra.mxu0 %v308
    %2243 = vmatprep.subr.bf16.mxu0 %v313
    %2244 = vmatpush1.bf16.msra.mxu0 %v312
    %2245 = vmatprep.subr.bf16.mxu0 0
    %2246 = vmatpush1.bf16.msra.mxu0 0
    %2247 = vmatprep.subr.bf16.mxu0 0
    %2248 = vmatpush1.bf16.msra.mxu0 0
    %2249 = vmatprep.subr.bf16.mxu0 0
    %2250 = vmatpush1.bf16.msra.mxu0 0
    %2251 = vmatprep.subr.bf16.mxu0 0
    %2252 = vmatpush1.bf16.msra.mxu0 0
    %2253 = vmatprep.subr.bf16.mxu0 0
    %2254 = vmatpush1.bf16.msra.mxu0 0
    %2255 = vmatprep.subr.bf16.mxu0 0
    %2256 = vmatpush1.bf16.msra.mxu0 0
    %2257 = vmatprep.subr.bf16.mxu0 0
    %2258 = vmatpush1.bf16.msra.mxu0 0
    %2259 = vmatprep.subr.bf16.mxu0 0
    %2260 = vmatpush1.bf16.msra.mxu0 0
    %2261 = vmatprep.mubr.bf16.mxu0 0
    %2262 = vmatmul.mubr.bf16.gmra.mrb[0].mxu0 %v2116
    %v2263 = vpop.f32.mrb[0].mxu0
    %v2264 = vadd.f32 0.0, %v2263
    %v2265 = vpop.f32.mrb[0].mxu0
    %v2266 = vadd.f32 0.0, %v2265
    %v2267 = vpop.f32.mrb[0].mxu0
    %v2268 = vpop.f32.mrb[0].mxu0
    %2269 = vdwg.mxu0
    %2270 = vmatprep.subr.bf16.mxu0 %v287
    %2271 = vmatpush1.bf16.msra.mxu0 %v286
    %2272 = vmatprep.subr.bf16.mxu0 %v291
    %2273 = vmatpush1.bf16.msra.mxu0 %v290
    %2274 = vmatprep.subr.bf16.mxu0 %v295
    %2275 = vmatpush1.bf16.msra.mxu0 %v294
    %2276 = vmatprep.subr.bf16.mxu0 %v299
    %2277 = vmatpush1.bf16.msra.mxu0 %v298
    %2278 = vmatprep.subr.bf16.mxu0 %v303
    %2279 = vmatpush1.bf16.msra.mxu0 %v302
    %2280 = vmatprep.subr.bf16.mxu0 %v307
    %2281 = vmatpush1.bf16.msra.mxu0 %v306
    %2282 = vmatprep.subr.bf16.mxu0 %v311
    %2283 = vmatpush1.bf16.msra.mxu0 %v310
    %2284 = vmatprep.subr.bf16.mxu0 %v315
    %2285 = vmatpush1.bf16.msra.mxu0 %v314
    %2286 = vmatprep.subr.bf16.mxu0 0
    %2287 = vmatpush1.bf16.msra.mxu0 0
    %2288 = vmatprep.subr.bf16.mxu0 0
    %2289 = vmatpush1.bf16.msra.mxu0 0
    %2290 = vmatprep.subr.bf16.mxu0 0
    %2291 = vmatpush1.bf16.msra.mxu0 0
    %2292 = vmatprep.subr.bf16.mxu0 0
    %2293 = vmatpush1.bf16.msra.mxu0 0
    %2294 = vmatprep.subr.bf16.mxu0 0
    %2295 = vmatpush1.bf16.msra.mxu0 0
    %2296 = vmatprep.subr.bf16.mxu0 0
    %2297 = vmatpush1.bf16.msra.mxu0 0
    %2298 = vmatprep.subr.bf16.mxu0 0
    %2299 = vmatpush1.bf16.msra.mxu0 0
    %2300 = vmatprep.subr.bf16.mxu0 0
    %2301 = vmatpush1.bf16.msra.mxu0 0
    %2302 = vmatprep.mubr.bf16.mxu0 0
    %2303 = vmatmul.mubr.bf16.gmra.mrb[0].mxu0 %v2116
    %v2304 = vpop.f32.mrb[0].mxu0
    %v2305 = vadd.f32 0.0, %v2304
    %v2306 = vpop.f32.mrb[0].mxu0
    %v2307 = vadd.f32 0.0, %v2306
    %v2308 = vpop.f32.mrb[0].mxu0
    %v2309 = vpop.f32.mrb[0].mxu0
    %2310 = vdwg.mxu0
    %v2311 = vadd.f32 %v2225, %v2264
    %v2312 = vadd.f32 %v2226, %v2266
    %v2313 = vadd.f32 %v2227, %v2305
    %v2314 = vadd.f32 %v2228, %v2307
    %v2315 = vxor.u32 %v2311, 2147483648
    %v2316 = vxor.u32 %v2312, 2147483648
    %v2317 = vxor.u32 %v2313, 2147483648
    %v2318 = vmul.f32 %v2315, 1.442695
    %v2319 = vpow.pop %v2318
    %v2320 = vmul.f32 %v2316, 1.442695
    %v2321 = vpow.pop %v2320
    %v2322 = vmul.f32 %v2317, 1.442695
    %v2323 = vpow.pop %v2322
    %v2324 = vadd.f32 %v2319, 1.0
    %v2325 = vadd.f32 %v2321, 1.0
    %v2326 = vadd.f32 %v2323, 1.0
    %v2327 = vrcp.pop %v2324
    %v2328 = vmul.f32 1.0, %v2327
    %v2329 = vrcp.pop %v2325
    %v2330 = vmul.f32 1.0, %v2329
    %v2331 = vrcp.pop %v2326
    %v2332 = vmul.f32 1.0, %v2331
    %v2333 = vtanh.pop %v2314
    %v2334 = vmul.f32 %v2330, %v2113
    %v2335 = vmul.f32 %v2328, %v2333
    %v2336 = vadd.f32 %v2334, %v2335
    %v2337 = vtanh.pop %v2336
    %v2338 = vmul.f32 %v2332, %v2337
    %v2339 = vpack.c.bf16 %v2338, %v2338
    %v2340 = vpack.c.bf16 %v2223, %v2223
    %2341 = vmatprep.subr.bf16.mxu0 %v653
    %2342 = vmatpush1.bf16.msra.mxu0 %v652
    %2343 = vmatprep.subr.bf16.mxu0 %v657
    %2344 = vmatpush1.bf16.msra.mxu0 %v656
    %2345 = vmatprep.subr.bf16.mxu0 %v661
    %2346 = vmatpush1.bf16.msra.mxu0 %v660
    %2347 = vmatprep.subr.bf16.mxu0 %v665
    %2348 = vmatpush1.bf16.msra.mxu0 %v664
    %2349 = vmatprep.subr.bf16.mxu0 %v669
    %2350 = vmatpush1.bf16.msra.mxu0 %v668
    %2351 = vmatprep.subr.bf16.mxu0 %v673
    %2352 = vmatpush1.bf16.msra.mxu0 %v672
    %2353 = vmatprep.subr.bf16.mxu0 %v677
    %2354 = vmatpush1.bf16.msra.mxu0 %v676
    %2355 = vmatprep.subr.bf16.mxu0 %v681
    %2356 = vmatpush1.bf16.msra.mxu0 %v680
    %2357 = vmatprep.subr.bf16.mxu0 %v685
    %2358 = vmatpush1.bf16.msra.mxu0 %v684
    %2359 = vmatprep.subr.bf16.mxu0 %v689
    %2360 = vmatpush1.bf16.msra.mxu0 %v688
    %2361 = vmatprep.subr.bf16.mxu0 %v693
    %2362 = vmatpush1.bf16.msra.mxu0 %v692
    %2363 = vmatprep.subr.bf16.mxu0 %v697
    %2364 = vmatpush1.bf16.msra.mxu0 %v696
    %2365 = vmatprep.subr.bf16.mxu0 %v701
    %2366 = vmatpush1.bf16.msra.mxu0 %v700
    %2367 = vmatprep.subr.bf16.mxu0 %v705
    %2368 = vmatpush1.bf16.msra.mxu0 %v704
    %2369 = vmatprep.subr.bf16.mxu0 %v709
    %2370 = vmatpush1.bf16.msra.mxu0 %v708
    %2371 = vmatprep.subr.bf16.mxu0 %v713
    %2372 = vmatpush1.bf16.msra.mxu0 %v712
    %2373 = vmatprep.mubr.bf16.mxu0 %v2340
    %2374 = vmatmul.mubr.bf16.gmra.mrb[0].mxu0 %v2339
    %v2375 = vpop.f32.mrb[0].mxu0
    %v2376 = vadd.f32 %v167, %v2375
    %v2377 = vpop.f32.mrb[0].mxu0
    %v2378 = vadd.f32 %v171, %v2377
    %v2379 = vpop.f32.mrb[0].mxu0
    %v2380 = vpop.f32.mrb[0].mxu0
    %2381 = vdwg.mxu0
    %2382 = vmatprep.subr.bf16.mxu0 %v655
    %2383 = vmatpush1.bf16.msra.mxu0 %v654
    %2384 = vmatprep.subr.bf16.mxu0 %v659
    %2385 = vmatpush1.bf16.msra.mxu0 %v658
    %2386 = vmatprep.subr.bf16.mxu0 %v663
    %2387 = vmatpush1.bf16.msra.mxu0 %v662
    %2388 = vmatprep.subr.bf16.mxu0 %v667
    %2389 = vmatpush1.bf16.msra.mxu0 %v666
    %2390 = vmatprep.subr.bf16.mxu0 %v671
    %2391 = vmatpush1.bf16.msra.mxu0 %v670
    %2392 = vmatprep.subr.bf16.mxu0 %v675
    %2393 = vmatpush1.bf16.msra.mxu0 %v674
    %2394 = vmatprep.subr.bf16.mxu0 %v679
    %2395 = vmatpush1.bf16.msra.mxu0 %v678
    %2396 = vmatprep.subr.bf16.mxu0 %v683
    %2397 = vmatpush1.bf16.msra.mxu0 %v682
    %2398 = vmatprep.subr.bf16.mxu0 %v687
    %2399 = vmatpush1.bf16.msra.mxu0 %v686
    %2400 = vmatprep.subr.bf16.mxu0 %v691
    %2401 = vmatpush1.bf16.msra.mxu0 %v690
    %2402 = vmatprep.subr.bf16.mxu0 %v695
    %2403 = vmatpush1.bf16.msra.mxu0 %v694
    %2404 = vmatprep.subr.bf16.mxu0 %v699
    %2405 = vmatpush1.bf16.msra.mxu0 %v698
    %2406 = vmatprep.subr.bf16.mxu0 %v703
    %2407 = vmatpush1.bf16.msra.mxu0 %v702
    %2408 = vmatprep.subr.bf16.mxu0 %v707
    %2409 = vmatpush1.bf16.msra.mxu0 %v706
    %2410 = vmatprep.subr.bf16.mxu0 %v711
    %2411 = vmatpush1.bf16.msra.mxu0 %v710
    %2412 = vmatprep.subr.bf16.mxu0 %v715
    %2413 = vmatpush1.bf16.msra.mxu0 %v714
    %2414 = vmatprep.mubr.bf16.mxu0 %v2340
    %2415 = vmatmul.mubr.bf16.gmra.mrb[0].mxu0 %v2339
    %v2416 = vpop.f32.mrb[0].mxu0
    %v2417 = vadd.f32 %v175, %v2416
    %v2418 = vpop.f32.mrb[0].mxu0
    %v2419 = vadd.f32 %v179, %v2418
    %v2420 = vpop.f32.mrb[0].mxu0
    %v2421 = vpop.f32.mrb[0].mxu0
    %2422 = vdwg.mxu0
    %v2423 = vxor.u32 %v2376, 2147483648
    %v2424 = vxor.u32 %v2378, 2147483648
    %v2425 = vxor.u32 %v2417, 2147483648
    %v2426 = vmul.f32 %v2423, 1.442695
    %v2427 = vpow.pop %v2426
    %v2428 = vmul.f32 %v2424, 1.442695
    %v2429 = vpow.pop %v2428
    %v2430 = vmul.f32 %v2425, 1.442695
    %v2431 = vpow.pop %v2430
    %v2432 = vadd.f32 %v2427, 1.0
    %v2433 = vadd.f32 %v2429, 1.0
    %v2434 = vadd.f32 %v2431, 1.0
    %v2435 = vrcp.pop %v2432
    %v2436 = vmul.f32 1.0, %v2435
    %v2437 = vrcp.pop %v2433
    %v2438 = vmul.f32 1.0, %v2437
    %v2439 = vrcp.pop %v2434
    %v2440 = vmul.f32 1.0, %v2439
    %v2441 = vtanh.pop %v2419
    %v2442 = vmul.f32 %v2438, %v2221
    %v2443 = vmul.f32 %v2436, %v2441
    %v2444 = vadd.f32 %v2442, %v2443
    %v2445 = vtanh.pop %v2444
    %v2446 = vmul.f32 %v2440, %v2445
    %v2447 = vadd.f32 %v2224, %v2446
    %v2448 = vld [vmem:[%s4] sm:$0xff]
    %v2449 = vld [vmem:[%s4 + $0x8] sm:$0xff]
    %v2450 = vld [vmem:[%s4 + $0x10] sm:$0xff]
    %v2451 = vld [vmem:[%s4 + $0x18] sm:$0xff]
    %v2452 = vld [vmem:[%s4 + $0x20] sm:$0xff]
    %v2453 = vld [vmem:[%s4 + $0x28] sm:$0xff]
    %v2454 = vld [vmem:[%s4 + $0x30] sm:$0xff]
    %v2455 = vld [vmem:[%s4 + $0x38] sm:$0xff]
    %v2456 = vld [vmem:[%s4 + $0x40] sm:$0xff]
    %v2457 = vld [vmem:[%s4 + $0x48] sm:$0xff]
    %v2458 = vld [vmem:[%s4 + $0x50] sm:$0xff]
    %v2459 = vld [vmem:[%s4 + $0x58] sm:$0xff]
    %v2460 = vld [vmem:[%s4 + $0x60] sm:$0xff]
    %v2461 = vld [vmem:[%s4 + $0x68] sm:$0xff]
    %v2462 = vld [vmem:[%s4 + $0x70] sm:$0xff]
    %v2463 = vld [vmem:[%s4 + $0x78] sm:$0xff]
    %v2464 = vld [vmem:[%s5] sm:$0x1]
    %v2466 = vlaneseq
    %v2467 = vshrl.u32 %v2466, 7
    %v2468 = vsub.s32 0, %v2467
    %v2469 = vrot.slane %v2464, %v2468
    %2471 = vmatprep.subr.mxu0 0.0
    %2472 = vmatpush1.msra.mxu0 %v2448
    %2473 = vmatprep.subr.mxu0 0.0
    %2474 = vmatpush1.msra.mxu0 %v2449
    %2475 = vmatprep.subr.mxu0 0.0
    %2476 = vmatpush1.msra.mxu0 %v2450
    %2477 = vmatprep.subr.mxu0 0.0
    %2478 = vmatpush1.msra.mxu0 %v2451
    %2479 = vmatprep.subr.mxu0 0.0
    %2480 = vmatpush1.msra.mxu0 %v2452
    %2481 = vmatprep.subr.mxu0 0.0
    %2482 = vmatpush1.msra.mxu0 %v2453
    %2483 = vmatprep.subr.mxu0 0.0
    %2484 = vmatpush1.msra.mxu0 %v2454
    %2485 = vmatprep.subr.mxu0 0.0
    %2486 = vmatpush1.msra.mxu0 %v2455
    %2487 = vmatprep.subr.mxu0 0.0
    %2488 = vmatpush1.msra.mxu0 %v2456
    %2489 = vmatprep.subr.mxu0 0.0
    %2490 = vmatpush1.msra.mxu0 %v2457
    %2491 = vmatprep.subr.mxu0 0.0
    %2492 = vmatpush1.msra.mxu0 %v2458
    %2493 = vmatprep.subr.mxu0 0.0
    %2494 = vmatpush1.msra.mxu0 %v2459
    %2495 = vmatprep.subr.mxu0 0.0
    %2496 = vmatpush1.msra.mxu0 %v2460
    %2497 = vmatprep.subr.mxu0 0.0
    %2498 = vmatpush1.msra.mxu0 %v2461
    %2499 = vmatprep.subr.mxu0 0.0
    %2500 = vmatpush1.msra.mxu0 %v2462
    %2501 = vmatprep.subr.mxu0 0.0
    %2502 = vmatpush1.msra.mxu0 %v2463
    %2503 = vmatprep.subr.mxu0 0.0
    %2504 = vmatpush1.msra.mxu0 0.0
    %2505 = vmatprep.subr.mxu0 0.0
    %2506 = vmatpush1.msra.mxu0 0.0
    %2507 = vmatprep.subr.mxu0 0.0
    %2508 = vmatpush1.msra.mxu0 0.0
    %2509 = vmatprep.subr.mxu0 0.0
    %2510 = vmatpush1.msra.mxu0 0.0
    %2511 = vmatprep.subr.mxu0 0.0
    %2512 = vmatpush1.msra.mxu0 0.0
    %2513 = vmatprep.subr.mxu0 0.0
    %2514 = vmatpush1.msra.mxu0 0.0
    %2515 = vmatprep.subr.mxu0 0.0
    %2516 = vmatpush1.msra.mxu0 0.0
    %2517 = vmatprep.subr.mxu0 0.0
    %2518 = vmatpush1.msra.mxu0 0.0
    %2519 = vmatprep.subr.mxu0 0.0
    %2520 = vmatpush1.msra.mxu0 0.0
    %2521 = vmatprep.subr.mxu0 0.0
    %2522 = vmatpush1.msra.mxu0 0.0
    %2523 = vmatprep.subr.mxu0 0.0
    %2524 = vmatpush1.msra.mxu0 0.0
    %2525 = vmatprep.subr.mxu0 0.0
    %2526 = vmatpush1.msra.mxu0 0.0
    %2527 = vmatprep.subr.mxu0 0.0
    %2528 = vmatpush1.msra.mxu0 0.0
    %2529 = vmatprep.subr.mxu0 0.0
    %2530 = vmatpush1.msra.mxu0 0.0
    %2531 = vmatprep.subr.mxu0 0.0
    %2532 = vmatpush1.msra.mxu0 0.0
    %2533 = vmatprep.subr.mxu0 0.0
    %2534 = vmatpush1.msra.mxu0 0.0
    %2535 = vmatprep.mubr.f32.mxu0 0.0
    %2536 = vmatmul.mubr.f32.gmra.mrb[0].mxu0 %v2447
    %v2537 = vpop.f32.mrb[0].mxu0
    %v2538 = vadd.f32 %v2469, %v2537
    %v2539 = vpop.f32.mrb[0].mxu0
    %2540 = vdwg.mxu0
    %vm2541 = vcmask 56320
    %2542 = vst.msk [vmem:[#allocation8] sm:$0xff] %vm2541, %v2538
    // Predicated region
    $region38: #{tpu_custom_call.1} parent=1 // pred_check
      _
    $region39: #{tpu_custom_call.1} parent=1 // pred_check_branch
      %2544 = sbr.rel (0) target = $region41
    $region40: #{tpu_custom_call.1} parent=1 // pred_region
      %s2546 = ssub.s32 128, 128
      %2547 = vsyncadd [#allocation4], %s2546
      %s2549 = sshll.u32 [#allocation8], 4
      %s2550 = int_to_ptr.vmem [resolvable:$true] %s2549
      %2552 = dma.vmem_to_hbm [thread:$0]  %s2550, 128, %s6, [#allocation4]
    $region41: #{tpu_custom_call.1} parent=1 // pred_fallthru
      _
    // Predicated region
    $region42: #{tpu_custom_call.1} parent=1 // pred_check
      _
    $region43: #{tpu_custom_call.1} parent=1 // pred_check_branch
      %2554 = sbr.rel (0) target = $region45
    $region44: #{tpu_custom_call.1} parent=1 // pred_region
      %2555 = dma.done [#allocation4], 128
    $region45: #{tpu_custom_call.1} parent=1 // pred_fallthru
      _
    %2556 = vsyncpa [#allocation3], 1
    %2557 = vsyncpa [#allocation6], 1
    %2558 = vsyncpa [#allocation4], 1

</llo_original>
